<compile_context>
chip_gen: v5e
topology: v5e:2x2
jax: 0.10.0
libtpu: 0.0.40
codegen_flags: <defaults>
</compile_context>

<pallas_src>
import math
from functools import partial

import jax
import jax.numpy as jnp
from jax.experimental import pallas as pl
from jax.experimental.pallas import tpu as pltpu

N_LAYERS = 2          # small stack for the demo (module docstring uses 6)
D_MODEL = 32
N_HEADS = 4
D_FF = 64
EPS = 1e-6
NEG_INF = -1e9


# ----------------------------- fused kernel --------------------------------

def _decoder_layer_kernel(
    # per-batch activation / compact mask blocks
    x_ref, m_ref, src_pad_ref, tgt_pad_ref,
    # layer-l weights (streamed per layer-grid step, double-buffered by Pallas)
    w_attn_s_ref, b_attn_s_ref, wo_s_ref, bo_s_ref,
    w_attn_c_ref, b_attn_c_ref, wo_c_ref, bo_c_ref,
    w1_ref, b1_ref, w2_ref, b2_ref,
    ln_g_ref, ln_b_ref,
    # final stack LayerNorm (layer-independent, VMEM resident)
    lnf_g_ref, lnf_b_ref,
    # output
    o_ref,
    # scratch: residual stream carried across the layer grid axis
    x_acc,
    *, n_heads, d_model,
):
    l = pl.program_id(1)
    n_l = pl.num_programs(1)
    dk = d_model // n_heads
    scale = 1.0 / math.sqrt(dk)
    t = x_acc.shape[0]

    # First layer of each batch: load the residual stream into the VMEM carry.
    @pl.when(l == 0)
    def _():
        x_acc[...] = x_ref[0].astype(jnp.float32)

    # ---- masks generated in-kernel (no (T,T)/(T,S) bias tensors from HBM) ---
    row = jax.lax.broadcasted_iota(jnp.int32, (t, t), 0)
    col = jax.lax.broadcasted_iota(jnp.int32, (t, t), 1)
    tgt_bias = jnp.where((col <= row) & (tgt_pad_ref[0] > 0.0), 0.0, NEG_INF)  # (T, T)
    src_bias = jnp.where(src_pad_ref[0] > 0.0, 0.0, NEG_INF)                   # (1, S)

    def layernorm(h, g, b):
        mu = jnp.mean(h, axis=-1, keepdims=True)
        var = jnp.mean(jnp.square(h - mu), axis=-1, keepdims=True)
        return (h - mu) * jax.lax.rsqrt(var + EPS) * g + b

    def mha(h_q, h_kv, w_ref, b_ref, wo_ref, bias):
        # Heads live on a leading weight dim: per-head Q/K/V come straight out
        # of (T,D)@(D,dk) dots (no 8-lane activation extraction), and the
        # output projection is folded into the head loop and accumulated into
        # one (Tq, D) f32 value (no concatenate).
        hq = h_q.astype(jnp.bfloat16)
        hkv = h_kv.astype(jnp.bfloat16)
        acc = jnp.zeros((h_q.shape[0], d_model), jnp.float32)
        for hh in range(n_heads):                      # static, n_heads small
            qh = jnp.dot(hq, w_ref[0, hh],
                         preferred_element_type=jnp.float32) + b_ref[0, hh]
            kh = jnp.dot(hkv, w_ref[1, hh],
                         preferred_element_type=jnp.float32) + b_ref[1, hh]
            vh = jnp.dot(hkv, w_ref[2, hh],
                         preferred_element_type=jnp.float32) + b_ref[2, hh]
            s = jax.lax.dot_general(
                qh.astype(jnp.bfloat16), kh.astype(jnp.bfloat16),
                (((1,), (1,)), ((), ())),
                preferred_element_type=jnp.float32) * scale + bias
            s = s - jnp.max(s, axis=-1, keepdims=True)
            p = jnp.exp(s)
            # exact reciprocal (approx=True trades ~1e-3 rel. error for speed)
            p = p * pl.reciprocal(jnp.sum(p, axis=-1, keepdims=True), approx=False)
            ctx = jnp.dot(p.astype(jnp.bfloat16), vh.astype(jnp.bfloat16),
                          preferred_element_type=jnp.float32)
            acc = acc + jnp.dot(ctx.astype(jnp.bfloat16), wo_ref[hh],
                                preferred_element_type=jnp.float32)
        return acc

    x = x_acc[...]

    # --- sublayer 1: masked self-attention ----------------------------------
    h = layernorm(x, ln_g_ref[0], ln_b_ref[0])
    x = x + mha(h, h, w_attn_s_ref, b_attn_s_ref, wo_s_ref, tgt_bias) + bo_s_ref[...]

    # --- sublayer 2: cross-attention over encoder memory --------------------
    h = layernorm(x, ln_g_ref[1], ln_b_ref[1])
    x = x + mha(h, m_ref[0], w_attn_c_ref, b_attn_c_ref, wo_c_ref, src_bias) + bo_c_ref[...]

    # --- sublayer 3: position-wise feed-forward ------------------------------
    h = layernorm(x, ln_g_ref[2], ln_b_ref[2])
    ff = jnp.maximum(
        jnp.dot(h.astype(jnp.bfloat16), w1_ref[...],
                preferred_element_type=jnp.float32) + b1_ref[...], 0.0)
    x = x + jnp.dot(ff.astype(jnp.bfloat16), w2_ref[...],
                    preferred_element_type=jnp.float32) + b2_ref[...]

    x_acc[...] = x

    # Last layer: final stack LayerNorm + single output store.
    @pl.when(l == n_l - 1)
    def _():
        o_ref[0] = layernorm(x, lnf_g_ref[...], lnf_b_ref[...]).astype(o_ref.dtype)


# ------------------------------ wrapper -------------------------------------

_LAYER_KEYS = ("w_attn_s", "b_attn_s", "wo_s", "bo_s",
               "w_attn_c", "b_attn_c", "wo_c", "bo_c",
               "w1", "b1", "w2", "b2", "ln_g", "ln_b")
_FINAL_KEYS = ("lnf_g", "lnf_b")


def decoder_forward(x, m, src_mask, tgt_mask, params, n_heads=N_HEADS):
    B, T, D = x.shape
    S = m.shape[1]
    L = params["w1"].shape[0]

    # Compact key-padding masks: never materialize (B,T,T)/(B,T,S) additive
    # bias tensors (at real T those blocks alone would blow v7x's 64 MiB VMEM
    # and burn O(B*T^2) HBM bandwidth).  tgt_mask is assumed to be the standard
    # decoder mask (causal AND tgt key-padding): its last row is exactly the
    # key-padding vector.  src_mask is a key-padding mask.
    # TODO(synk): fully arbitrary attention masks would need the dense path.
    tgt_pad = tgt_mask[:, -1:, :].astype(jnp.float32)       # (B, 1, T)
    src_pad = src_mask[:, :1, :].astype(jnp.float32)        # (B, 1, S)

    def layer_spec(shape):
        nd = len(shape)
        return pl.BlockSpec(
            (pl.Squeezed(),) + tuple(shape[1:]),
            lambda b, l, _nd=nd: (l,) + (0,) * (_nd - 1))

    def full_spec(shape):
        nd = len(shape)
        return pl.BlockSpec(tuple(shape), lambda b, l, _nd=nd: (0,) * _nd)

    in_specs = [
        pl.BlockSpec((1, T, D), lambda b, l: (b, 0, 0)),     # x rows of batch b
        pl.BlockSpec((1, S, D), lambda b, l: (b, 0, 0)),     # encoder memory
        pl.BlockSpec((1, 1, S), lambda b, l: (b, 0, 0)),     # src key padding
        pl.BlockSpec((1, 1, T), lambda b, l: (b, 0, 0)),     # tgt key padding
    ]
    in_specs += [layer_spec(params[k].shape) for k in _LAYER_KEYS]
    in_specs += [full_spec(params[k].shape) for k in _FINAL_KEYS]

    out = pl.pallas_call(
        partial(_decoder_layer_kernel, n_heads=n_heads, d_model=D),
        out_shape=jax.ShapeDtypeStruct((B, T, D), x.dtype),
        grid=(B, L),
        in_specs=in_specs,
        out_specs=pl.BlockSpec((1, T, D), lambda b, l: (b, 0, 0)),
        scratch_shapes=[pltpu.VMEM((T, D), jnp.float32)],
        compiler_params=pltpu.CompilerParams(
            # batch axis parallel (v7x 2-TC sharding), layer axis is a carried
            # reduction-style axis (activation scratch + streamed weights).
            dimension_semantics=("parallel", "arbitrary"),
            vmem_limit_bytes=32 * 1024 * 1024,
        ),
    )(x, m, src_pad, tgt_pad, *(params[k] for k in _LAYER_KEYS + _FINAL_KEYS))
    return out


# ------------------------------ params --------------------------------------

def init_decoder_params(key, n_layers, d_model, n_heads, d_ff):
    dk = d_model // n_heads
    L, H, D = n_layers, n_heads, d_model

    def w(k, shape):
        # bf16 weights: 2x MXU throughput on v6e/v7x, half the VMEM/HBM traffic.
        return (jax.random.normal(k, shape, jnp.float32) * 0.02).astype(jnp.bfloat16)

    ks = jax.random.split(key, 6)
    return {
        # self-attention: per-head Q/K/V (3,H,D,dk) and per-head output proj
        "w_attn_s": w(ks[0], (L, 3, H, D, dk)),
        "b_attn_s": jnp.zeros((L, 3, H, 1, dk), jnp.float32),
        "wo_s":     w(ks[1], (L, H, dk, D)),
        "bo_s":     jnp.zeros((L, 1, D), jnp.float32),
        # cross-attention
        "w_attn_c": w(ks[2], (L, 3, H, D, dk)),
        "b_attn_c": jnp.zeros((L, 3, H, 1, dk), jnp.float32),
        "wo_c":     w(ks[3], (L, H, dk, D)),
        "bo_c":     jnp.zeros((L, 1, D), jnp.float32),
        # feed-forward
        "w1":       w(ks[4], (L, D, d_ff)),
        "b1":       jnp.zeros((L, 1, d_ff), jnp.float32),
        "w2":       w(ks[5], (L, d_ff, D)),
        "b2":       jnp.zeros((L, 1, D), jnp.float32),
        # per-layer LayerNorms (ln1/ln2/ln3) + final stack LayerNorm
        "ln_g":     jnp.ones((L, 3, 1, D), jnp.float32),
        "ln_b":     jnp.zeros((L, 3, 1, D), jnp.float32),
        "lnf_g":    jnp.ones((1, D), jnp.float32),
        "lnf_b":    jnp.zeros((1, D), jnp.float32),
    }


# --------------------------------- main --------------------------------------

if __name__ == "__main__":
    key = jax.random.PRNGKey(0)
    B, T, S = 2, 8, 8
    kx, km, kp = jax.random.split(key, 3)

    x = jax.random.normal(kx, (B, T, D_MODEL), jnp.float32)
    m = jax.random.normal(km, (B, S, D_MODEL), jnp.float32)
    # masks: 1.0 = attend, 0.0 = blocked (matches masked_fill(mask==0, -1e9))
    tgt_mask = jnp.broadcast_to(jnp.tril(jnp.ones((T, T), jnp.float32)), (B, T, T))
    src_mask = jnp.ones((B, T, S), jnp.float32)

    params = init_decoder_params(kp, N_LAYERS, D_MODEL, N_HEADS, D_FF)

    fwd = jax.jit(partial(decoder_forward, n_heads=N_HEADS))
    out = fwd(x, m, src_mask, tgt_mask, params)
    jax.block_until_ready(out)

    assert out.shape == (B, T, D_MODEL)
    assert bool(jnp.all(jnp.isfinite(out)))
    print("KERNEL_OK")
</pallas_src>

<mosaic_0001>
module attributes {stable_mosaic.version = 11 : i64} {
  func.func @_decoder_layer_kernel(%arg0: i32, %arg1: i32, %arg2: memref<1x8x32xf32, #tpu.memory_space<vmem>>, %arg3: memref<1x8x32xf32, #tpu.memory_space<vmem>>, %arg4: memref<1x1x8xf32, #tpu.memory_space<vmem>>, %arg5: memref<1x1x8xf32, #tpu.memory_space<vmem>>, %arg6: memref<1x3x4x32x8xbf16, #tpu.memory_space<vmem>>, %arg7: memref<1x3x4x1x8xf32, #tpu.memory_space<vmem>>, %arg8: memref<1x4x8x32xbf16, #tpu.memory_space<vmem>>, %arg9: memref<1x1x32xf32, #tpu.memory_space<vmem>>, %arg10: memref<1x3x4x32x8xbf16, #tpu.memory_space<vmem>>, %arg11: memref<1x3x4x1x8xf32, #tpu.memory_space<vmem>>, %arg12: memref<1x4x8x32xbf16, #tpu.memory_space<vmem>>, %arg13: memref<1x1x32xf32, #tpu.memory_space<vmem>>, %arg14: memref<1x32x64xbf16, #tpu.memory_space<vmem>>, %arg15: memref<1x1x64xf32, #tpu.memory_space<vmem>>, %arg16: memref<1x64x32xbf16, #tpu.memory_space<vmem>>, %arg17: memref<1x1x32xf32, #tpu.memory_space<vmem>>, %arg18: memref<1x3x1x32xf32, #tpu.memory_space<vmem>>, %arg19: memref<1x3x1x32xf32, #tpu.memory_space<vmem>>, %arg20: memref<1x32xf32, #tpu.memory_space<vmem>>, %arg21: memref<1x32xf32, #tpu.memory_space<vmem>>, %arg22: memref<1x8x32xf32, #tpu.memory_space<vmem>>, %arg23: memref<8x32xf32, #tpu.memory_space<vmem>>) attributes {dimension_semantics = [#tpu.dimension_semantics<parallel>, #tpu.dimension_semantics<arbitrary>], iteration_bounds = array<i64: 2, 2>, scalar_prefetch = 0 : i64, scratch_operands = 1 : i64, tpu.core_type = #tpu.core_type<tc>, window_params = [{transform_indices = @transform_0, window_bounds = array<i64: 1, 8, 32>}, {transform_indices = @transform_1, window_bounds = array<i64: 1, 8, 32>}, {transform_indices = @transform_2, window_bounds = array<i64: 1, 1, 8>}, {transform_indices = @transform_3, window_bounds = array<i64: 1, 1, 8>}, {transform_indices = @transform_4, window_bounds = array<i64: 1, 3, 4, 32, 8>}, {transform_indices = @transform_5, window_bounds = array<i64: 1, 3, 4, 1, 8>}, {transform_indices = @transform_6, window_bounds = array<i64: 1, 4, 8, 32>}, {transform_indices = @transform_7, window_bounds = array<i64: 1, 1, 32>}, {transform_indices = @transform_8, window_bounds = array<i64: 1, 3, 4, 32, 8>}, {transform_indices = @transform_9, window_bounds = array<i64: 1, 3, 4, 1, 8>}, {transform_indices = @transform_10, window_bounds = array<i64: 1, 4, 8, 32>}, {transform_indices = @transform_11, window_bounds = array<i64: 1, 1, 32>}, {transform_indices = @transform_12, window_bounds = array<i64: 1, 32, 64>}, {transform_indices = @transform_13, window_bounds = array<i64: 1, 1, 64>}, {transform_indices = @transform_14, window_bounds = array<i64: 1, 64, 32>}, {transform_indices = @transform_15, window_bounds = array<i64: 1, 1, 32>}, {transform_indices = @transform_16, window_bounds = array<i64: 1, 3, 1, 32>}, {transform_indices = @transform_17, window_bounds = array<i64: 1, 3, 1, 32>}, {pipeline_mode = #tpu.pipeline_mode<synchronous>, transform_indices = @transform_18, window_bounds = array<i64: 1, 32>}, {pipeline_mode = #tpu.pipeline_mode<synchronous>, transform_indices = @transform_19, window_bounds = array<i64: 1, 32>}, {transform_indices = @transform_20, window_bounds = array<i64: 1, 8, 32>}]} {
    %c0_i32 = arith.constant 0 : i32
    %0 = arith.cmpi eq, %arg1, %c0_i32 : i32
    %1 = arith.extui %0 : i1 to i32
    %c0_i32_0 = arith.constant 0 : i32
    %2 = arith.cmpi ne, %1, %c0_i32_0 : i32
    scf.if %2 {
      %c0_422 = arith.constant 0 : index
      %c0_423 = arith.constant 0 : index
      %c0_424 = arith.constant 0 : index
      %506 = vector.load %arg2[%c0_422, %c0_423, %c0_424] : memref<1x8x32xf32, #tpu.memory_space<vmem>>, vector<1x8x32xf32>
      %507 = vector.shape_cast %506 : vector<1x8x32xf32> to vector<8x32xf32>
      %c0_425 = arith.constant 0 : index
      %c0_426 = arith.constant 0 : index
      %508 = vector.load %arg23[%c0_425, %c0_426] : memref<8x32xf32, #tpu.memory_space<vmem>>, vector<8x32xf32>
      tpu.vector_store %arg23[%c0_425, %c0_426], %507 {strides = array<i32>} : memref<8x32xf32, #tpu.memory_space<vmem>>, vector<8x32xf32>,
    } else {
    }
    %3 = tpu.iota {dimensions = array<i32: 0>} : vector<8x8xi32>
    %4 = tpu.iota {dimensions = array<i32: 1>} : vector<8x8xi32>
    %5 = arith.cmpi sle, %4, %3 : vector<8x8xi32>
    %c0 = arith.constant 0 : index
    %c0_1 = arith.constant 0 : index
    %c0_2 = arith.constant 0 : index
    %6 = vector.load %arg5[%c0, %c0_1, %c0_2] : memref<1x1x8xf32, #tpu.memory_space<vmem>>, vector<1x1x8xf32>
    %7 = vector.shape_cast %6 : vector<1x1x8xf32> to vector<1x8xf32>
    %cst = arith.constant 0.000000e+00 : f32
    %8 = vector.broadcast %cst : f32 to vector<1x8xf32>
    %9 = arith.cmpf ogt, %7, %8 : vector<1x8xf32>
    %10 = vector.broadcast %9 : vector<1x8xi1> to vector<8x8xi1>
    %11 = arith.andi %5, %10 : vector<8x8xi1>
    %cst_3 = arith.constant 0.000000e+00 : f32
    %cst_4 = arith.constant -1.000000e+09 : f32
    %12 = vector.broadcast %cst_3 : f32 to vector<8x8xf32>
    %13 = vector.broadcast %cst_4 : f32 to vector<8x8xf32>
    %14 = arith.select %11, %12, %13 : vector<8x8xi1>, vector<8x8xf32>
    %c0_5 = arith.constant 0 : index
    %c0_6 = arith.constant 0 : index
    %c0_7 = arith.constant 0 : index
    %15 = vector.load %arg4[%c0_5, %c0_6, %c0_7] : memref<1x1x8xf32, #tpu.memory_space<vmem>>, vector<1x1x8xf32>
    %16 = vector.shape_cast %15 : vector<1x1x8xf32> to vector<1x8xf32>
    %cst_8 = arith.constant 0.000000e+00 : f32
    %17 = vector.broadcast %cst_8 : f32 to vector<1x8xf32>
    %18 = arith.cmpf ogt, %16, %17 : vector<1x8xf32>
    %cst_9 = arith.constant 0.000000e+00 : f32
    %cst_10 = arith.constant -1.000000e+09 : f32
    %19 = vector.broadcast %cst_9 : f32 to vector<1x8xf32>
    %20 = vector.broadcast %cst_10 : f32 to vector<1x8xf32>
    %21 = arith.select %18, %19, %20 : vector<1x8xi1>, vector<1x8xf32>
    %c0_11 = arith.constant 0 : index
    %c0_12 = arith.constant 0 : index
    %22 = vector.load %arg23[%c0_11, %c0_12] : memref<8x32xf32, #tpu.memory_space<vmem>>, vector<8x32xf32>
    %c0_13 = arith.constant 0 : index
    %c0_14 = arith.constant 0 : index
    %c0_15 = arith.constant 0 : index
    %c0_16 = arith.constant 0 : index
    %23 = vector.load %arg18[%c0_13, %c0_14, %c0_15, %c0_16] : memref<1x3x1x32xf32, #tpu.memory_space<vmem>>, vector<1x1x1x32xf32>
    %24 = vector.shape_cast %23 : vector<1x1x1x32xf32> to vector<1x32xf32>
    %c0_17 = arith.constant 0 : index
    %c0_18 = arith.constant 0 : index
    %c0_19 = arith.constant 0 : index
    %c0_20 = arith.constant 0 : index
    %25 = vector.load %arg19[%c0_17, %c0_18, %c0_19, %c0_20] : memref<1x3x1x32xf32, #tpu.memory_space<vmem>>, vector<1x1x1x32xf32>
    %26 = vector.shape_cast %25 : vector<1x1x1x32xf32> to vector<1x32xf32>
    %cst_21 = arith.constant dense<0.000000e+00> : vector<8xf32>
    %27 = vector.multi_reduction <add>, %22, %cst_21 [1] : vector<8x32xf32> to vector<8xf32>
    %28 = vector.shape_cast %27 : vector<8xf32> to vector<8x1xf32>
    %cst_22 = arith.constant 3.200000e+01 : f32
    %29 = vector.broadcast %cst_22 : f32 to vector<8x1xf32>
    %30 = arith.divf %28, %29 : vector<8x1xf32>
    %31 = vector.broadcast %30 : vector<8x1xf32> to vector<8x32xf32>
    %32 = arith.subf %22, %31 : vector<8x32xf32>
    %33 = arith.mulf %32, %32 : vector<8x32xf32>
    %cst_23 = arith.constant dense<0.000000e+00> : vector<8xf32>
    %34 = vector.multi_reduction <add>, %33, %cst_23 [1] : vector<8x32xf32> to vector<8xf32>
    %35 = vector.shape_cast %34 : vector<8xf32> to vector<8x1xf32>
    %cst_24 = arith.constant 3.200000e+01 : f32
    %36 = vector.broadcast %cst_24 : f32 to vector<8x1xf32>
    %37 = arith.divf %35, %36 : vector<8x1xf32>
    %38 = vector.broadcast %30 : vector<8x1xf32> to vector<8x32xf32>
    %39 = arith.subf %22, %38 : vector<8x32xf32>
    %cst_25 = arith.constant 9.99999997E-7 : f32
    %40 = vector.broadcast %cst_25 : f32 to vector<8x1xf32>
    %41 = arith.addf %37, %40 : vector<8x1xf32>
    %42 = math.rsqrt %41 : vector<8x1xf32>
    %43 = vector.broadcast %42 : vector<8x1xf32> to vector<8x32xf32>
    %44 = arith.mulf %39, %43 : vector<8x32xf32>
    %45 = vector.broadcast %24 : vector<1x32xf32> to vector<8x32xf32>
    %46 = arith.mulf %44, %45 : vector<8x32xf32>
    %47 = vector.broadcast %26 : vector<1x32xf32> to vector<8x32xf32>
    %48 = arith.addf %46, %47 : vector<8x32xf32>
    %49 = arith.truncf %48 : vector<8x32xf32> to vector<8x32xbf16>
    %50 = arith.truncf %48 : vector<8x32xf32> to vector<8x32xbf16>
    %cst_26 = arith.constant 0.000000e+00 : f32
    %51 = vector.broadcast %cst_26 : f32 to vector<8x32xf32>
    %c0_27 = arith.constant 0 : index
    %c0_28 = arith.constant 0 : index
    %c0_29 = arith.constant 0 : index
    %c0_30 = arith.constant 0 : index
    %c0_31 = arith.constant 0 : index
    %52 = vector.load %arg6[%c0_27, %c0_28, %c0_29, %c0_30, %c0_31] : memref<1x3x4x32x8xbf16, #tpu.memory_space<vmem>>, vector<1x1x1x32x8xbf16>
    %53 = vector.shape_cast %52 : vector<1x1x1x32x8xbf16> to vector<32x8xbf16>
    %cst_32 = arith.constant dense<0.000000e+00> : vector<8x8xf32>
    %54 = tpu.matmul %49, %53, %cst_32 {dimension_numbers = #tpu.dot_dimension_numbers<[1], [0], [0], [1], [0, 0, 1, 1], [], []>} : vector<8x32xbf16>, vector<32x8xbf16>, vector<8x8xf32> -> vector<8x8xf32>
    %c0_33 = arith.constant 0 : index
    %c0_34 = arith.constant 0 : index
    %c0_35 = arith.constant 0 : index
    %c0_36 = arith.constant 0 : index
    %c0_37 = arith.constant 0 : index
    %55 = vector.load %arg7[%c0_33, %c0_34, %c0_35, %c0_36, %c0_37] : memref<1x3x4x1x8xf32, #tpu.memory_space<vmem>>, vector<1x1x1x1x8xf32>
    %56 = vector.shape_cast %55 : vector<1x1x1x1x8xf32> to vector<1x8xf32>
    %57 = vector.broadcast %56 : vector<1x8xf32> to vector<8x8xf32>
    %58 = arith.addf %54, %57 : vector<8x8xf32>
    %c0_38 = arith.constant 0 : index
    %c1 = arith.constant 1 : index
    %c0_39 = arith.constant 0 : index
    %c0_40 = arith.constant 0 : index
    %c0_41 = arith.constant 0 : index
    %59 = vector.load %arg6[%c0_38, %c1, %c0_39, %c0_40, %c0_41] : memref<1x3x4x32x8xbf16, #tpu.memory_space<vmem>>, vector<1x1x1x32x8xbf16>
    %60 = vector.shape_cast %59 : vector<1x1x1x32x8xbf16> to vector<32x8xbf16>
    %cst_42 = arith.constant dense<0.000000e+00> : vector<8x8xf32>
    %61 = tpu.matmul %50, %60, %cst_42 {dimension_numbers = #tpu.dot_dimension_numbers<[1], [0], [0], [1], [0, 0, 1, 1], [], []>} : vector<8x32xbf16>, vector<32x8xbf16>, vector<8x8xf32> -> vector<8x8xf32>
    %c0_43 = arith.constant 0 : index
    %c1_44 = arith.constant 1 : index
    %c0_45 = arith.constant 0 : index
    %c0_46 = arith.constant 0 : index
    %c0_47 = arith.constant 0 : index
    %62 = vector.load %arg7[%c0_43, %c1_44, %c0_45, %c0_46, %c0_47] : memref<1x3x4x1x8xf32, #tpu.memory_space<vmem>>, vector<1x1x1x1x8xf32>
    %63 = vector.shape_cast %62 : vector<1x1x1x1x8xf32> to vector<1x8xf32>
    %64 = vector.broadcast %63 : vector<1x8xf32> to vector<8x8xf32>
    %65 = arith.addf %61, %64 : vector<8x8xf32>
    %c0_48 = arith.constant 0 : index
    %c2 = arith.constant 2 : index
    %c0_49 = arith.constant 0 : index
    %c0_50 = arith.constant 0 : index
    %c0_51 = arith.constant 0 : index
    %66 = vector.load %arg6[%c0_48, %c2, %c0_49, %c0_50, %c0_51] : memref<1x3x4x32x8xbf16, #tpu.memory_space<vmem>>, vector<1x1x1x32x8xbf16>
    %67 = vector.shape_cast %66 : vector<1x1x1x32x8xbf16> to vector<32x8xbf16>
    %cst_52 = arith.constant dense<0.000000e+00> : vector<8x8xf32>
    %68 = tpu.matmul %50, %67, %cst_52 {dimension_numbers = #tpu.dot_dimension_numbers<[1], [0], [0], [1], [0, 0, 1, 1], [], []>} : vector<8x32xbf16>, vector<32x8xbf16>, vector<8x8xf32> -> vector<8x8xf32>
    %c0_53 = arith.constant 0 : index
    %c2_54 = arith.constant 2 : index
    %c0_55 = arith.constant 0 : index
    %c0_56 = arith.constant 0 : index
    %c0_57 = arith.constant 0 : index
    %69 = vector.load %arg7[%c0_53, %c2_54, %c0_55, %c0_56, %c0_57] : memref<1x3x4x1x8xf32, #tpu.memory_space<vmem>>, vector<1x1x1x1x8xf32>
    %70 = vector.shape_cast %69 : vector<1x1x1x1x8xf32> to vector<1x8xf32>
    %71 = vector.broadcast %70 : vector<1x8xf32> to vector<8x8xf32>
    %72 = arith.addf %68, %71 : vector<8x8xf32>
    %73 = arith.truncf %58 : vector<8x8xf32> to vector<8x8xbf16>
    %74 = arith.truncf %65 : vector<8x8xf32> to vector<8x8xbf16>
    %cst_58 = arith.constant dense<0.000000e+00> : vector<8x8xf32>
    %75 = tpu.matmul %73, %74, %cst_58 {dimension_numbers = #tpu.dot_dimension_numbers<[1], [1], [0], [0], [0, 0, 1, 0], [], []>} : vector<8x8xbf16>, vector<8x8xbf16>, vector<8x8xf32> -> vector<8x8xf32>
    %cst_59 = arith.constant 0.353553385 : f32
    %76 = vector.broadcast %cst_59 : f32 to vector<8x8xf32>
    %77 = arith.mulf %75, %76 : vector<8x8xf32>
    %78 = arith.addf %77, %14 : vector<8x8xf32>
    %cst_60 = arith.constant dense<0xFF800000> : vector<8xf32>
    %79 = vector.multi_reduction <maximumf>, %78, %cst_60 [1] : vector<8x8xf32> to vector<8xf32>
    %80 = vector.shape_cast %79 : vector<8xf32> to vector<8x1xf32>
    %81 = vector.broadcast %80 : vector<8x1xf32> to vector<8x8xf32>
    %82 = arith.subf %78, %81 : vector<8x8xf32>
    %83 = math.exp %82 : vector<8x8xf32>
    %cst_61 = arith.constant dense<0.000000e+00> : vector<8xf32>
    %84 = vector.multi_reduction <add>, %83, %cst_61 [1] : vector<8x8xf32> to vector<8xf32>
    %85 = vector.shape_cast %84 : vector<8xf32> to vector<8x1xf32>
    %86 = tpu.reciprocal %85 : vector<8x1xf32> -> vector<8x1xf32>
    %87 = vector.broadcast %86 : vector<8x1xf32> to vector<8x8xf32>
    %88 = arith.mulf %83, %87 : vector<8x8xf32>
    %89 = arith.truncf %88 : vector<8x8xf32> to vector<8x8xbf16>
    %90 = arith.truncf %72 : vector<8x8xf32> to vector<8x8xbf16>
    %cst_62 = arith.constant dense<0.000000e+00> : vector<8x8xf32>
    %91 = tpu.matmul %89, %90, %cst_62 {dimension_numbers = #tpu.dot_dimension_numbers<[1], [0], [0], [1], [0, 0, 1, 1], [], []>} : vector<8x8xbf16>, vector<8x8xbf16>, vector<8x8xf32> -> vector<8x8xf32>
    %92 = arith.truncf %91 : vector<8x8xf32> to vector<8x8xbf16>
    %c0_63 = arith.constant 0 : index
    %c0_64 = arith.constant 0 : index
    %c0_65 = arith.constant 0 : index
    %c0_66 = arith.constant 0 : index
    %93 = vector.load %arg8[%c0_63, %c0_64, %c0_65, %c0_66] : memref<1x4x8x32xbf16, #tpu.memory_space<vmem>>, vector<1x1x8x32xbf16>
    %94 = vector.shape_cast %93 : vector<1x1x8x32xbf16> to vector<8x32xbf16>
    %cst_67 = arith.constant dense<0.000000e+00> : vector<8x32xf32>
    %95 = tpu.matmul %92, %94, %cst_67 {dimension_numbers = #tpu.dot_dimension_numbers<[1], [0], [0], [1], [0, 0, 1, 1], [], []>} : vector<8x8xbf16>, vector<8x32xbf16>, vector<8x32xf32> -> vector<8x32xf32>
    %96 = arith.addf %51, %95 : vector<8x32xf32>
    %c0_68 = arith.constant 0 : index
    %c0_69 = arith.constant 0 : index
    %c1_70 = arith.constant 1 : index
    %c0_71 = arith.constant 0 : index
    %c0_72 = arith.constant 0 : index
    %97 = vector.load %arg6[%c0_68, %c0_69, %c1_70, %c0_71, %c0_72] : memref<1x3x4x32x8xbf16, #tpu.memory_space<vmem>>, vector<1x1x1x32x8xbf16>
    %98 = vector.shape_cast %97 : vector<1x1x1x32x8xbf16> to vector<32x8xbf16>
    %cst_73 = arith.constant dense<0.000000e+00> : vector<8x8xf32>
    %99 = tpu.matmul %49, %98, %cst_73 {dimension_numbers = #tpu.dot_dimension_numbers<[1], [0], [0], [1], [0, 0, 1, 1], [], []>} : vector<8x32xbf16>, vector<32x8xbf16>, vector<8x8xf32> -> vector<8x8xf32>
    %c0_74 = arith.constant 0 : index
    %c0_75 = arith.constant 0 : index
    %c1_76 = arith.constant 1 : index
    %c0_77 = arith.constant 0 : index
    %c0_78 = arith.constant 0 : index
    %100 = vector.load %arg7[%c0_74, %c0_75, %c1_76, %c0_77, %c0_78] : memref<1x3x4x1x8xf32, #tpu.memory_space<vmem>>, vector<1x1x1x1x8xf32>
    %101 = vector.shape_cast %100 : vector<1x1x1x1x8xf32> to vector<1x8xf32>
    %102 = vector.broadcast %101 : vector<1x8xf32> to vector<8x8xf32>
    %103 = arith.addf %99, %102 : vector<8x8xf32>
    %c0_79 = arith.constant 0 : index
    %c1_80 = arith.constant 1 : index
    %c1_81 = arith.constant 1 : index
    %c0_82 = arith.constant 0 : index
    %c0_83 = arith.constant 0 : index
    %104 = vector.load %arg6[%c0_79, %c1_80, %c1_81, %c0_82, %c0_83] : memref<1x3x4x32x8xbf16, #tpu.memory_space<vmem>>, vector<1x1x1x32x8xbf16>
    %105 = vector.shape_cast %104 : vector<1x1x1x32x8xbf16> to vector<32x8xbf16>
    %cst_84 = arith.constant dense<0.000000e+00> : vector<8x8xf32>
    %106 = tpu.matmul %50, %105, %cst_84 {dimension_numbers = #tpu.dot_dimension_numbers<[1], [0], [0], [1], [0, 0, 1, 1], [], []>} : vector<8x32xbf16>, vector<32x8xbf16>, vector<8x8xf32> -> vector<8x8xf32>
    %c0_85 = arith.constant 0 : index
    %c1_86 = arith.constant 1 : index
    %c1_87 = arith.constant 1 : index
    %c0_88 = arith.constant 0 : index
    %c0_89 = arith.constant 0 : index
    %107 = vector.load %arg7[%c0_85, %c1_86, %c1_87, %c0_88, %c0_89] : memref<1x3x4x1x8xf32, #tpu.memory_space<vmem>>, vector<1x1x1x1x8xf32>
    %108 = vector.shape_cast %107 : vector<1x1x1x1x8xf32> to vector<1x8xf32>
    %109 = vector.broadcast %108 : vector<1x8xf32> to vector<8x8xf32>
    %110 = arith.addf %106, %109 : vector<8x8xf32>
    %c0_90 = arith.constant 0 : index
    %c2_91 = arith.constant 2 : index
    %c1_92 = arith.constant 1 : index
    %c0_93 = arith.constant 0 : index
    %c0_94 = arith.constant 0 : index
    %111 = vector.load %arg6[%c0_90, %c2_91, %c1_92, %c0_93, %c0_94] : memref<1x3x4x32x8xbf16, #tpu.memory_space<vmem>>, vector<1x1x1x32x8xbf16>
    %112 = vector.shape_cast %111 : vector<1x1x1x32x8xbf16> to vector<32x8xbf16>
    %cst_95 = arith.constant dense<0.000000e+00> : vector<8x8xf32>
    %113 = tpu.matmul %50, %112, %cst_95 {dimension_numbers = #tpu.dot_dimension_numbers<[1], [0], [0], [1], [0, 0, 1, 1], [], []>} : vector<8x32xbf16>, vector<32x8xbf16>, vector<8x8xf32> -> vector<8x8xf32>
    %c0_96 = arith.constant 0 : index
    %c2_97 = arith.constant 2 : index
    %c1_98 = arith.constant 1 : index
    %c0_99 = arith.constant 0 : index
    %c0_100 = arith.constant 0 : index
    %114 = vector.load %arg7[%c0_96, %c2_97, %c1_98, %c0_99, %c0_100] : memref<1x3x4x1x8xf32, #tpu.memory_space<vmem>>, vector<1x1x1x1x8xf32>
    %115 = vector.shape_cast %114 : vector<1x1x1x1x8xf32> to vector<1x8xf32>
    %116 = vector.broadcast %115 : vector<1x8xf32> to vector<8x8xf32>
    %117 = arith.addf %113, %116 : vector<8x8xf32>
    %118 = arith.truncf %103 : vector<8x8xf32> to vector<8x8xbf16>
    %119 = arith.truncf %110 : vector<8x8xf32> to vector<8x8xbf16>
    %cst_101 = arith.constant dense<0.000000e+00> : vector<8x8xf32>
    %120 = tpu.matmul %118, %119, %cst_101 {dimension_numbers = #tpu.dot_dimension_numbers<[1], [1], [0], [0], [0, 0, 1, 0], [], []>} : vector<8x8xbf16>, vector<8x8xbf16>, vector<8x8xf32> -> vector<8x8xf32>
    %cst_102 = arith.constant 0.353553385 : f32
    %121 = vector.broadcast %cst_102 : f32 to vector<8x8xf32>
    %122 = arith.mulf %120, %121 : vector<8x8xf32>
    %123 = arith.addf %122, %14 : vector<8x8xf32>
    %cst_103 = arith.constant dense<0xFF800000> : vector<8xf32>
    %124 = vector.multi_reduction <maximumf>, %123, %cst_103 [1] : vector<8x8xf32> to vector<8xf32>
    %125 = vector.shape_cast %124 : vector<8xf32> to vector<8x1xf32>
    %126 = vector.broadcast %125 : vector<8x1xf32> to vector<8x8xf32>
    %127 = arith.subf %123, %126 : vector<8x8xf32>
    %128 = math.exp %127 : vector<8x8xf32>
    %cst_104 = arith.constant dense<0.000000e+00> : vector<8xf32>
    %129 = vector.multi_reduction <add>, %128, %cst_104 [1] : vector<8x8xf32> to vector<8xf32>
    %130 = vector.shape_cast %129 : vector<8xf32> to vector<8x1xf32>
    %131 = tpu.reciprocal %130 : vector<8x1xf32> -> vector<8x1xf32>
    %132 = vector.broadcast %131 : vector<8x1xf32> to vector<8x8xf32>
    %133 = arith.mulf %128, %132 : vector<8x8xf32>
    %134 = arith.truncf %133 : vector<8x8xf32> to vector<8x8xbf16>
    %135 = arith.truncf %117 : vector<8x8xf32> to vector<8x8xbf16>
    %cst_105 = arith.constant dense<0.000000e+00> : vector<8x8xf32>
    %136 = tpu.matmul %134, %135, %cst_105 {dimension_numbers = #tpu.dot_dimension_numbers<[1], [0], [0], [1], [0, 0, 1, 1], [], []>} : vector<8x8xbf16>, vector<8x8xbf16>, vector<8x8xf32> -> vector<8x8xf32>
    %137 = arith.truncf %136 : vector<8x8xf32> to vector<8x8xbf16>
    %c0_106 = arith.constant 0 : index
    %c1_107 = arith.constant 1 : index
    %c0_108 = arith.constant 0 : index
    %c0_109 = arith.constant 0 : index
    %138 = vector.load %arg8[%c0_106, %c1_107, %c0_108, %c0_109] : memref<1x4x8x32xbf16, #tpu.memory_space<vmem>>, vector<1x1x8x32xbf16>
    %139 = vector.shape_cast %138 : vector<1x1x8x32xbf16> to vector<8x32xbf16>
    %cst_110 = arith.constant dense<0.000000e+00> : vector<8x32xf32>
    %140 = tpu.matmul %137, %139, %cst_110 {dimension_numbers = #tpu.dot_dimension_numbers<[1], [0], [0], [1], [0, 0, 1, 1], [], []>} : vector<8x8xbf16>, vector<8x32xbf16>, vector<8x32xf32> -> vector<8x32xf32>
    %141 = arith.addf %96, %140 : vector<8x32xf32>
    %c0_111 = arith.constant 0 : index
    %c0_112 = arith.constant 0 : index
    %c2_113 = arith.constant 2 : index
    %c0_114 = arith.constant 0 : index
    %c0_115 = arith.constant 0 : index
    %142 = vector.load %arg6[%c0_111, %c0_112, %c2_113, %c0_114, %c0_115] : memref<1x3x4x32x8xbf16, #tpu.memory_space<vmem>>, vector<1x1x1x32x8xbf16>
    %143 = vector.shape_cast %142 : vector<1x1x1x32x8xbf16> to vector<32x8xbf16>
    %cst_116 = arith.constant dense<0.000000e+00> : vector<8x8xf32>
    %144 = tpu.matmul %49, %143, %cst_116 {dimension_numbers = #tpu.dot_dimension_numbers<[1], [0], [0], [1], [0, 0, 1, 1], [], []>} : vector<8x32xbf16>, vector<32x8xbf16>, vector<8x8xf32> -> vector<8x8xf32>
    %c0_117 = arith.constant 0 : index
    %c0_118 = arith.constant 0 : index
    %c2_119 = arith.constant 2 : index
    %c0_120 = arith.constant 0 : index
    %c0_121 = arith.constant 0 : index
    %145 = vector.load %arg7[%c0_117, %c0_118, %c2_119, %c0_120, %c0_121] : memref<1x3x4x1x8xf32, #tpu.memory_space<vmem>>, vector<1x1x1x1x8xf32>
    %146 = vector.shape_cast %145 : vector<1x1x1x1x8xf32> to vector<1x8xf32>
    %147 = vector.broadcast %146 : vector<1x8xf32> to vector<8x8xf32>
    %148 = arith.addf %144, %147 : vector<8x8xf32>
    %c0_122 = arith.constant 0 : index
    %c1_123 = arith.constant 1 : index
    %c2_124 = arith.constant 2 : index
    %c0_125 = arith.constant 0 : index
    %c0_126 = arith.constant 0 : index
    %149 = vector.load %arg6[%c0_122, %c1_123, %c2_124, %c0_125, %c0_126] : memref<1x3x4x32x8xbf16, #tpu.memory_space<vmem>>, vector<1x1x1x32x8xbf16>
    %150 = vector.shape_cast %149 : vector<1x1x1x32x8xbf16> to vector<32x8xbf16>
    %cst_127 = arith.constant dense<0.000000e+00> : vector<8x8xf32>
    %151 = tpu.matmul %50, %150, %cst_127 {dimension_numbers = #tpu.dot_dimension_numbers<[1], [0], [0], [1], [0, 0, 1, 1], [], []>} : vector<8x32xbf16>, vector<32x8xbf16>, vector<8x8xf32> -> vector<8x8xf32>
    %c0_128 = arith.constant 0 : index
    %c1_129 = arith.constant 1 : index
    %c2_130 = arith.constant 2 : index
    %c0_131 = arith.constant 0 : index
    %c0_132 = arith.constant 0 : index
    %152 = vector.load %arg7[%c0_128, %c1_129, %c2_130, %c0_131, %c0_132] : memref<1x3x4x1x8xf32, #tpu.memory_space<vmem>>, vector<1x1x1x1x8xf32>
    %153 = vector.shape_cast %152 : vector<1x1x1x1x8xf32> to vector<1x8xf32>
    %154 = vector.broadcast %153 : vector<1x8xf32> to vector<8x8xf32>
    %155 = arith.addf %151, %154 : vector<8x8xf32>
    %c0_133 = arith.constant 0 : index
    %c2_134 = arith.constant 2 : index
    %c2_135 = arith.constant 2 : index
    %c0_136 = arith.constant 0 : index
    %c0_137 = arith.constant 0 : index
    %156 = vector.load %arg6[%c0_133, %c2_134, %c2_135, %c0_136, %c0_137] : memref<1x3x4x32x8xbf16, #tpu.memory_space<vmem>>, vector<1x1x1x32x8xbf16>
    %157 = vector.shape_cast %156 : vector<1x1x1x32x8xbf16> to vector<32x8xbf16>
    %cst_138 = arith.constant dense<0.000000e+00> : vector<8x8xf32>
    %158 = tpu.matmul %50, %157, %cst_138 {dimension_numbers = #tpu.dot_dimension_numbers<[1], [0], [0], [1], [0, 0, 1, 1], [], []>} : vector<8x32xbf16>, vector<32x8xbf16>, vector<8x8xf32> -> vector<8x8xf32>
    %c0_139 = arith.constant 0 : index
    %c2_140 = arith.constant 2 : index
    %c2_141 = arith.constant 2 : index
    %c0_142 = arith.constant 0 : index
    %c0_143 = arith.constant 0 : index
    %159 = vector.load %arg7[%c0_139, %c2_140, %c2_141, %c0_142, %c0_143] : memref<1x3x4x1x8xf32, #tpu.memory_space<vmem>>, vector<1x1x1x1x8xf32>
    %160 = vector.shape_cast %159 : vector<1x1x1x1x8xf32> to vector<1x8xf32>
    %161 = vector.broadcast %160 : vector<1x8xf32> to vector<8x8xf32>
    %162 = arith.addf %158, %161 : vector<8x8xf32>
    %163 = arith.truncf %148 : vector<8x8xf32> to vector<8x8xbf16>
    %164 = arith.truncf %155 : vector<8x8xf32> to vector<8x8xbf16>
    %cst_144 = arith.constant dense<0.000000e+00> : vector<8x8xf32>
    %165 = tpu.matmul %163, %164, %cst_144 {dimension_numbers = #tpu.dot_dimension_numbers<[1], [1], [0], [0], [0, 0, 1, 0], [], []>} : vector<8x8xbf16>, vector<8x8xbf16>, vector<8x8xf32> -> vector<8x8xf32>
    %cst_145 = arith.constant 0.353553385 : f32
    %166 = vector.broadcast %cst_145 : f32 to vector<8x8xf32>
    %167 = arith.mulf %165, %166 : vector<8x8xf32>
    %168 = arith.addf %167, %14 : vector<8x8xf32>
    %cst_146 = arith.constant dense<0xFF800000> : vector<8xf32>
    %169 = vector.multi_reduction <maximumf>, %168, %cst_146 [1] : vector<8x8xf32> to vector<8xf32>
    %170 = vector.shape_cast %169 : vector<8xf32> to vector<8x1xf32>
    %171 = vector.broadcast %170 : vector<8x1xf32> to vector<8x8xf32>
    %172 = arith.subf %168, %171 : vector<8x8xf32>
    %173 = math.exp %172 : vector<8x8xf32>
    %cst_147 = arith.constant dense<0.000000e+00> : vector<8xf32>
    %174 = vector.multi_reduction <add>, %173, %cst_147 [1] : vector<8x8xf32> to vector<8xf32>
    %175 = vector.shape_cast %174 : vector<8xf32> to vector<8x1xf32>
    %176 = tpu.reciprocal %175 : vector<8x1xf32> -> vector<8x1xf32>
    %177 = vector.broadcast %176 : vector<8x1xf32> to vector<8x8xf32>
    %178 = arith.mulf %173, %177 : vector<8x8xf32>
    %179 = arith.truncf %178 : vector<8x8xf32> to vector<8x8xbf16>
    %180 = arith.truncf %162 : vector<8x8xf32> to vector<8x8xbf16>
    %cst_148 = arith.constant dense<0.000000e+00> : vector<8x8xf32>
    %181 = tpu.matmul %179, %180, %cst_148 {dimension_numbers = #tpu.dot_dimension_numbers<[1], [0], [0], [1], [0, 0, 1, 1], [], []>} : vector<8x8xbf16>, vector<8x8xbf16>, vector<8x8xf32> -> vector<8x8xf32>
    %182 = arith.truncf %181 : vector<8x8xf32> to vector<8x8xbf16>
    %c0_149 = arith.constant 0 : index
    %c2_150 = arith.constant 2 : index
    %c0_151 = arith.constant 0 : index
    %c0_152 = arith.constant 0 : index
    %183 = vector.load %arg8[%c0_149, %c2_150, %c0_151, %c0_152] : memref<1x4x8x32xbf16, #tpu.memory_space<vmem>>, vector<1x1x8x32xbf16>
    %184 = vector.shape_cast %183 : vector<1x1x8x32xbf16> to vector<8x32xbf16>
    %cst_153 = arith.constant dense<0.000000e+00> : vector<8x32xf32>
    %185 = tpu.matmul %182, %184, %cst_153 {dimension_numbers = #tpu.dot_dimension_numbers<[1], [0], [0], [1], [0, 0, 1, 1], [], []>} : vector<8x8xbf16>, vector<8x32xbf16>, vector<8x32xf32> -> vector<8x32xf32>
    %186 = arith.addf %141, %185 : vector<8x32xf32>
    %c0_154 = arith.constant 0 : index
    %c0_155 = arith.constant 0 : index
    %c3 = arith.constant 3 : index
    %c0_156 = arith.constant 0 : index
    %c0_157 = arith.constant 0 : index
    %187 = vector.load %arg6[%c0_154, %c0_155, %c3, %c0_156, %c0_157] : memref<1x3x4x32x8xbf16, #tpu.memory_space<vmem>>, vector<1x1x1x32x8xbf16>
    %188 = vector.shape_cast %187 : vector<1x1x1x32x8xbf16> to vector<32x8xbf16>
    %cst_158 = arith.constant dense<0.000000e+00> : vector<8x8xf32>
    %189 = tpu.matmul %49, %188, %cst_158 {dimension_numbers = #tpu.dot_dimension_numbers<[1], [0], [0], [1], [0, 0, 1, 1], [], []>} : vector<8x32xbf16>, vector<32x8xbf16>, vector<8x8xf32> -> vector<8x8xf32>
    %c0_159 = arith.constant 0 : index
    %c0_160 = arith.constant 0 : index
    %c3_161 = arith.constant 3 : index
    %c0_162 = arith.constant 0 : index
    %c0_163 = arith.constant 0 : index
    %190 = vector.load %arg7[%c0_159, %c0_160, %c3_161, %c0_162, %c0_163] : memref<1x3x4x1x8xf32, #tpu.memory_space<vmem>>, vector<1x1x1x1x8xf32>
    %191 = vector.shape_cast %190 : vector<1x1x1x1x8xf32> to vector<1x8xf32>
    %192 = vector.broadcast %191 : vector<1x8xf32> to vector<8x8xf32>
    %193 = arith.addf %189, %192 : vector<8x8xf32>
    %c0_164 = arith.constant 0 : index
    %c1_165 = arith.constant 1 : index
    %c3_166 = arith.constant 3 : index
    %c0_167 = arith.constant 0 : index
    %c0_168 = arith.constant 0 : index
    %194 = vector.load %arg6[%c0_164, %c1_165, %c3_166, %c0_167, %c0_168] : memref<1x3x4x32x8xbf16, #tpu.memory_space<vmem>>, vector<1x1x1x32x8xbf16>
    %195 = vector.shape_cast %194 : vector<1x1x1x32x8xbf16> to vector<32x8xbf16>
    %cst_169 = arith.constant dense<0.000000e+00> : vector<8x8xf32>
    %196 = tpu.matmul %50, %195, %cst_169 {dimension_numbers = #tpu.dot_dimension_numbers<[1], [0], [0], [1], [0, 0, 1, 1], [], []>} : vector<8x32xbf16>, vector<32x8xbf16>, vector<8x8xf32> -> vector<8x8xf32>
    %c0_170 = arith.constant 0 : index
    %c1_171 = arith.constant 1 : index
    %c3_172 = arith.constant 3 : index
    %c0_173 = arith.constant 0 : index
    %c0_174 = arith.constant 0 : index
    %197 = vector.load %arg7[%c0_170, %c1_171, %c3_172, %c0_173, %c0_174] : memref<1x3x4x1x8xf32, #tpu.memory_space<vmem>>, vector<1x1x1x1x8xf32>
    %198 = vector.shape_cast %197 : vector<1x1x1x1x8xf32> to vector<1x8xf32>
    %199 = vector.broadcast %198 : vector<1x8xf32> to vector<8x8xf32>
    %200 = arith.addf %196, %199 : vector<8x8xf32>
    %c0_175 = arith.constant 0 : index
    %c2_176 = arith.constant 2 : index
    %c3_177 = arith.constant 3 : index
    %c0_178 = arith.constant 0 : index
    %c0_179 = arith.constant 0 : index
    %201 = vector.load %arg6[%c0_175, %c2_176, %c3_177, %c0_178, %c0_179] : memref<1x3x4x32x8xbf16, #tpu.memory_space<vmem>>, vector<1x1x1x32x8xbf16>
    %202 = vector.shape_cast %201 : vector<1x1x1x32x8xbf16> to vector<32x8xbf16>
    %cst_180 = arith.constant dense<0.000000e+00> : vector<8x8xf32>
    %203 = tpu.matmul %50, %202, %cst_180 {dimension_numbers = #tpu.dot_dimension_numbers<[1], [0], [0], [1], [0, 0, 1, 1], [], []>} : vector<8x32xbf16>, vector<32x8xbf16>, vector<8x8xf32> -> vector<8x8xf32>
    %c0_181 = arith.constant 0 : index
    %c2_182 = arith.constant 2 : index
    %c3_183 = arith.constant 3 : index
    %c0_184 = arith.constant 0 : index
    %c0_185 = arith.constant 0 : index
    %204 = vector.load %arg7[%c0_181, %c2_182, %c3_183, %c0_184, %c0_185] : memref<1x3x4x1x8xf32, #tpu.memory_space<vmem>>, vector<1x1x1x1x8xf32>
    %205 = vector.shape_cast %204 : vector<1x1x1x1x8xf32> to vector<1x8xf32>
    %206 = vector.broadcast %205 : vector<1x8xf32> to vector<8x8xf32>
    %207 = arith.addf %203, %206 : vector<8x8xf32>
    %208 = arith.truncf %193 : vector<8x8xf32> to vector<8x8xbf16>
    %209 = arith.truncf %200 : vector<8x8xf32> to vector<8x8xbf16>
    %cst_186 = arith.constant dense<0.000000e+00> : vector<8x8xf32>
    %210 = tpu.matmul %208, %209, %cst_186 {dimension_numbers = #tpu.dot_dimension_numbers<[1], [1], [0], [0], [0, 0, 1, 0], [], []>} : vector<8x8xbf16>, vector<8x8xbf16>, vector<8x8xf32> -> vector<8x8xf32>
    %cst_187 = arith.constant 0.353553385 : f32
    %211 = vector.broadcast %cst_187 : f32 to vector<8x8xf32>
    %212 = arith.mulf %210, %211 : vector<8x8xf32>
    %213 = arith.addf %212, %14 : vector<8x8xf32>
    %cst_188 = arith.constant dense<0xFF800000> : vector<8xf32>
    %214 = vector.multi_reduction <maximumf>, %213, %cst_188 [1] : vector<8x8xf32> to vector<8xf32>
    %215 = vector.shape_cast %214 : vector<8xf32> to vector<8x1xf32>
    %216 = vector.broadcast %215 : vector<8x1xf32> to vector<8x8xf32>
    %217 = arith.subf %213, %216 : vector<8x8xf32>
    %218 = math.exp %217 : vector<8x8xf32>
    %cst_189 = arith.constant dense<0.000000e+00> : vector<8xf32>
    %219 = vector.multi_reduction <add>, %218, %cst_189 [1] : vector<8x8xf32> to vector<8xf32>
    %220 = vector.shape_cast %219 : vector<8xf32> to vector<8x1xf32>
    %221 = tpu.reciprocal %220 : vector<8x1xf32> -> vector<8x1xf32>
    %222 = vector.broadcast %221 : vector<8x1xf32> to vector<8x8xf32>
    %223 = arith.mulf %218, %222 : vector<8x8xf32>
    %224 = arith.truncf %223 : vector<8x8xf32> to vector<8x8xbf16>
    %225 = arith.truncf %207 : vector<8x8xf32> to vector<8x8xbf16>
    %cst_190 = arith.constant dense<0.000000e+00> : vector<8x8xf32>
    %226 = tpu.matmul %224, %225, %cst_190 {dimension_numbers = #tpu.dot_dimension_numbers<[1], [0], [0], [1], [0, 0, 1, 1], [], []>} : vector<8x8xbf16>, vector<8x8xbf16>, vector<8x8xf32> -> vector<8x8xf32>
    %227 = arith.truncf %226 : vector<8x8xf32> to vector<8x8xbf16>
    %c0_191 = arith.constant 0 : index
    %c3_192 = arith.constant 3 : index
    %c0_193 = arith.constant 0 : index
    %c0_194 = arith.constant 0 : index
    %228 = vector.load %arg8[%c0_191, %c3_192, %c0_193, %c0_194] : memref<1x4x8x32xbf16, #tpu.memory_space<vmem>>, vector<1x1x8x32xbf16>
    %229 = vector.shape_cast %228 : vector<1x1x8x32xbf16> to vector<8x32xbf16>
    %cst_195 = arith.constant dense<0.000000e+00> : vector<8x32xf32>
    %230 = tpu.matmul %227, %229, %cst_195 {dimension_numbers = #tpu.dot_dimension_numbers<[1], [0], [0], [1], [0, 0, 1, 1], [], []>} : vector<8x8xbf16>, vector<8x32xbf16>, vector<8x32xf32> -> vector<8x32xf32>
    %231 = arith.addf %186, %230 : vector<8x32xf32>
    %232 = arith.addf %22, %231 : vector<8x32xf32>
    %c0_196 = arith.constant 0 : index
    %c0_197 = arith.constant 0 : index
    %c0_198 = arith.constant 0 : index
    %233 = vector.load %arg9[%c0_196, %c0_197, %c0_198] : memref<1x1x32xf32, #tpu.memory_space<vmem>>, vector<1x1x32xf32>
    %234 = vector.shape_cast %233 : vector<1x1x32xf32> to vector<1x32xf32>
    %235 = vector.broadcast %234 : vector<1x32xf32> to vector<8x32xf32>
    %236 = arith.addf %232, %235 : vector<8x32xf32>
    %c0_199 = arith.constant 0 : index
    %c1_200 = arith.constant 1 : index
    %c0_201 = arith.constant 0 : index
    %c0_202 = arith.constant 0 : index
    %237 = vector.load %arg18[%c0_199, %c1_200, %c0_201, %c0_202] : memref<1x3x1x32xf32, #tpu.memory_space<vmem>>, vector<1x1x1x32xf32>
    %238 = vector.shape_cast %237 : vector<1x1x1x32xf32> to vector<1x32xf32>
    %c0_203 = arith.constant 0 : index
    %c1_204 = arith.constant 1 : index
    %c0_205 = arith.constant 0 : index
    %c0_206 = arith.constant 0 : index
    %239 = vector.load %arg19[%c0_203, %c1_204, %c0_205, %c0_206] : memref<1x3x1x32xf32, #tpu.memory_space<vmem>>, vector<1x1x1x32xf32>
    %240 = vector.shape_cast %239 : vector<1x1x1x32xf32> to vector<1x32xf32>
    %cst_207 = arith.constant dense<0.000000e+00> : vector<8xf32>
    %241 = vector.multi_reduction <add>, %236, %cst_207 [1] : vector<8x32xf32> to vector<8xf32>
    %242 = vector.shape_cast %241 : vector<8xf32> to vector<8x1xf32>
    %cst_208 = arith.constant 3.200000e+01 : f32
    %243 = vector.broadcast %cst_208 : f32 to vector<8x1xf32>
    %244 = arith.divf %242, %243 : vector<8x1xf32>
    %245 = vector.broadcast %244 : vector<8x1xf32> to vector<8x32xf32>
    %246 = arith.subf %236, %245 : vector<8x32xf32>
    %247 = arith.mulf %246, %246 : vector<8x32xf32>
    %cst_209 = arith.constant dense<0.000000e+00> : vector<8xf32>
    %248 = vector.multi_reduction <add>, %247, %cst_209 [1] : vector<8x32xf32> to vector<8xf32>
    %249 = vector.shape_cast %248 : vector<8xf32> to vector<8x1xf32>
    %cst_210 = arith.constant 3.200000e+01 : f32
    %250 = vector.broadcast %cst_210 : f32 to vector<8x1xf32>
    %251 = arith.divf %249, %250 : vector<8x1xf32>
    %252 = vector.broadcast %244 : vector<8x1xf32> to vector<8x32xf32>
    %253 = arith.subf %236, %252 : vector<8x32xf32>
    %cst_211 = arith.constant 9.99999997E-7 : f32
    %254 = vector.broadcast %cst_211 : f32 to vector<8x1xf32>
    %255 = arith.addf %251, %254 : vector<8x1xf32>
    %256 = math.rsqrt %255 : vector<8x1xf32>
    %257 = vector.broadcast %256 : vector<8x1xf32> to vector<8x32xf32>
    %258 = arith.mulf %253, %257 : vector<8x32xf32>
    %259 = vector.broadcast %238 : vector<1x32xf32> to vector<8x32xf32>
    %260 = arith.mulf %258, %259 : vector<8x32xf32>
    %261 = vector.broadcast %240 : vector<1x32xf32> to vector<8x32xf32>
    %262 = arith.addf %260, %261 : vector<8x32xf32>
    %c0_212 = arith.constant 0 : index
    %c0_213 = arith.constant 0 : index
    %c0_214 = arith.constant 0 : index
    %263 = vector.load %arg3[%c0_212, %c0_213, %c0_214] : memref<1x8x32xf32, #tpu.memory_space<vmem>>, vector<1x8x32xf32>
    %264 = vector.shape_cast %263 : vector<1x8x32xf32> to vector<8x32xf32>
    %265 = arith.truncf %262 : vector<8x32xf32> to vector<8x32xbf16>
    %266 = arith.truncf %264 : vector<8x32xf32> to vector<8x32xbf16>
    %cst_215 = arith.constant 0.000000e+00 : f32
    %267 = vector.broadcast %cst_215 : f32 to vector<8x32xf32>
    %c0_216 = arith.constant 0 : index
    %c0_217 = arith.constant 0 : index
    %c0_218 = arith.constant 0 : index
    %c0_219 = arith.constant 0 : index
    %c0_220 = arith.constant 0 : index
    %268 = vector.load %arg10[%c0_216, %c0_217, %c0_218, %c0_219, %c0_220] : memref<1x3x4x32x8xbf16, #tpu.memory_space<vmem>>, vector<1x1x1x32x8xbf16>
    %269 = vector.shape_cast %268 : vector<1x1x1x32x8xbf16> to vector<32x8xbf16>
    %cst_221 = arith.constant dense<0.000000e+00> : vector<8x8xf32>
    %270 = tpu.matmul %265, %269, %cst_221 {dimension_numbers = #tpu.dot_dimension_numbers<[1], [0], [0], [1], [0, 0, 1, 1], [], []>} : vector<8x32xbf16>, vector<32x8xbf16>, vector<8x8xf32> -> vector<8x8xf32>
    %c0_222 = arith.constant 0 : index
    %c0_223 = arith.constant 0 : index
    %c0_224 = arith.constant 0 : index
    %c0_225 = arith.constant 0 : index
    %c0_226 = arith.constant 0 : index
    %271 = vector.load %arg11[%c0_222, %c0_223, %c0_224, %c0_225, %c0_226] : memref<1x3x4x1x8xf32, #tpu.memory_space<vmem>>, vector<1x1x1x1x8xf32>
    %272 = vector.shape_cast %271 : vector<1x1x1x1x8xf32> to vector<1x8xf32>
    %273 = vector.broadcast %272 : vector<1x8xf32> to vector<8x8xf32>
    %274 = arith.addf %270, %273 : vector<8x8xf32>
    %c0_227 = arith.constant 0 : index
    %c1_228 = arith.constant 1 : index
    %c0_229 = arith.constant 0 : index
    %c0_230 = arith.constant 0 : index
    %c0_231 = arith.constant 0 : index
    %275 = vector.load %arg10[%c0_227, %c1_228, %c0_229, %c0_230, %c0_231] : memref<1x3x4x32x8xbf16, #tpu.memory_space<vmem>>, vector<1x1x1x32x8xbf16>
    %276 = vector.shape_cast %275 : vector<1x1x1x32x8xbf16> to vector<32x8xbf16>
    %cst_232 = arith.constant dense<0.000000e+00> : vector<8x8xf32>
    %277 = tpu.matmul %266, %276, %cst_232 {dimension_numbers = #tpu.dot_dimension_numbers<[1], [0], [0], [1], [0, 0, 1, 1], [], []>} : vector<8x32xbf16>, vector<32x8xbf16>, vector<8x8xf32> -> vector<8x8xf32>
    %c0_233 = arith.constant 0 : index
    %c1_234 = arith.constant 1 : index
    %c0_235 = arith.constant 0 : index
    %c0_236 = arith.constant 0 : index
    %c0_237 = arith.constant 0 : index
    %278 = vector.load %arg11[%c0_233, %c1_234, %c0_235, %c0_236, %c0_237] : memref<1x3x4x1x8xf32, #tpu.memory_space<vmem>>, vector<1x1x1x1x8xf32>
    %279 = vector.shape_cast %278 : vector<1x1x1x1x8xf32> to vector<1x8xf32>
    %280 = vector.broadcast %279 : vector<1x8xf32> to vector<8x8xf32>
    %281 = arith.addf %277, %280 : vector<8x8xf32>
    %c0_238 = arith.constant 0 : index
    %c2_239 = arith.constant 2 : index
    %c0_240 = arith.constant 0 : index
    %c0_241 = arith.constant 0 : index
    %c0_242 = arith.constant 0 : index
    %282 = vector.load %arg10[%c0_238, %c2_239, %c0_240, %c0_241, %c0_242] : memref<1x3x4x32x8xbf16, #tpu.memory_space<vmem>>, vector<1x1x1x32x8xbf16>
    %283 = vector.shape_cast %282 : vector<1x1x1x32x8xbf16> to vector<32x8xbf16>
    %cst_243 = arith.constant dense<0.000000e+00> : vector<8x8xf32>
    %284 = tpu.matmul %266, %283, %cst_243 {dimension_numbers = #tpu.dot_dimension_numbers<[1], [0], [0], [1], [0, 0, 1, 1], [], []>} : vector<8x32xbf16>, vector<32x8xbf16>, vector<8x8xf32> -> vector<8x8xf32>
    %c0_244 = arith.constant 0 : index
    %c2_245 = arith.constant 2 : index
    %c0_246 = arith.constant 0 : index
    %c0_247 = arith.constant 0 : index
    %c0_248 = arith.constant 0 : index
    %285 = vector.load %arg11[%c0_244, %c2_245, %c0_246, %c0_247, %c0_248] : memref<1x3x4x1x8xf32, #tpu.memory_space<vmem>>, vector<1x1x1x1x8xf32>
    %286 = vector.shape_cast %285 : vector<1x1x1x1x8xf32> to vector<1x8xf32>
    %287 = vector.broadcast %286 : vector<1x8xf32> to vector<8x8xf32>
    %288 = arith.addf %284, %287 : vector<8x8xf32>
    %289 = arith.truncf %274 : vector<8x8xf32> to vector<8x8xbf16>
    %290 = arith.truncf %281 : vector<8x8xf32> to vector<8x8xbf16>
    %cst_249 = arith.constant dense<0.000000e+00> : vector<8x8xf32>
    %291 = tpu.matmul %289, %290, %cst_249 {dimension_numbers = #tpu.dot_dimension_numbers<[1], [1], [0], [0], [0, 0, 1, 0], [], []>} : vector<8x8xbf16>, vector<8x8xbf16>, vector<8x8xf32> -> vector<8x8xf32>
    %cst_250 = arith.constant 0.353553385 : f32
    %292 = vector.broadcast %cst_250 : f32 to vector<8x8xf32>
    %293 = arith.mulf %291, %292 : vector<8x8xf32>
    %294 = vector.broadcast %21 : vector<1x8xf32> to vector<8x8xf32>
    %295 = arith.addf %293, %294 : vector<8x8xf32>
    %cst_251 = arith.constant dense<0xFF800000> : vector<8xf32>
    %296 = vector.multi_reduction <maximumf>, %295, %cst_251 [1] : vector<8x8xf32> to vector<8xf32>
    %297 = vector.shape_cast %296 : vector<8xf32> to vector<8x1xf32>
    %298 = vector.broadcast %297 : vector<8x1xf32> to vector<8x8xf32>
    %299 = arith.subf %295, %298 : vector<8x8xf32>
    %300 = math.exp %299 : vector<8x8xf32>
    %cst_252 = arith.constant dense<0.000000e+00> : vector<8xf32>
    %301 = vector.multi_reduction <add>, %300, %cst_252 [1] : vector<8x8xf32> to vector<8xf32>
    %302 = vector.shape_cast %301 : vector<8xf32> to vector<8x1xf32>
    %303 = tpu.reciprocal %302 : vector<8x1xf32> -> vector<8x1xf32>
    %304 = vector.broadcast %303 : vector<8x1xf32> to vector<8x8xf32>
    %305 = arith.mulf %300, %304 : vector<8x8xf32>
    %306 = arith.truncf %305 : vector<8x8xf32> to vector<8x8xbf16>
    %307 = arith.truncf %288 : vector<8x8xf32> to vector<8x8xbf16>
    %cst_253 = arith.constant dense<0.000000e+00> : vector<8x8xf32>
    %308 = tpu.matmul %306, %307, %cst_253 {dimension_numbers = #tpu.dot_dimension_numbers<[1], [0], [0], [1], [0, 0, 1, 1], [], []>} : vector<8x8xbf16>, vector<8x8xbf16>, vector<8x8xf32> -> vector<8x8xf32>
    %309 = arith.truncf %308 : vector<8x8xf32> to vector<8x8xbf16>
    %c0_254 = arith.constant 0 : index
    %c0_255 = arith.constant 0 : index
    %c0_256 = arith.constant 0 : index
    %c0_257 = arith.constant 0 : index
    %310 = vector.load %arg12[%c0_254, %c0_255, %c0_256, %c0_257] : memref<1x4x8x32xbf16, #tpu.memory_space<vmem>>, vector<1x1x8x32xbf16>
    %311 = vector.shape_cast %310 : vector<1x1x8x32xbf16> to vector<8x32xbf16>
    %cst_258 = arith.constant dense<0.000000e+00> : vector<8x32xf32>
    %312 = tpu.matmul %309, %311, %cst_258 {dimension_numbers = #tpu.dot_dimension_numbers<[1], [0], [0], [1], [0, 0, 1, 1], [], []>} : vector<8x8xbf16>, vector<8x32xbf16>, vector<8x32xf32> -> vector<8x32xf32>
    %313 = arith.addf %267, %312 : vector<8x32xf32>
    %c0_259 = arith.constant 0 : index
    %c0_260 = arith.constant 0 : index
    %c1_261 = arith.constant 1 : index
    %c0_262 = arith.constant 0 : index
    %c0_263 = arith.constant 0 : index
    %314 = vector.load %arg10[%c0_259, %c0_260, %c1_261, %c0_262, %c0_263] : memref<1x3x4x32x8xbf16, #tpu.memory_space<vmem>>, vector<1x1x1x32x8xbf16>
    %315 = vector.shape_cast %314 : vector<1x1x1x32x8xbf16> to vector<32x8xbf16>
    %cst_264 = arith.constant dense<0.000000e+00> : vector<8x8xf32>
    %316 = tpu.matmul %265, %315, %cst_264 {dimension_numbers = #tpu.dot_dimension_numbers<[1], [0], [0], [1], [0, 0, 1, 1], [], []>} : vector<8x32xbf16>, vector<32x8xbf16>, vector<8x8xf32> -> vector<8x8xf32>
    %c0_265 = arith.constant 0 : index
    %c0_266 = arith.constant 0 : index
    %c1_267 = arith.constant 1 : index
    %c0_268 = arith.constant 0 : index
    %c0_269 = arith.constant 0 : index
    %317 = vector.load %arg11[%c0_265, %c0_266, %c1_267, %c0_268, %c0_269] : memref<1x3x4x1x8xf32, #tpu.memory_space<vmem>>, vector<1x1x1x1x8xf32>
    %318 = vector.shape_cast %317 : vector<1x1x1x1x8xf32> to vector<1x8xf32>
    %319 = vector.broadcast %318 : vector<1x8xf32> to vector<8x8xf32>
    %320 = arith.addf %316, %319 : vector<8x8xf32>
    %c0_270 = arith.constant 0 : index
    %c1_271 = arith.constant 1 : index
    %c1_272 = arith.constant 1 : index
    %c0_273 = arith.constant 0 : index
    %c0_274 = arith.constant 0 : index
    %321 = vector.load %arg10[%c0_270, %c1_271, %c1_272, %c0_273, %c0_274] : memref<1x3x4x32x8xbf16, #tpu.memory_space<vmem>>, vector<1x1x1x32x8xbf16>
    %322 = vector.shape_cast %321 : vector<1x1x1x32x8xbf16> to vector<32x8xbf16>
    %cst_275 = arith.constant dense<0.000000e+00> : vector<8x8xf32>
    %323 = tpu.matmul %266, %322, %cst_275 {dimension_numbers = #tpu.dot_dimension_numbers<[1], [0], [0], [1], [0, 0, 1, 1], [], []>} : vector<8x32xbf16>, vector<32x8xbf16>, vector<8x8xf32> -> vector<8x8xf32>
    %c0_276 = arith.constant 0 : index
    %c1_277 = arith.constant 1 : index
    %c1_278 = arith.constant 1 : index
    %c0_279 = arith.constant 0 : index
    %c0_280 = arith.constant 0 : index
    %324 = vector.load %arg11[%c0_276, %c1_277, %c1_278, %c0_279, %c0_280] : memref<1x3x4x1x8xf32, #tpu.memory_space<vmem>>, vector<1x1x1x1x8xf32>
    %325 = vector.shape_cast %324 : vector<1x1x1x1x8xf32> to vector<1x8xf32>
    %326 = vector.broadcast %325 : vector<1x8xf32> to vector<8x8xf32>
    %327 = arith.addf %323, %326 : vector<8x8xf32>
    %c0_281 = arith.constant 0 : index
    %c2_282 = arith.constant 2 : index
    %c1_283 = arith.constant 1 : index
    %c0_284 = arith.constant 0 : index
    %c0_285 = arith.constant 0 : index
    %328 = vector.load %arg10[%c0_281, %c2_282, %c1_283, %c0_284, %c0_285] : memref<1x3x4x32x8xbf16, #tpu.memory_space<vmem>>, vector<1x1x1x32x8xbf16>
    %329 = vector.shape_cast %328 : vector<1x1x1x32x8xbf16> to vector<32x8xbf16>
    %cst_286 = arith.constant dense<0.000000e+00> : vector<8x8xf32>
    %330 = tpu.matmul %266, %329, %cst_286 {dimension_numbers = #tpu.dot_dimension_numbers<[1], [0], [0], [1], [0, 0, 1, 1], [], []>} : vector<8x32xbf16>, vector<32x8xbf16>, vector<8x8xf32> -> vector<8x8xf32>
    %c0_287 = arith.constant 0 : index
    %c2_288 = arith.constant 2 : index
    %c1_289 = arith.constant 1 : index
    %c0_290 = arith.constant 0 : index
    %c0_291 = arith.constant 0 : index
    %331 = vector.load %arg11[%c0_287, %c2_288, %c1_289, %c0_290, %c0_291] : memref<1x3x4x1x8xf32, #tpu.memory_space<vmem>>, vector<1x1x1x1x8xf32>
    %332 = vector.shape_cast %331 : vector<1x1x1x1x8xf32> to vector<1x8xf32>
    %333 = vector.broadcast %332 : vector<1x8xf32> to vector<8x8xf32>
    %334 = arith.addf %330, %333 : vector<8x8xf32>
    %335 = arith.truncf %320 : vector<8x8xf32> to vector<8x8xbf16>
    %336 = arith.truncf %327 : vector<8x8xf32> to vector<8x8xbf16>
    %cst_292 = arith.constant dense<0.000000e+00> : vector<8x8xf32>
    %337 = tpu.matmul %335, %336, %cst_292 {dimension_numbers = #tpu.dot_dimension_numbers<[1], [1], [0], [0], [0, 0, 1, 0], [], []>} : vector<8x8xbf16>, vector<8x8xbf16>, vector<8x8xf32> -> vector<8x8xf32>
    %cst_293 = arith.constant 0.353553385 : f32
    %338 = vector.broadcast %cst_293 : f32 to vector<8x8xf32>
    %339 = arith.mulf %337, %338 : vector<8x8xf32>
    %340 = vector.broadcast %21 : vector<1x8xf32> to vector<8x8xf32>
    %341 = arith.addf %339, %340 : vector<8x8xf32>
    %cst_294 = arith.constant dense<0xFF800000> : vector<8xf32>
    %342 = vector.multi_reduction <maximumf>, %341, %cst_294 [1] : vector<8x8xf32> to vector<8xf32>
    %343 = vector.shape_cast %342 : vector<8xf32> to vector<8x1xf32>
    %344 = vector.broadcast %343 : vector<8x1xf32> to vector<8x8xf32>
    %345 = arith.subf %341, %344 : vector<8x8xf32>
    %346 = math.exp %345 : vector<8x8xf32>
    %cst_295 = arith.constant dense<0.000000e+00> : vector<8xf32>
    %347 = vector.multi_reduction <add>, %346, %cst_295 [1] : vector<8x8xf32> to vector<8xf32>
    %348 = vector.shape_cast %347 : vector<8xf32> to vector<8x1xf32>
    %349 = tpu.reciprocal %348 : vector<8x1xf32> -> vector<8x1xf32>
    %350 = vector.broadcast %349 : vector<8x1xf32> to vector<8x8xf32>
    %351 = arith.mulf %346, %350 : vector<8x8xf32>
    %352 = arith.truncf %351 : vector<8x8xf32> to vector<8x8xbf16>
    %353 = arith.truncf %334 : vector<8x8xf32> to vector<8x8xbf16>
    %cst_296 = arith.constant dense<0.000000e+00> : vector<8x8xf32>
    %354 = tpu.matmul %352, %353, %cst_296 {dimension_numbers = #tpu.dot_dimension_numbers<[1], [0], [0], [1], [0, 0, 1, 1], [], []>} : vector<8x8xbf16>, vector<8x8xbf16>, vector<8x8xf32> -> vector<8x8xf32>
    %355 = arith.truncf %354 : vector<8x8xf32> to vector<8x8xbf16>
    %c0_297 = arith.constant 0 : index
    %c1_298 = arith.constant 1 : index
    %c0_299 = arith.constant 0 : index
    %c0_300 = arith.constant 0 : index
    %356 = vector.load %arg12[%c0_297, %c1_298, %c0_299, %c0_300] : memref<1x4x8x32xbf16, #tpu.memory_space<vmem>>, vector<1x1x8x32xbf16>
    %357 = vector.shape_cast %356 : vector<1x1x8x32xbf16> to vector<8x32xbf16>
    %cst_301 = arith.constant dense<0.000000e+00> : vector<8x32xf32>
    %358 = tpu.matmul %355, %357, %cst_301 {dimension_numbers = #tpu.dot_dimension_numbers<[1], [0], [0], [1], [0, 0, 1, 1], [], []>} : vector<8x8xbf16>, vector<8x32xbf16>, vector<8x32xf32> -> vector<8x32xf32>
    %359 = arith.addf %313, %358 : vector<8x32xf32>
    %c0_302 = arith.constant 0 : index
    %c0_303 = arith.constant 0 : index
    %c2_304 = arith.constant 2 : index
    %c0_305 = arith.constant 0 : index
    %c0_306 = arith.constant 0 : index
    %360 = vector.load %arg10[%c0_302, %c0_303, %c2_304, %c0_305, %c0_306] : memref<1x3x4x32x8xbf16, #tpu.memory_space<vmem>>, vector<1x1x1x32x8xbf16>
    %361 = vector.shape_cast %360 : vector<1x1x1x32x8xbf16> to vector<32x8xbf16>
    %cst_307 = arith.constant dense<0.000000e+00> : vector<8x8xf32>
    %362 = tpu.matmul %265, %361, %cst_307 {dimension_numbers = #tpu.dot_dimension_numbers<[1], [0], [0], [1], [0, 0, 1, 1], [], []>} : vector<8x32xbf16>, vector<32x8xbf16>, vector<8x8xf32> -> vector<8x8xf32>
    %c0_308 = arith.constant 0 : index
    %c0_309 = arith.constant 0 : index
    %c2_310 = arith.constant 2 : index
    %c0_311 = arith.constant 0 : index
    %c0_312 = arith.constant 0 : index
    %363 = vector.load %arg11[%c0_308, %c0_309, %c2_310, %c0_311, %c0_312] : memref<1x3x4x1x8xf32, #tpu.memory_space<vmem>>, vector<1x1x1x1x8xf32>
    %364 = vector.shape_cast %363 : vector<1x1x1x1x8xf32> to vector<1x8xf32>
    %365 = vector.broadcast %364 : vector<1x8xf32> to vector<8x8xf32>
    %366 = arith.addf %362, %365 : vector<8x8xf32>
    %c0_313 = arith.constant 0 : index
    %c1_314 = arith.constant 1 : index
    %c2_315 = arith.constant 2 : index
    %c0_316 = arith.constant 0 : index
    %c0_317 = arith.constant 0 : index
    %367 = vector.load %arg10[%c0_313, %c1_314, %c2_315, %c0_316, %c0_317] : memref<1x3x4x32x8xbf16, #tpu.memory_space<vmem>>, vector<1x1x1x32x8xbf16>
    %368 = vector.shape_cast %367 : vector<1x1x1x32x8xbf16> to vector<32x8xbf16>
    %cst_318 = arith.constant dense<0.000000e+00> : vector<8x8xf32>
    %369 = tpu.matmul %266, %368, %cst_318 {dimension_numbers = #tpu.dot_dimension_numbers<[1], [0], [0], [1], [0, 0, 1, 1], [], []>} : vector<8x32xbf16>, vector<32x8xbf16>, vector<8x8xf32> -> vector<8x8xf32>
    %c0_319 = arith.constant 0 : index
    %c1_320 = arith.constant 1 : index
    %c2_321 = arith.constant 2 : index
    %c0_322 = arith.constant 0 : index
    %c0_323 = arith.constant 0 : index
    %370 = vector.load %arg11[%c0_319, %c1_320, %c2_321, %c0_322, %c0_323] : memref<1x3x4x1x8xf32, #tpu.memory_space<vmem>>, vector<1x1x1x1x8xf32>
    %371 = vector.shape_cast %370 : vector<1x1x1x1x8xf32> to vector<1x8xf32>
    %372 = vector.broadcast %371 : vector<1x8xf32> to vector<8x8xf32>
    %373 = arith.addf %369, %372 : vector<8x8xf32>
    %c0_324 = arith.constant 0 : index
    %c2_325 = arith.constant 2 : index
    %c2_326 = arith.constant 2 : index
    %c0_327 = arith.constant 0 : index
    %c0_328 = arith.constant 0 : index
    %374 = vector.load %arg10[%c0_324, %c2_325, %c2_326, %c0_327, %c0_328] : memref<1x3x4x32x8xbf16, #tpu.memory_space<vmem>>, vector<1x1x1x32x8xbf16>
    %375 = vector.shape_cast %374 : vector<1x1x1x32x8xbf16> to vector<32x8xbf16>
    %cst_329 = arith.constant dense<0.000000e+00> : vector<8x8xf32>
    %376 = tpu.matmul %266, %375, %cst_329 {dimension_numbers = #tpu.dot_dimension_numbers<[1], [0], [0], [1], [0, 0, 1, 1], [], []>} : vector<8x32xbf16>, vector<32x8xbf16>, vector<8x8xf32> -> vector<8x8xf32>
    %c0_330 = arith.constant 0 : index
    %c2_331 = arith.constant 2 : index
    %c2_332 = arith.constant 2 : index
    %c0_333 = arith.constant 0 : index
    %c0_334 = arith.constant 0 : index
    %377 = vector.load %arg11[%c0_330, %c2_331, %c2_332, %c0_333, %c0_334] : memref<1x3x4x1x8xf32, #tpu.memory_space<vmem>>, vector<1x1x1x1x8xf32>
    %378 = vector.shape_cast %377 : vector<1x1x1x1x8xf32> to vector<1x8xf32>
    %379 = vector.broadcast %378 : vector<1x8xf32> to vector<8x8xf32>
    %380 = arith.addf %376, %379 : vector<8x8xf32>
    %381 = arith.truncf %366 : vector<8x8xf32> to vector<8x8xbf16>
    %382 = arith.truncf %373 : vector<8x8xf32> to vector<8x8xbf16>
    %cst_335 = arith.constant dense<0.000000e+00> : vector<8x8xf32>
    %383 = tpu.matmul %381, %382, %cst_335 {dimension_numbers = #tpu.dot_dimension_numbers<[1], [1], [0], [0], [0, 0, 1, 0], [], []>} : vector<8x8xbf16>, vector<8x8xbf16>, vector<8x8xf32> -> vector<8x8xf32>
    %cst_336 = arith.constant 0.353553385 : f32
    %384 = vector.broadcast %cst_336 : f32 to vector<8x8xf32>
    %385 = arith.mulf %383, %384 : vector<8x8xf32>
    %386 = vector.broadcast %21 : vector<1x8xf32> to vector<8x8xf32>
    %387 = arith.addf %385, %386 : vector<8x8xf32>
    %cst_337 = arith.constant dense<0xFF800000> : vector<8xf32>
    %388 = vector.multi_reduction <maximumf>, %387, %cst_337 [1] : vector<8x8xf32> to vector<8xf32>
    %389 = vector.shape_cast %388 : vector<8xf32> to vector<8x1xf32>
    %390 = vector.broadcast %389 : vector<8x1xf32> to vector<8x8xf32>
    %391 = arith.subf %387, %390 : vector<8x8xf32>
    %392 = math.exp %391 : vector<8x8xf32>
    %cst_338 = arith.constant dense<0.000000e+00> : vector<8xf32>
    %393 = vector.multi_reduction <add>, %392, %cst_338 [1] : vector<8x8xf32> to vector<8xf32>
    %394 = vector.shape_cast %393 : vector<8xf32> to vector<8x1xf32>
    %395 = tpu.reciprocal %394 : vector<8x1xf32> -> vector<8x1xf32>
    %396 = vector.broadcast %395 : vector<8x1xf32> to vector<8x8xf32>
    %397 = arith.mulf %392, %396 : vector<8x8xf32>
    %398 = arith.truncf %397 : vector<8x8xf32> to vector<8x8xbf16>
    %399 = arith.truncf %380 : vector<8x8xf32> to vector<8x8xbf16>
    %cst_339 = arith.constant dense<0.000000e+00> : vector<8x8xf32>
    %400 = tpu.matmul %398, %399, %cst_339 {dimension_numbers = #tpu.dot_dimension_numbers<[1], [0], [0], [1], [0, 0, 1, 1], [], []>} : vector<8x8xbf16>, vector<8x8xbf16>, vector<8x8xf32> -> vector<8x8xf32>
    %401 = arith.truncf %400 : vector<8x8xf32> to vector<8x8xbf16>
    %c0_340 = arith.constant 0 : index
    %c2_341 = arith.constant 2 : index
    %c0_342 = arith.constant 0 : index
    %c0_343 = arith.constant 0 : index
    %402 = vector.load %arg12[%c0_340, %c2_341, %c0_342, %c0_343] : memref<1x4x8x32xbf16, #tpu.memory_space<vmem>>, vector<1x1x8x32xbf16>
    %403 = vector.shape_cast %402 : vector<1x1x8x32xbf16> to vector<8x32xbf16>
    %cst_344 = arith.constant dense<0.000000e+00> : vector<8x32xf32>
    %404 = tpu.matmul %401, %403, %cst_344 {dimension_numbers = #tpu.dot_dimension_numbers<[1], [0], [0], [1], [0, 0, 1, 1], [], []>} : vector<8x8xbf16>, vector<8x32xbf16>, vector<8x32xf32> -> vector<8x32xf32>
    %405 = arith.addf %359, %404 : vector<8x32xf32>
    %c0_345 = arith.constant 0 : index
    %c0_346 = arith.constant 0 : index
    %c3_347 = arith.constant 3 : index
    %c0_348 = arith.constant 0 : index
    %c0_349 = arith.constant 0 : index
    %406 = vector.load %arg10[%c0_345, %c0_346, %c3_347, %c0_348, %c0_349] : memref<1x3x4x32x8xbf16, #tpu.memory_space<vmem>>, vector<1x1x1x32x8xbf16>
    %407 = vector.shape_cast %406 : vector<1x1x1x32x8xbf16> to vector<32x8xbf16>
    %cst_350 = arith.constant dense<0.000000e+00> : vector<8x8xf32>
    %408 = tpu.matmul %265, %407, %cst_350 {dimension_numbers = #tpu.dot_dimension_numbers<[1], [0], [0], [1], [0, 0, 1, 1], [], []>} : vector<8x32xbf16>, vector<32x8xbf16>, vector<8x8xf32> -> vector<8x8xf32>
    %c0_351 = arith.constant 0 : index
    %c0_352 = arith.constant 0 : index
    %c3_353 = arith.constant 3 : index
    %c0_354 = arith.constant 0 : index
    %c0_355 = arith.constant 0 : index
    %409 = vector.load %arg11[%c0_351, %c0_352, %c3_353, %c0_354, %c0_355] : memref<1x3x4x1x8xf32, #tpu.memory_space<vmem>>, vector<1x1x1x1x8xf32>
    %410 = vector.shape_cast %409 : vector<1x1x1x1x8xf32> to vector<1x8xf32>
    %411 = vector.broadcast %410 : vector<1x8xf32> to vector<8x8xf32>
    %412 = arith.addf %408, %411 : vector<8x8xf32>
    %c0_356 = arith.constant 0 : index
    %c1_357 = arith.constant 1 : index
    %c3_358 = arith.constant 3 : index
    %c0_359 = arith.constant 0 : index
    %c0_360 = arith.constant 0 : index
    %413 = vector.load %arg10[%c0_356, %c1_357, %c3_358, %c0_359, %c0_360] : memref<1x3x4x32x8xbf16, #tpu.memory_space<vmem>>, vector<1x1x1x32x8xbf16>
    %414 = vector.shape_cast %413 : vector<1x1x1x32x8xbf16> to vector<32x8xbf16>
    %cst_361 = arith.constant dense<0.000000e+00> : vector<8x8xf32>
    %415 = tpu.matmul %266, %414, %cst_361 {dimension_numbers = #tpu.dot_dimension_numbers<[1], [0], [0], [1], [0, 0, 1, 1], [], []>} : vector<8x32xbf16>, vector<32x8xbf16>, vector<8x8xf32> -> vector<8x8xf32>
    %c0_362 = arith.constant 0 : index
    %c1_363 = arith.constant 1 : index
    %c3_364 = arith.constant 3 : index
    %c0_365 = arith.constant 0 : index
    %c0_366 = arith.constant 0 : index
    %416 = vector.load %arg11[%c0_362, %c1_363, %c3_364, %c0_365, %c0_366] : memref<1x3x4x1x8xf32, #tpu.memory_space<vmem>>, vector<1x1x1x1x8xf32>
    %417 = vector.shape_cast %416 : vector<1x1x1x1x8xf32> to vector<1x8xf32>
    %418 = vector.broadcast %417 : vector<1x8xf32> to vector<8x8xf32>
    %419 = arith.addf %415, %418 : vector<8x8xf32>
    %c0_367 = arith.constant 0 : index
    %c2_368 = arith.constant 2 : index
    %c3_369 = arith.constant 3 : index
    %c0_370 = arith.constant 0 : index
    %c0_371 = arith.constant 0 : index
    %420 = vector.load %arg10[%c0_367, %c2_368, %c3_369, %c0_370, %c0_371] : memref<1x3x4x32x8xbf16, #tpu.memory_space<vmem>>, vector<1x1x1x32x8xbf16>
    %421 = vector.shape_cast %420 : vector<1x1x1x32x8xbf16> to vector<32x8xbf16>
    %cst_372 = arith.constant dense<0.000000e+00> : vector<8x8xf32>
    %422 = tpu.matmul %266, %421, %cst_372 {dimension_numbers = #tpu.dot_dimension_numbers<[1], [0], [0], [1], [0, 0, 1, 1], [], []>} : vector<8x32xbf16>, vector<32x8xbf16>, vector<8x8xf32> -> vector<8x8xf32>
    %c0_373 = arith.constant 0 : index
    %c2_374 = arith.constant 2 : index
    %c3_375 = arith.constant 3 : index
    %c0_376 = arith.constant 0 : index
    %c0_377 = arith.constant 0 : index
    %423 = vector.load %arg11[%c0_373, %c2_374, %c3_375, %c0_376, %c0_377] : memref<1x3x4x1x8xf32, #tpu.memory_space<vmem>>, vector<1x1x1x1x8xf32>
    %424 = vector.shape_cast %423 : vector<1x1x1x1x8xf32> to vector<1x8xf32>
    %425 = vector.broadcast %424 : vector<1x8xf32> to vector<8x8xf32>
    %426 = arith.addf %422, %425 : vector<8x8xf32>
    %427 = arith.truncf %412 : vector<8x8xf32> to vector<8x8xbf16>
    %428 = arith.truncf %419 : vector<8x8xf32> to vector<8x8xbf16>
    %cst_378 = arith.constant dense<0.000000e+00> : vector<8x8xf32>
    %429 = tpu.matmul %427, %428, %cst_378 {dimension_numbers = #tpu.dot_dimension_numbers<[1], [1], [0], [0], [0, 0, 1, 0], [], []>} : vector<8x8xbf16>, vector<8x8xbf16>, vector<8x8xf32> -> vector<8x8xf32>
    %cst_379 = arith.constant 0.353553385 : f32
    %430 = vector.broadcast %cst_379 : f32 to vector<8x8xf32>
    %431 = arith.mulf %429, %430 : vector<8x8xf32>
    %432 = vector.broadcast %21 : vector<1x8xf32> to vector<8x8xf32>
    %433 = arith.addf %431, %432 : vector<8x8xf32>
    %cst_380 = arith.constant dense<0xFF800000> : vector<8xf32>
    %434 = vector.multi_reduction <maximumf>, %433, %cst_380 [1] : vector<8x8xf32> to vector<8xf32>
    %435 = vector.shape_cast %434 : vector<8xf32> to vector<8x1xf32>
    %436 = vector.broadcast %435 : vector<8x1xf32> to vector<8x8xf32>
    %437 = arith.subf %433, %436 : vector<8x8xf32>
    %438 = math.exp %437 : vector<8x8xf32>
    %cst_381 = arith.constant dense<0.000000e+00> : vector<8xf32>
    %439 = vector.multi_reduction <add>, %438, %cst_381 [1] : vector<8x8xf32> to vector<8xf32>
    %440 = vector.shape_cast %439 : vector<8xf32> to vector<8x1xf32>
    %441 = tpu.reciprocal %440 : vector<8x1xf32> -> vector<8x1xf32>
    %442 = vector.broadcast %441 : vector<8x1xf32> to vector<8x8xf32>
    %443 = arith.mulf %438, %442 : vector<8x8xf32>
    %444 = arith.truncf %443 : vector<8x8xf32> to vector<8x8xbf16>
    %445 = arith.truncf %426 : vector<8x8xf32> to vector<8x8xbf16>
    %cst_382 = arith.constant dense<0.000000e+00> : vector<8x8xf32>
    %446 = tpu.matmul %444, %445, %cst_382 {dimension_numbers = #tpu.dot_dimension_numbers<[1], [0], [0], [1], [0, 0, 1, 1], [], []>} : vector<8x8xbf16>, vector<8x8xbf16>, vector<8x8xf32> -> vector<8x8xf32>
    %447 = arith.truncf %446 : vector<8x8xf32> to vector<8x8xbf16>
    %c0_383 = arith.constant 0 : index
    %c3_384 = arith.constant 3 : index
    %c0_385 = arith.constant 0 : index
    %c0_386 = arith.constant 0 : index
    %448 = vector.load %arg12[%c0_383, %c3_384, %c0_385, %c0_386] : memref<1x4x8x32xbf16, #tpu.memory_space<vmem>>, vector<1x1x8x32xbf16>
    %449 = vector.shape_cast %448 : vector<1x1x8x32xbf16> to vector<8x32xbf16>
    %cst_387 = arith.constant dense<0.000000e+00> : vector<8x32xf32>
    %450 = tpu.matmul %447, %449, %cst_387 {dimension_numbers = #tpu.dot_dimension_numbers<[1], [0], [0], [1], [0, 0, 1, 1], [], []>} : vector<8x8xbf16>, vector<8x32xbf16>, vector<8x32xf32> -> vector<8x32xf32>
    %451 = arith.addf %405, %450 : vector<8x32xf32>
    %452 = arith.addf %236, %451 : vector<8x32xf32>
    %c0_388 = arith.constant 0 : index
    %c0_389 = arith.constant 0 : index
    %c0_390 = arith.constant 0 : index
    %453 = vector.load %arg13[%c0_388, %c0_389, %c0_390] : memref<1x1x32xf32, #tpu.memory_space<vmem>>, vector<1x1x32xf32>
    %454 = vector.shape_cast %453 : vector<1x1x32xf32> to vector<1x32xf32>
    %455 = vector.broadcast %454 : vector<1x32xf32> to vector<8x32xf32>
    %456 = arith.addf %452, %455 : vector<8x32xf32>
    %c0_391 = arith.constant 0 : index
    %c2_392 = arith.constant 2 : index
    %c0_393 = arith.constant 0 : index
    %c0_394 = arith.constant 0 : index
    %457 = vector.load %arg18[%c0_391, %c2_392, %c0_393, %c0_394] : memref<1x3x1x32xf32, #tpu.memory_space<vmem>>, vector<1x1x1x32xf32>
    %458 = vector.shape_cast %457 : vector<1x1x1x32xf32> to vector<1x32xf32>
    %c0_395 = arith.constant 0 : index
    %c2_396 = arith.constant 2 : index
    %c0_397 = arith.constant 0 : index
    %c0_398 = arith.constant 0 : index
    %459 = vector.load %arg19[%c0_395, %c2_396, %c0_397, %c0_398] : memref<1x3x1x32xf32, #tpu.memory_space<vmem>>, vector<1x1x1x32xf32>
    %460 = vector.shape_cast %459 : vector<1x1x1x32xf32> to vector<1x32xf32>
    %cst_399 = arith.constant dense<0.000000e+00> : vector<8xf32>
    %461 = vector.multi_reduction <add>, %456, %cst_399 [1] : vector<8x32xf32> to vector<8xf32>
    %462 = vector.shape_cast %461 : vector<8xf32> to vector<8x1xf32>
    %cst_400 = arith.constant 3.200000e+01 : f32
    %463 = vector.broadcast %cst_400 : f32 to vector<8x1xf32>
    %464 = arith.divf %462, %463 : vector<8x1xf32>
    %465 = vector.broadcast %464 : vector<8x1xf32> to vector<8x32xf32>
    %466 = arith.subf %456, %465 : vector<8x32xf32>
    %467 = arith.mulf %466, %466 : vector<8x32xf32>
    %cst_401 = arith.constant dense<0.000000e+00> : vector<8xf32>
    %468 = vector.multi_reduction <add>, %467, %cst_401 [1] : vector<8x32xf32> to vector<8xf32>
    %469 = vector.shape_cast %468 : vector<8xf32> to vector<8x1xf32>
    %cst_402 = arith.constant 3.200000e+01 : f32
    %470 = vector.broadcast %cst_402 : f32 to vector<8x1xf32>
    %471 = arith.divf %469, %470 : vector<8x1xf32>
    %472 = vector.broadcast %464 : vector<8x1xf32> to vector<8x32xf32>
    %473 = arith.subf %456, %472 : vector<8x32xf32>
    %cst_403 = arith.constant 9.99999997E-7 : f32
    %474 = vector.broadcast %cst_403 : f32 to vector<8x1xf32>
    %475 = arith.addf %471, %474 : vector<8x1xf32>
    %476 = math.rsqrt %475 : vector<8x1xf32>
    %477 = vector.broadcast %476 : vector<8x1xf32> to vector<8x32xf32>
    %478 = arith.mulf %473, %477 : vector<8x32xf32>
    %479 = vector.broadcast %458 : vector<1x32xf32> to vector<8x32xf32>
    %480 = arith.mulf %478, %479 : vector<8x32xf32>
    %481 = vector.broadcast %460 : vector<1x32xf32> to vector<8x32xf32>
    %482 = arith.addf %480, %481 : vector<8x32xf32>
    %483 = arith.truncf %482 : vector<8x32xf32> to vector<8x32xbf16>
    %c0_404 = arith.constant 0 : index
    %c0_405 = arith.constant 0 : index
    %c0_406 = arith.constant 0 : index
    %484 = vector.load %arg14[%c0_404, %c0_405, %c0_406] : memref<1x32x64xbf16, #tpu.memory_space<vmem>>, vector<1x32x64xbf16>
    %485 = vector.shape_cast %484 : vector<1x32x64xbf16> to vector<32x64xbf16>
    %cst_407 = arith.constant dense<0.000000e+00> : vector<8x64xf32>
    %486 = tpu.matmul %483, %485, %cst_407 {dimension_numbers = #tpu.dot_dimension_numbers<[1], [0], [0], [1], [0, 0, 1, 1], [], []>} : vector<8x32xbf16>, vector<32x64xbf16>, vector<8x64xf32> -> vector<8x64xf32>
    %c0_408 = arith.constant 0 : index
    %c0_409 = arith.constant 0 : index
    %c0_410 = arith.constant 0 : index
    %487 = vector.load %arg15[%c0_408, %c0_409, %c0_410] : memref<1x1x64xf32, #tpu.memory_space<vmem>>, vector<1x1x64xf32>
    %488 = vector.shape_cast %487 : vector<1x1x64xf32> to vector<1x64xf32>
    %489 = vector.broadcast %488 : vector<1x64xf32> to vector<8x64xf32>
    %490 = arith.addf %486, %489 : vector<8x64xf32>
    %cst_411 = arith.constant 0.000000e+00 : f32
    %491 = vector.broadcast %cst_411 : f32 to vector<8x64xf32>
    %492 = arith.maximumf %490, %491 : vector<8x64xf32>
    %493 = arith.truncf %492 : vector<8x64xf32> to vector<8x64xbf16>
    %c0_412 = arith.constant 0 : index
    %c0_413 = arith.constant 0 : index
    %c0_414 = arith.constant 0 : index
    %494 = vector.load %arg16[%c0_412, %c0_413, %c0_414] : memref<1x64x32xbf16, #tpu.memory_space<vmem>>, vector<1x64x32xbf16>
    %495 = vector.shape_cast %494 : vector<1x64x32xbf16> to vector<64x32xbf16>
    %cst_415 = arith.constant dense<0.000000e+00> : vector<8x32xf32>
    %496 = tpu.matmul %493, %495, %cst_415 {dimension_numbers = #tpu.dot_dimension_numbers<[1], [0], [0], [1], [0, 0, 1, 1], [], []>} : vector<8x64xbf16>, vector<64x32xbf16>, vector<8x32xf32> -> vector<8x32xf32>
    %497 = arith.addf %456, %496 : vector<8x32xf32>
    %c0_416 = arith.constant 0 : index
    %c0_417 = arith.constant 0 : index
    %c0_418 = arith.constant 0 : index
    %498 = vector.load %arg17[%c0_416, %c0_417, %c0_418] : memref<1x1x32xf32, #tpu.memory_space<vmem>>, vector<1x1x32xf32>
    %499 = vector.shape_cast %498 : vector<1x1x32xf32> to vector<1x32xf32>
    %500 = vector.broadcast %499 : vector<1x32xf32> to vector<8x32xf32>
    %501 = arith.addf %497, %500 : vector<8x32xf32>
    %c0_419 = arith.constant 0 : index
    %c0_420 = arith.constant 0 : index
    %502 = vector.load %arg23[%c0_419, %c0_420] : memref<8x32xf32, #tpu.memory_space<vmem>>, vector<8x32xf32>
    tpu.vector_store %arg23[%c0_419, %c0_420], %501 {strides = array<i32>} : memref<8x32xf32, #tpu.memory_space<vmem>>, vector<8x32xf32>,
    %c1_i32 = arith.constant 1 : i32
    %503 = arith.cmpi eq, %arg1, %c1_i32 : i32
    %504 = arith.extui %503 : i1 to i32
    %c0_i32_421 = arith.constant 0 : i32
    %505 = arith.cmpi ne, %504, %c0_i32_421 : i32
    scf.if %505 {
      %c0_422 = arith.constant 0 : index
      %c0_423 = arith.constant 0 : index
      %506 = vector.load %arg20[%c0_422, %c0_423] : memref<1x32xf32, #tpu.memory_space<vmem>>, vector<1x32xf32>
      %c0_424 = arith.constant 0 : index
      %c0_425 = arith.constant 0 : index
      %507 = vector.load %arg21[%c0_424, %c0_425] : memref<1x32xf32, #tpu.memory_space<vmem>>, vector<1x32xf32>
      %cst_426 = arith.constant dense<0.000000e+00> : vector<8xf32>
      %508 = vector.multi_reduction <add>, %501, %cst_426 [1] : vector<8x32xf32> to vector<8xf32>
      %509 = vector.shape_cast %508 : vector<8xf32> to vector<8x1xf32>
      %cst_427 = arith.constant 3.200000e+01 : f32
      %510 = vector.broadcast %cst_427 : f32 to vector<8x1xf32>
      %511 = arith.divf %509, %510 : vector<8x1xf32>
      %512 = vector.broadcast %511 : vector<8x1xf32> to vector<8x32xf32>
      %513 = arith.subf %501, %512 : vector<8x32xf32>
      %514 = arith.mulf %513, %513 : vector<8x32xf32>
      %cst_428 = arith.constant dense<0.000000e+00> : vector<8xf32>
      %515 = vector.multi_reduction <add>, %514, %cst_428 [1] : vector<8x32xf32> to vector<8xf32>
      %516 = vector.shape_cast %515 : vector<8xf32> to vector<8x1xf32>
      %cst_429 = arith.constant 3.200000e+01 : f32
      %517 = vector.broadcast %cst_429 : f32 to vector<8x1xf32>
      %518 = arith.divf %516, %517 : vector<8x1xf32>
      %519 = vector.broadcast %511 : vector<8x1xf32> to vector<8x32xf32>
      %520 = arith.subf %501, %519 : vector<8x32xf32>
      %cst_430 = arith.constant 9.99999997E-7 : f32
      %521 = vector.broadcast %cst_430 : f32 to vector<8x1xf32>
      %522 = arith.addf %518, %521 : vector<8x1xf32>
      %523 = math.rsqrt %522 : vector<8x1xf32>
      %524 = vector.broadcast %523 : vector<8x1xf32> to vector<8x32xf32>
      %525 = arith.mulf %520, %524 : vector<8x32xf32>
      %526 = vector.broadcast %506 : vector<1x32xf32> to vector<8x32xf32>
      %527 = arith.mulf %525, %526 : vector<8x32xf32>
      %528 = vector.broadcast %507 : vector<1x32xf32> to vector<8x32xf32>
      %529 = arith.addf %527, %528 : vector<8x32xf32>
      %c0_431 = arith.constant 0 : index
      %c0_432 = arith.constant 0 : index
      %c0_433 = arith.constant 0 : index
      %530 = vector.load %arg22[%c0_431, %c0_432, %c0_433] : memref<1x8x32xf32, #tpu.memory_space<vmem>>, vector<1x8x32xf32>
      %531 = vector.shape_cast %530 : vector<1x8x32xf32> to vector<8x32xf32>
      %532 = vector.shape_cast %529 : vector<8x32xf32> to vector<1x8x32xf32>
      tpu.vector_store %arg22[%c0_431, %c0_432, %c0_433], %532 {strides = array<i32>} : memref<1x8x32xf32, #tpu.memory_space<vmem>>, vector<1x8x32xf32>,
    } else {
    }
    return
  }
  func.func @transform_0(%arg0: i32, %arg1: i32) -> (i32, i32, i32) {
    %c0_i32 = arith.constant 0 : i32
    %c0_i32_0 = arith.constant 0 : i32
    %c0_i32_1 = arith.constant 0 : i32
    return %arg0, %c0_i32, %c0_i32_0 : i32, i32, i32
  }
  func.func @transform_1(%arg0: i32, %arg1: i32) -> (i32, i32, i32) {
    %c0_i32 = arith.constant 0 : i32
    %c0_i32_0 = arith.constant 0 : i32
    %c0_i32_1 = arith.constant 0 : i32
    return %arg0, %c0_i32, %c0_i32_0 : i32, i32, i32
  }
  func.func @transform_2(%arg0: i32, %arg1: i32) -> (i32, i32, i32) {
    %c0_i32 = arith.constant 0 : i32
    %c0_i32_0 = arith.constant 0 : i32
    %c0_i32_1 = arith.constant 0 : i32
    return %arg0, %c0_i32, %c0_i32_0 : i32, i32, i32
  }
  func.func @transform_3(%arg0: i32, %arg1: i32) -> (i32, i32, i32) {
    %c0_i32 = arith.constant 0 : i32
    %c0_i32_0 = arith.constant 0 : i32
    %c0_i32_1 = arith.constant 0 : i32
    return %arg0, %c0_i32, %c0_i32_0 : i32, i32, i32
  }
  func.func @transform_4(%arg0: i32, %arg1: i32) -> (i32, i32, i32, i32, i32) {
    %c0_i32 = arith.constant 0 : i32
    %c0_i32_0 = arith.constant 0 : i32
    %c0_i32_1 = arith.constant 0 : i32
    %c0_i32_2 = arith.constant 0 : i32
    %c0_i32_3 = arith.constant 0 : i32
    return %arg1, %c0_i32, %c0_i32_0, %c0_i32_1, %c0_i32_2 : i32, i32, i32, i32, i32
  }
  func.func @transform_5(%arg0: i32, %arg1: i32) -> (i32, i32, i32, i32, i32) {
    %c0_i32 = arith.constant 0 : i32
    %c0_i32_0 = arith.constant 0 : i32
    %c0_i32_1 = arith.constant 0 : i32
    %c0_i32_2 = arith.constant 0 : i32
    %c0_i32_3 = arith.constant 0 : i32
    return %arg1, %c0_i32, %c0_i32_0, %c0_i32_1, %c0_i32_2 : i32, i32, i32, i32, i32
  }
  func.func @transform_6(%arg0: i32, %arg1: i32) -> (i32, i32, i32, i32) {
    %c0_i32 = arith.constant 0 : i32
    %c0_i32_0 = arith.constant 0 : i32
    %c0_i32_1 = arith.constant 0 : i32
    %c0_i32_2 = arith.constant 0 : i32
    return %arg1, %c0_i32, %c0_i32_0, %c0_i32_1 : i32, i32, i32, i32
  }
  func.func @transform_7(%arg0: i32, %arg1: i32) -> (i32, i32, i32) {
    %c0_i32 = arith.constant 0 : i32
    %c0_i32_0 = arith.constant 0 : i32
    %c0_i32_1 = arith.constant 0 : i32
    return %arg1, %c0_i32, %c0_i32_0 : i32, i32, i32
  }
  func.func @transform_8(%arg0: i32, %arg1: i32) -> (i32, i32, i32, i32, i32) {
    %c0_i32 = arith.constant 0 : i32
    %c0_i32_0 = arith.constant 0 : i32
    %c0_i32_1 = arith.constant 0 : i32
    %c0_i32_2 = arith.constant 0 : i32
    %c0_i32_3 = arith.constant 0 : i32
    return %arg1, %c0_i32, %c0_i32_0, %c0_i32_1, %c0_i32_2 : i32, i32, i32, i32, i32
  }
  func.func @transform_9(%arg0: i32, %arg1: i32) -> (i32, i32, i32, i32, i32) {
    %c0_i32 = arith.constant 0 : i32
    %c0_i32_0 = arith.constant 0 : i32
    %c0_i32_1 = arith.constant 0 : i32
    %c0_i32_2 = arith.constant 0 : i32
    %c0_i32_3 = arith.constant 0 : i32
    return %arg1, %c0_i32, %c0_i32_0, %c0_i32_1, %c0_i32_2 : i32, i32, i32, i32, i32
  }
  func.func @transform_10(%arg0: i32, %arg1: i32) -> (i32, i32, i32, i32) {
    %c0_i32 = arith.constant 0 : i32
    %c0_i32_0 = arith.constant 0 : i32
    %c0_i32_1 = arith.constant 0 : i32
    %c0_i32_2 = arith.constant 0 : i32
    return %arg1, %c0_i32, %c0_i32_0, %c0_i32_1 : i32, i32, i32, i32
  }
  func.func @transform_11(%arg0: i32, %arg1: i32) -> (i32, i32, i32) {
    %c0_i32 = arith.constant 0 : i32
    %c0_i32_0 = arith.constant 0 : i32
    %c0_i32_1 = arith.constant 0 : i32
    return %arg1, %c0_i32, %c0_i32_0 : i32, i32, i32
  }
  func.func @transform_12(%arg0: i32, %arg1: i32) -> (i32, i32, i32) {
    %c0_i32 = arith.constant 0 : i32
    %c0_i32_0 = arith.constant 0 : i32
    %c0_i32_1 = arith.constant 0 : i32
    return %arg1, %c0_i32, %c0_i32_0 : i32, i32, i32
  }
  func.func @transform_13(%arg0: i32, %arg1: i32) -> (i32, i32, i32) {
    %c0_i32 = arith.constant 0 : i32
    %c0_i32_0 = arith.constant 0 : i32
    %c0_i32_1 = arith.constant 0 : i32
    return %arg1, %c0_i32, %c0_i32_0 : i32, i32, i32
  }
  func.func @transform_14(%arg0: i32, %arg1: i32) -> (i32, i32, i32) {
    %c0_i32 = arith.constant 0 : i32
    %c0_i32_0 = arith.constant 0 : i32
    %c0_i32_1 = arith.constant 0 : i32
    return %arg1, %c0_i32, %c0_i32_0 : i32, i32, i32
  }
  func.func @transform_15(%arg0: i32, %arg1: i32) -> (i32, i32, i32) {
    %c0_i32 = arith.constant 0 : i32
    %c0_i32_0 = arith.constant 0 : i32
    %c0_i32_1 = arith.constant 0 : i32
    return %arg1, %c0_i32, %c0_i32_0 : i32, i32, i32
  }
  func.func @transform_16(%arg0: i32, %arg1: i32) -> (i32, i32, i32, i32) {
    %c0_i32 = arith.constant 0 : i32
    %c0_i32_0 = arith.constant 0 : i32
    %c0_i32_1 = arith.constant 0 : i32
    %c0_i32_2 = arith.constant 0 : i32
    return %arg1, %c0_i32, %c0_i32_0, %c0_i32_1 : i32, i32, i32, i32
  }
  func.func @transform_17(%arg0: i32, %arg1: i32) -> (i32, i32, i32, i32) {
    %c0_i32 = arith.constant 0 : i32
    %c0_i32_0 = arith.constant 0 : i32
    %c0_i32_1 = arith.constant 0 : i32
    %c0_i32_2 = arith.constant 0 : i32
    return %arg1, %c0_i32, %c0_i32_0, %c0_i32_1 : i32, i32, i32, i32
  }
  func.func @transform_18(%arg0: i32, %arg1: i32) -> (i32, i32) {
    %c0_i32 = arith.constant 0 : i32
    %c0_i32_0 = arith.constant 0 : i32
    %c0_i32_1 = arith.constant 0 : i32
    return %c0_i32, %c0_i32_0 : i32, i32
  }
  func.func @transform_19(%arg0: i32, %arg1: i32) -> (i32, i32) {
    %c0_i32 = arith.constant 0 : i32
    %c0_i32_0 = arith.constant 0 : i32
    %c0_i32_1 = arith.constant 0 : i32
    return %c0_i32, %c0_i32_0 : i32, i32
  }
  func.func @transform_20(%arg0: i32, %arg1: i32) -> (i32, i32, i32) {
    %c0_i32 = arith.constant 0 : i32
    %c0_i32_0 = arith.constant 0 : i32
    %c0_i32_1 = arith.constant 0 : i32
    return %arg0, %c0_i32, %c0_i32_0 : i32, i32, i32
  }
}

</mosaic_0001>

<llo_original>
// kernel: decoder_forward.1
$region0: #{decoder_forward.1}
  #allocation0 [shape = 'u32[]', space=smem, size = 0x4, offset = 0x4, fixed_abs, tag = 'smem constant byte address 0x4 - core index']
  #allocation1 [shape = 'u32[72,128]{1,0:T(1,128)}', space=vmem, size = 0x9000, scoped, tag = 'internal scratch']
  #allocation2 [shape = 'f32[8,32]{1,0:T(8,128)}', space=vmem, size = 0x1000, scoped, tag = 'scratch operand']
  %s0 = inlined_call_operand.vmem [shape: f32[2,8,32], index: 0, kind: input, shape index: {}]
  %s1 = inlined_call_operand.vmem [shape: f32[2,8,32], index: 1, kind: input, shape index: {}]
  %s2 = inlined_call_operand.vmem [shape: f32[2,1,8], index: 2, kind: input, shape index: {}]
  %s3 = inlined_call_operand.vmem [shape: f32[2,1,8], index: 3, kind: input, shape index: {}]
  %s4 = inlined_call_operand.vmem [shape: bf16[2,3,4,32,8], index: 4, kind: input, shape index: {}]
  %s5 = inlined_call_operand.vmem [shape: f32[2,3,4,1,8], index: 5, kind: input, shape index: {}]
  %s6 = inlined_call_operand.vmem [shape: bf16[2,4,8,32], index: 6, kind: input, shape index: {}]
  %s7 = inlined_call_operand.vmem [shape: f32[2,1,32], index: 7, kind: input, shape index: {}]
  %s8 = inlined_call_operand.vmem [shape: bf16[2,3,4,32,8], index: 8, kind: input, shape index: {}]
  %s9 = inlined_call_operand.vmem [shape: f32[2,3,4,1,8], index: 9, kind: input, shape index: {}]
  %s10 = inlined_call_operand.vmem [shape: bf16[2,4,8,32], index: 10, kind: input, shape index: {}]
  %s11 = inlined_call_operand.vmem [shape: f32[2,1,32], index: 11, kind: input, shape index: {}]
  %s12 = inlined_call_operand.vmem [shape: bf16[2,32,64], index: 12, kind: input, shape index: {}]
  %s13 = inlined_call_operand.vmem [shape: f32[2,1,64], index: 13, kind: input, shape index: {}]
  %s14 = inlined_call_operand.vmem [shape: bf16[2,64,32], index: 14, kind: input, shape index: {}]
  %s15 = inlined_call_operand.vmem [shape: f32[2,1,32], index: 15, kind: input, shape index: {}]
  %s16 = inlined_call_operand.vmem [shape: f32[2,3,1,32], index: 16, kind: input, shape index: {}]
  %s17 = inlined_call_operand.vmem [shape: f32[2,3,1,32], index: 17, kind: input, shape index: {}]
  %s18 = inlined_call_operand.vmem [shape: f32[1,32], index: 18, kind: input, shape index: {}]
  %s19 = inlined_call_operand.vmem [shape: f32[1,32], index: 19, kind: input, shape index: {}]
  %s20 = inlined_call_operand.hbm [shape: f32[2,8,32], index: 20, kind: output, shape index: {}]
  %s21 = sld [smem:[#allocation0]]
  $region121: #{decoder_forward.1} parent=0
    _
  %s23 = ssub.s32 1, %s21
  %s24 = scalar_select 0, %s23, %s21
  $region1: #{decoder_forward.1} parent=0
    #allocation3 [shape = 'u8[8192]{0}', space=vmem, size = 0x2000, scoped, tag = 'output window, operand 0']
    #allocation4 [shape = 's32[2]{0}', space=sflag, size = 0x8, scoped, tag = 'scoped memory for decoder_forward.1']
    %25 = vsyncpa [#allocation4], 0
    %s26 = scalar_lea.sflag [#allocation4], 1
    %27 = vsyncpa %s26, 0
    loop: start=0, step=1, limit=6
    $region2: #{decoder_forward.1} parent=1 // loop_pre_header
      _
    $region3: #{decoder_forward.1} parent=1 // loop_header
      %s29 = sphi 0, %s33
      %p30 = scmp.ge.s32.totalorder %s29, 6
      %s36 = sphi 0, %s48
      %s37 = sphi 0, %s44
      %s38 = sphi 0, %s36
      %s39 = sphi 0, %s37
      %s40 = sphi 0, %s38
      %s41 = sphi 0, %s39
      %s51 = sphi 0, %s53
      %s54 = sphi 0, %s51
      %s55 = sphi 0, %s54
      %s71 = sphi 0, %s55
      %s77 = sphi 0, %s79
      %s80 = sphi 0, %s77
      %s81 = sphi 0, %s80
      %s97 = sphi 0, %s81
      %s103 = sphi 0, %s105
      %s106 = sphi 0, %s103
      %s107 = sphi 0, %s106
      %s123 = sphi 0, %s107
      %s129 = sphi 0, %s131
      %s132 = sphi 0, %s129
      %s133 = sphi 0, %s132
      %s149 = sphi 0, %s133
      %s155 = sphi 0, %s157
      %s158 = sphi 0, %s155
      %s159 = sphi 0, %s158
      %s175 = sphi 0, %s159
      %s181 = sphi 0, %s183
      %s184 = sphi 0, %s181
      %s185 = sphi 0, %s184
      %s201 = sphi 0, %s185
      %s207 = sphi 0, %s209
      %s210 = sphi 0, %s207
      %s211 = sphi 0, %s210
      %s227 = sphi 0, %s211
      %s233 = sphi 0, %s235
      %s236 = sphi 0, %s233
      %s237 = sphi 0, %s236
      %s253 = sphi 0, %s237
      %s259 = sphi 0, %s261
      %s262 = sphi 0, %s259
      %s263 = sphi 0, %s262
      %s279 = sphi 0, %s263
      %s285 = sphi 0, %s287
      %s288 = sphi 0, %s285
      %s289 = sphi 0, %s288
      %s305 = sphi 0, %s289
      %s311 = sphi 0, %s313
      %s314 = sphi 0, %s311
      %s315 = sphi 0, %s314
      %s331 = sphi 0, %s315
      %s337 = sphi 0, %s339
      %s340 = sphi 0, %s337
      %s341 = sphi 0, %s340
      %s357 = sphi 0, %s341
      %s363 = sphi 0, %s365
      %s366 = sphi 0, %s363
      %s367 = sphi 0, %s366
      %s383 = sphi 0, %s367
      %s389 = sphi 0, %s391
      %s392 = sphi 0, %s389
      %s393 = sphi 0, %s392
      %s409 = sphi 0, %s393
      %s415 = sphi 0, %s417
      %s418 = sphi 0, %s415
      %s419 = sphi 0, %s418
      %s435 = sphi 0, %s419
      %s441 = sphi 0, %s443
      %s444 = sphi 0, %s441
      %s445 = sphi 0, %s444
      %s461 = sphi 0, %s445
      %s467 = sphi 0, %s469
      %s470 = sphi 0, %s467
      %s471 = sphi 0, %s470
      %s487 = sphi 0, %s471
      %s493 = sphi 0, %s495
      %s496 = sphi 0, %s493
      %s497 = sphi 0, %s496
      %s513 = sphi 0, %s497
      %s517 = sphi 0, %s517
      %s519 = sphi 0, %s517
      %s520 = sphi 0, %s519
      %s534 = sphi 0, %s520
      %s538 = sphi 0, %s538
      %s540 = sphi 0, %s538
      %s541 = sphi 0, %s540
      %s555 = sphi 0, %s541
      %s561 = sphi 0, %s563
      %s564 = sphi 0, %s561
      %s565 = sphi 0, %s564
      %s581 = sphi 0, %s565
    $region4: #{decoder_forward.1} parent=1 // loop_header_branch
      %32 = sbr.rel (%p30) target = $region8
    $region5: #{decoder_forward.1} parent=1 // loop_body
      %s34 = ssub.s32 %s29, 1
      %s35 = ssub.s32 %s29, 2
      %s42 = sadd.s32 1, %s37
      %p43 = scmp.ge.s32.totalorder %s42, 2
      %s44 = scalar_select %p43, 0, %s42
      %s45 = sadd.s32 1, %s36
      %s46 = scalar_select %p43, %s45, %s36
      %p47 = scmp.ge.s32.totalorder %s46, 2
      %s48 = scalar_select %p47, 0, %s46
      %s49 = ssub.s32 %s36, %s48
      %p50 = scmp.eq.s32.totalorder %s49, 0
      %s52 = sadd.s32 %s51, 1
      %s53 = scalar_select %p50, %s51, %s52
      %p56 = pneg %p50
      %p57 = scmp.eq.s32.totalorder %s29, 3
      %p58 = por %p56, %p57
      %p59 = scmp.ne.s32.totalorder %s51, %s54
      %p60 = scmp.eq.s32.totalorder %s29, 0
      %p61 = por %p59, %p60
      %p62 = scmp.ne.s32.totalorder %s51, %s54
      %p63 = scmp.eq.s32.totalorder %s34, 3
      %p64 = por %p62, %p63
      %p65 = scmp.ne.s32.totalorder %s54, %s55
      %p66 = scmp.eq.s32.totalorder %s34, 0
      %p67 = por %p65, %p66
      %p68 = scmp.ne.s32.totalorder %s54, %s55
      %p69 = scmp.eq.s32.totalorder %s35, 3
      %p70 = por %p68, %p69
      %p72 = scmp.ne.s32.totalorder %s55, %s71
      %p73 = scmp.eq.s32.totalorder %s35, 0
      %p74 = por %p72, %p73
      %s75 = ssub.s32 %s36, %s48
      %p76 = scmp.eq.s32.totalorder %s75, 0
      %s78 = sadd.s32 %s77, 1
      %s79 = scalar_select %p76, %s77, %s78
      %p82 = pneg %p76
      %p83 = scmp.eq.s32.totalorder %s29, 3
      %p84 = por %p82, %p83
      %p85 = scmp.ne.s32.totalorder %s77, %s80
      %p86 = scmp.eq.s32.totalorder %s29, 0
      %p87 = por %p85, %p86
      %p88 = scmp.ne.s32.totalorder %s77, %s80
      %p89 = scmp.eq.s32.totalorder %s34, 3
      %p90 = por %p88, %p89
      %p91 = scmp.ne.s32.totalorder %s80, %s81
      %p92 = scmp.eq.s32.totalorder %s34, 0
      %p93 = por %p91, %p92
      %p94 = scmp.ne.s32.totalorder %s80, %s81
      %p95 = scmp.eq.s32.totalorder %s35, 3
      %p96 = por %p94, %p95
      %p98 = scmp.ne.s32.totalorder %s81, %s97
      %p99 = scmp.eq.s32.totalorder %s35, 0
      %p100 = por %p98, %p99
      %s101 = ssub.s32 %s36, %s48
      %p102 = scmp.eq.s32.totalorder %s101, 0
      %s104 = sadd.s32 %s103, 1
      %s105 = scalar_select %p102, %s103, %s104
      %p108 = pneg %p102
      %p109 = scmp.eq.s32.totalorder %s29, 3
      %p110 = por %p108, %p109
      %p111 = scmp.ne.s32.totalorder %s103, %s106
      %p112 = scmp.eq.s32.totalorder %s29, 0
      %p113 = por %p111, %p112
      %p114 = scmp.ne.s32.totalorder %s103, %s106
      %p115 = scmp.eq.s32.totalorder %s34, 3
      %p116 = por %p114, %p115
      %p117 = scmp.ne.s32.totalorder %s106, %s107
      %p118 = scmp.eq.s32.totalorder %s34, 0
      %p119 = por %p117, %p118
      %p120 = scmp.ne.s32.totalorder %s106, %s107
      %p121 = scmp.eq.s32.totalorder %s35, 3
      %p122 = por %p120, %p121
      %p124 = scmp.ne.s32.totalorder %s107, %s123
      %p125 = scmp.eq.s32.totalorder %s35, 0
      %p126 = por %p124, %p125
      %s127 = ssub.s32 %s36, %s48
      %p128 = scmp.eq.s32.totalorder %s127, 0
      %s130 = sadd.s32 %s129, 1
      %s131 = scalar_select %p128, %s129, %s130
      %p134 = pneg %p128
      %p135 = scmp.eq.s32.totalorder %s29, 3
      %p136 = por %p134, %p135
      %p137 = scmp.ne.s32.totalorder %s129, %s132
      %p138 = scmp.eq.s32.totalorder %s29, 0
      %p139 = por %p137, %p138
      %p140 = scmp.ne.s32.totalorder %s129, %s132
      %p141 = scmp.eq.s32.totalorder %s34, 3
      %p142 = por %p140, %p141
      %p143 = scmp.ne.s32.totalorder %s132, %s133
      %p144 = scmp.eq.s32.totalorder %s34, 0
      %p145 = por %p143, %p144
      %p146 = scmp.ne.s32.totalorder %s132, %s133
      %p147 = scmp.eq.s32.totalorder %s35, 3
      %p148 = por %p146, %p147
      %p150 = scmp.ne.s32.totalorder %s133, %s149
      %p151 = scmp.eq.s32.totalorder %s35, 0
      %p152 = por %p150, %p151
      %s153 = ssub.s32 %s37, %s44
      %p154 = scmp.eq.s32.totalorder %s153, 0
      %s156 = sadd.s32 %s155, 1
      %s157 = scalar_select %p154, %s155, %s156
      %p160 = pneg %p154
      %p161 = scmp.eq.s32.totalorder %s29, 3
      %p162 = por %p160, %p161
      %p163 = scmp.ne.s32.totalorder %s155, %s158
      %p164 = scmp.eq.s32.totalorder %s29, 0
      %p165 = por %p163, %p164
      %p166 = scmp.ne.s32.totalorder %s155, %s158
      %p167 = scmp.eq.s32.totalorder %s34, 3
      %p168 = por %p166, %p167
      %p169 = scmp.ne.s32.totalorder %s158, %s159
      %p170 = scmp.eq.s32.totalorder %s34, 0
      %p171 = por %p169, %p170
      %p172 = scmp.ne.s32.totalorder %s158, %s159
      %p173 = scmp.eq.s32.totalorder %s35, 3
      %p174 = por %p172, %p173
      %p176 = scmp.ne.s32.totalorder %s159, %s175
      %p177 = scmp.eq.s32.totalorder %s35, 0
      %p178 = por %p176, %p177
      %s179 = ssub.s32 %s37, %s44
      %p180 = scmp.eq.s32.totalorder %s179, 0
      %s182 = sadd.s32 %s181, 1
      %s183 = scalar_select %p180, %s181, %s182
      %p186 = pneg %p180
      %p187 = scmp.eq.s32.totalorder %s29, 3
      %p188 = por %p186, %p187
      %p189 = scmp.ne.s32.totalorder %s181, %s184
      %p190 = scmp.eq.s32.totalorder %s29, 0
      %p191 = por %p189, %p190
      %p192 = scmp.ne.s32.totalorder %s181, %s184
      %p193 = scmp.eq.s32.totalorder %s34, 3
      %p194 = por %p192, %p193
      %p195 = scmp.ne.s32.totalorder %s184, %s185
      %p196 = scmp.eq.s32.totalorder %s34, 0
      %p197 = por %p195, %p196
      %p198 = scmp.ne.s32.totalorder %s184, %s185
      %p199 = scmp.eq.s32.totalorder %s35, 3
      %p200 = por %p198, %p199
      %p202 = scmp.ne.s32.totalorder %s185, %s201
      %p203 = scmp.eq.s32.totalorder %s35, 0
      %p204 = por %p202, %p203
      %s205 = ssub.s32 %s37, %s44
      %p206 = scmp.eq.s32.totalorder %s205, 0
      %s208 = sadd.s32 %s207, 1
      %s209 = scalar_select %p206, %s207, %s208
      %p212 = pneg %p206
      %p213 = scmp.eq.s32.totalorder %s29, 3
      %p214 = por %p212, %p213
      %p215 = scmp.ne.s32.totalorder %s207, %s210
      %p216 = scmp.eq.s32.totalorder %s29, 0
      %p217 = por %p215, %p216
      %p218 = scmp.ne.s32.totalorder %s207, %s210
      %p219 = scmp.eq.s32.totalorder %s34, 3
      %p220 = por %p218, %p219
      %p221 = scmp.ne.s32.totalorder %s210, %s211
      %p222 = scmp.eq.s32.totalorder %s34, 0
      %p223 = por %p221, %p222
      %p224 = scmp.ne.s32.totalorder %s210, %s211
      %p225 = scmp.eq.s32.totalorder %s35, 3
      %p226 = por %p224, %p225
      %p228 = scmp.ne.s32.totalorder %s211, %s227
      %p229 = scmp.eq.s32.totalorder %s35, 0
      %p230 = por %p228, %p229
      %s231 = ssub.s32 %s37, %s44
      %p232 = scmp.eq.s32.totalorder %s231, 0
      %s234 = sadd.s32 %s233, 1
      %s235 = scalar_select %p232, %s233, %s234
      %p238 = pneg %p232
      %p239 = scmp.eq.s32.totalorder %s29, 3
      %p240 = por %p238, %p239
      %p241 = scmp.ne.s32.totalorder %s233, %s236
      %p242 = scmp.eq.s32.totalorder %s29, 0
      %p243 = por %p241, %p242
      %p244 = scmp.ne.s32.totalorder %s233, %s236
      %p245 = scmp.eq.s32.totalorder %s34, 3
      %p246 = por %p244, %p245
      %p247 = scmp.ne.s32.totalorder %s236, %s237
      %p248 = scmp.eq.s32.totalorder %s34, 0
      %p249 = por %p247, %p248
      %p250 = scmp.ne.s32.totalorder %s236, %s237
      %p251 = scmp.eq.s32.totalorder %s35, 3
      %p252 = por %p250, %p251
      %p254 = scmp.ne.s32.totalorder %s237, %s253
      %p255 = scmp.eq.s32.totalorder %s35, 0
      %p256 = por %p254, %p255
      %s257 = ssub.s32 %s37, %s44
      %p258 = scmp.eq.s32.totalorder %s257, 0
      %s260 = sadd.s32 %s259, 1
      %s261 = scalar_select %p258, %s259, %s260
      %p264 = pneg %p258
      %p265 = scmp.eq.s32.totalorder %s29, 3
      %p266 = por %p264, %p265
      %p267 = scmp.ne.s32.totalorder %s259, %s262
      %p268 = scmp.eq.s32.totalorder %s29, 0
      %p269 = por %p267, %p268
      %p270 = scmp.ne.s32.totalorder %s259, %s262
      %p271 = scmp.eq.s32.totalorder %s34, 3
      %p272 = por %p270, %p271
      %p273 = scmp.ne.s32.totalorder %s262, %s263
      %p274 = scmp.eq.s32.totalorder %s34, 0
      %p275 = por %p273, %p274
      %p276 = scmp.ne.s32.totalorder %s262, %s263
      %p277 = scmp.eq.s32.totalorder %s35, 3
      %p278 = por %p276, %p277
      %p280 = scmp.ne.s32.totalorder %s263, %s279
      %p281 = scmp.eq.s32.totalorder %s35, 0
      %p282 = por %p280, %p281
      %s283 = ssub.s32 %s37, %s44
      %p284 = scmp.eq.s32.totalorder %s283, 0
      %s286 = sadd.s32 %s285, 1
      %s287 = scalar_select %p284, %s285, %s286
      %p290 = pneg %p284
      %p291 = scmp.eq.s32.totalorder %s29, 3
      %p292 = por %p290, %p291
      %p293 = scmp.ne.s32.totalorder %s285, %s288
      %p294 = scmp.eq.s32.totalorder %s29, 0
      %p295 = por %p293, %p294
      %p296 = scmp.ne.s32.totalorder %s285, %s288
      %p297 = scmp.eq.s32.totalorder %s34, 3
      %p298 = por %p296, %p297
      %p299 = scmp.ne.s32.totalorder %s288, %s289
      %p300 = scmp.eq.s32.totalorder %s34, 0
      %p301 = por %p299, %p300
      %p302 = scmp.ne.s32.totalorder %s288, %s289
      %p303 = scmp.eq.s32.totalorder %s35, 3
      %p304 = por %p302, %p303
      %p306 = scmp.ne.s32.totalorder %s289, %s305
      %p307 = scmp.eq.s32.totalorder %s35, 0
      %p308 = por %p306, %p307
      %s309 = ssub.s32 %s37, %s44
      %p310 = scmp.eq.s32.totalorder %s309, 0
      %s312 = sadd.s32 %s311, 1
      %s313 = scalar_select %p310, %s311, %s312
      %p316 = pneg %p310
      %p317 = scmp.eq.s32.totalorder %s29, 3
      %p318 = por %p316, %p317
      %p319 = scmp.ne.s32.totalorder %s311, %s314
      %p320 = scmp.eq.s32.totalorder %s29, 0
      %p321 = por %p319, %p320
      %p322 = scmp.ne.s32.totalorder %s311, %s314
      %p323 = scmp.eq.s32.totalorder %s34, 3
      %p324 = por %p322, %p323
      %p325 = scmp.ne.s32.totalorder %s314, %s315
      %p326 = scmp.eq.s32.totalorder %s34, 0
      %p327 = por %p325, %p326
      %p328 = scmp.ne.s32.totalorder %s314, %s315
      %p329 = scmp.eq.s32.totalorder %s35, 3
      %p330 = por %p328, %p329
      %p332 = scmp.ne.s32.totalorder %s315, %s331
      %p333 = scmp.eq.s32.totalorder %s35, 0
      %p334 = por %p332, %p333
      %s335 = ssub.s32 %s37, %s44
      %p336 = scmp.eq.s32.totalorder %s335, 0
      %s338 = sadd.s32 %s337, 1
      %s339 = scalar_select %p336, %s337, %s338
      %p342 = pneg %p336
      %p343 = scmp.eq.s32.totalorder %s29, 3
      %p344 = por %p342, %p343
      %p345 = scmp.ne.s32.totalorder %s337, %s340
      %p346 = scmp.eq.s32.totalorder %s29, 0
      %p347 = por %p345, %p346
      %p348 = scmp.ne.s32.totalorder %s337, %s340
      %p349 = scmp.eq.s32.totalorder %s34, 3
      %p350 = por %p348, %p349
      %p351 = scmp.ne.s32.totalorder %s340, %s341
      %p352 = scmp.eq.s32.totalorder %s34, 0
      %p353 = por %p351, %p352
      %p354 = scmp.ne.s32.totalorder %s340, %s341
      %p355 = scmp.eq.s32.totalorder %s35, 3
      %p356 = por %p354, %p355
      %p358 = scmp.ne.s32.totalorder %s341, %s357
      %p359 = scmp.eq.s32.totalorder %s35, 0
      %p360 = por %p358, %p359
      %s361 = ssub.s32 %s37, %s44
      %p362 = scmp.eq.s32.totalorder %s361, 0
      %s364 = sadd.s32 %s363, 1
      %s365 = scalar_select %p362, %s363, %s364
      %p368 = pneg %p362
      %p369 = scmp.eq.s32.totalorder %s29, 3
      %p370 = por %p368, %p369
      %p371 = scmp.ne.s32.totalorder %s363, %s366
      %p372 = scmp.eq.s32.totalorder %s29, 0
      %p373 = por %p371, %p372
      %p374 = scmp.ne.s32.totalorder %s363, %s366
      %p375 = scmp.eq.s32.totalorder %s34, 3
      %p376 = por %p374, %p375
      %p377 = scmp.ne.s32.totalorder %s366, %s367
      %p378 = scmp.eq.s32.totalorder %s34, 0
      %p379 = por %p377, %p378
      %p380 = scmp.ne.s32.totalorder %s366, %s367
      %p381 = scmp.eq.s32.totalorder %s35, 3
      %p382 = por %p380, %p381
      %p384 = scmp.ne.s32.totalorder %s367, %s383
      %p385 = scmp.eq.s32.totalorder %s35, 0
      %p386 = por %p384, %p385
      %s387 = ssub.s32 %s37, %s44
      %p388 = scmp.eq.s32.totalorder %s387, 0
      %s390 = sadd.s32 %s389, 1
      %s391 = scalar_select %p388, %s389, %s390
      %p394 = pneg %p388
      %p395 = scmp.eq.s32.totalorder %s29, 3
      %p396 = por %p394, %p395
      %p397 = scmp.ne.s32.totalorder %s389, %s392
      %p398 = scmp.eq.s32.totalorder %s29, 0
      %p399 = por %p397, %p398
      %p400 = scmp.ne.s32.totalorder %s389, %s392
      %p401 = scmp.eq.s32.totalorder %s34, 3
      %p402 = por %p400, %p401
      %p403 = scmp.ne.s32.totalorder %s392, %s393
      %p404 = scmp.eq.s32.totalorder %s34, 0
      %p405 = por %p403, %p404
      %p406 = scmp.ne.s32.totalorder %s392, %s393
      %p407 = scmp.eq.s32.totalorder %s35, 3
      %p408 = por %p406, %p407
      %p410 = scmp.ne.s32.totalorder %s393, %s409
      %p411 = scmp.eq.s32.totalorder %s35, 0
      %p412 = por %p410, %p411
      %s413 = ssub.s32 %s37, %s44
      %p414 = scmp.eq.s32.totalorder %s413, 0
      %s416 = sadd.s32 %s415, 1
      %s417 = scalar_select %p414, %s415, %s416
      %p420 = pneg %p414
      %p421 = scmp.eq.s32.totalorder %s29, 3
      %p422 = por %p420, %p421
      %p423 = scmp.ne.s32.totalorder %s415, %s418
      %p424 = scmp.eq.s32.totalorder %s29, 0
      %p425 = por %p423, %p424
      %p426 = scmp.ne.s32.totalorder %s415, %s418
      %p427 = scmp.eq.s32.totalorder %s34, 3
      %p428 = por %p426, %p427
      %p429 = scmp.ne.s32.totalorder %s418, %s419
      %p430 = scmp.eq.s32.totalorder %s34, 0
      %p431 = por %p429, %p430
      %p432 = scmp.ne.s32.totalorder %s418, %s419
      %p433 = scmp.eq.s32.totalorder %s35, 3
      %p434 = por %p432, %p433
      %p436 = scmp.ne.s32.totalorder %s419, %s435
      %p437 = scmp.eq.s32.totalorder %s35, 0
      %p438 = por %p436, %p437
      %s439 = ssub.s32 %s37, %s44
      %p440 = scmp.eq.s32.totalorder %s439, 0
      %s442 = sadd.s32 %s441, 1
      %s443 = scalar_select %p440, %s441, %s442
      %p446 = pneg %p440
      %p447 = scmp.eq.s32.totalorder %s29, 3
      %p448 = por %p446, %p447
      %p449 = scmp.ne.s32.totalorder %s441, %s444
      %p450 = scmp.eq.s32.totalorder %s29, 0
      %p451 = por %p449, %p450
      %p452 = scmp.ne.s32.totalorder %s441, %s444
      %p453 = scmp.eq.s32.totalorder %s34, 3
      %p454 = por %p452, %p453
      %p455 = scmp.ne.s32.totalorder %s444, %s445
      %p456 = scmp.eq.s32.totalorder %s34, 0
      %p457 = por %p455, %p456
      %p458 = scmp.ne.s32.totalorder %s444, %s445
      %p459 = scmp.eq.s32.totalorder %s35, 3
      %p460 = por %p458, %p459
      %p462 = scmp.ne.s32.totalorder %s445, %s461
      %p463 = scmp.eq.s32.totalorder %s35, 0
      %p464 = por %p462, %p463
      %s465 = ssub.s32 %s37, %s44
      %p466 = scmp.eq.s32.totalorder %s465, 0
      %s468 = sadd.s32 %s467, 1
      %s469 = scalar_select %p466, %s467, %s468
      %p472 = pneg %p466
      %p473 = scmp.eq.s32.totalorder %s29, 3
      %p474 = por %p472, %p473
      %p475 = scmp.ne.s32.totalorder %s467, %s470
      %p476 = scmp.eq.s32.totalorder %s29, 0
      %p477 = por %p475, %p476
      %p478 = scmp.ne.s32.totalorder %s467, %s470
      %p479 = scmp.eq.s32.totalorder %s34, 3
      %p480 = por %p478, %p479
      %p481 = scmp.ne.s32.totalorder %s470, %s471
      %p482 = scmp.eq.s32.totalorder %s34, 0
      %p483 = por %p481, %p482
      %p484 = scmp.ne.s32.totalorder %s470, %s471
      %p485 = scmp.eq.s32.totalorder %s35, 3
      %p486 = por %p484, %p485
      %p488 = scmp.ne.s32.totalorder %s471, %s487
      %p489 = scmp.eq.s32.totalorder %s35, 0
      %p490 = por %p488, %p489
      %s491 = ssub.s32 %s37, %s44
      %p492 = scmp.eq.s32.totalorder %s491, 0
      %s494 = sadd.s32 %s493, 1
      %s495 = scalar_select %p492, %s493, %s494
      %p498 = pneg %p492
      %p499 = scmp.eq.s32.totalorder %s29, 3
      %p500 = por %p498, %p499
      %p501 = scmp.ne.s32.totalorder %s493, %s496
      %p502 = scmp.eq.s32.totalorder %s29, 0
      %p503 = por %p501, %p502
      %p504 = scmp.ne.s32.totalorder %s493, %s496
      %p505 = scmp.eq.s32.totalorder %s34, 3
      %p506 = por %p504, %p505
      %p507 = scmp.ne.s32.totalorder %s496, %s497
      %p508 = scmp.eq.s32.totalorder %s34, 0
      %p509 = por %p507, %p508
      %p510 = scmp.ne.s32.totalorder %s496, %s497
      %p511 = scmp.eq.s32.totalorder %s35, 3
      %p512 = por %p510, %p511
      %p514 = scmp.ne.s32.totalorder %s497, %s513
      %p515 = scmp.eq.s32.totalorder %s35, 0
      %p516 = por %p514, %p515
      %s518 = sadd.s32 %s517, 1
      %p521 = scmp.eq.s32.totalorder %s29, 3
      %p522 = scmp.ne.s32.totalorder %s517, %s519
      %p523 = scmp.eq.s32.totalorder %s29, 0
      %p524 = por %p522, %p523
      %p525 = scmp.ne.s32.totalorder %s517, %s519
      %p526 = scmp.eq.s32.totalorder %s34, 3
      %p527 = por %p525, %p526
      %p528 = scmp.ne.s32.totalorder %s519, %s520
      %p529 = scmp.eq.s32.totalorder %s34, 0
      %p530 = por %p528, %p529
      %p531 = scmp.ne.s32.totalorder %s519, %s520
      %p532 = scmp.eq.s32.totalorder %s35, 3
      %p533 = por %p531, %p532
      %p535 = scmp.ne.s32.totalorder %s520, %s534
      %p536 = scmp.eq.s32.totalorder %s35, 0
      %p537 = por %p535, %p536
      %s539 = sadd.s32 %s538, 1
      %p542 = scmp.eq.s32.totalorder %s29, 3
      %p543 = scmp.ne.s32.totalorder %s538, %s540
      %p544 = scmp.eq.s32.totalorder %s29, 0
      %p545 = por %p543, %p544
      %p546 = scmp.ne.s32.totalorder %s538, %s540
      %p547 = scmp.eq.s32.totalorder %s34, 3
      %p548 = por %p546, %p547
      %p549 = scmp.ne.s32.totalorder %s540, %s541
      %p550 = scmp.eq.s32.totalorder %s34, 0
      %p551 = por %p549, %p550
      %p552 = scmp.ne.s32.totalorder %s540, %s541
      %p553 = scmp.eq.s32.totalorder %s35, 3
      %p554 = por %p552, %p553
      %p556 = scmp.ne.s32.totalorder %s541, %s555
      %p557 = scmp.eq.s32.totalorder %s35, 0
      %p558 = por %p556, %p557
      %s559 = ssub.s32 %s36, %s48
      %p560 = scmp.eq.s32.totalorder %s559, 0
      %s562 = sadd.s32 %s561, 1
      %s563 = scalar_select %p560, %s561, %s562
      %p566 = pneg %p560
      %p567 = scmp.eq.s32.totalorder %s29, 3
      %p568 = por %p566, %p567
      %p569 = scmp.ne.s32.totalorder %s561, %s564
      %p570 = scmp.eq.s32.totalorder %s29, 0
      %p571 = por %p569, %p570
      %p572 = scmp.ne.s32.totalorder %s561, %s564
      %p573 = scmp.eq.s32.totalorder %s34, 3
      %p574 = por %p572, %p573
      %p575 = scmp.ne.s32.totalorder %s564, %s565
      %p576 = scmp.eq.s32.totalorder %s34, 0
      %p577 = por %p575, %p576
      %p578 = scmp.ne.s32.totalorder %s564, %s565
      %p579 = scmp.eq.s32.totalorder %s35, 3
      %p580 = por %p578, %p579
      %p582 = scmp.ne.s32.totalorder %s565, %s581
      %p583 = scmp.eq.s32.totalorder %s35, 0
      %p584 = por %p582, %p583
      %p585 = scmp.le.s32.totalorder 1, %s29
      %p586 = scmp.lt.s32.totalorder %s29, 5
      %p587 = pnand %p585, %p586
      %p588 = pneg %p587
      // Predicated region
      $region9: #{decoder_forward.1} parent=5 // pred_check
        _
      $region10: #{decoder_forward.1} parent=5 // pred_check_branch
        %590 = sbr.rel (%p587) target = $region12
      $region11: #{decoder_forward.1} parent=5 // pred_region
        %s591 = ssub.s32 %s29, 1
        // Predicated region
        $region13: #{decoder_forward.1} parent=11 // pred_check
          %p592 = pneg %p530
        $region14: #{decoder_forward.1} parent=11 // pred_check_branch
          %594 = sbr.rel (%p592) target = $region16
        $region15: #{decoder_forward.1} parent=11 // pred_region
          _
        $region16: #{decoder_forward.1} parent=11 // pred_fallthru
          _
        // Predicated region
        $region17: #{decoder_forward.1} parent=11 // pred_check
          %p595 = pneg %p551
        $region18: #{decoder_forward.1} parent=11 // pred_check_branch
          %597 = sbr.rel (%p595) target = $region20
        $region19: #{decoder_forward.1} parent=11 // pred_region
          _
        $region20: #{decoder_forward.1} parent=11 // pred_fallthru
          _
      $region12: #{decoder_forward.1} parent=5 // pred_fallthru
        _
      %p598 = scmp.lt.s32.totalorder %s29, 4
      // Predicated region
      $region21: #{decoder_forward.1} parent=5 // pred_check
        %p599 = pneg %p598
      $region22: #{decoder_forward.1} parent=5 // pred_check_branch
        %601 = sbr.rel (%p599) target = $region24
      $region23: #{decoder_forward.1} parent=5 // pred_region
        // Predicated region
        $region25: #{decoder_forward.1} parent=23 // pred_check
          %p602 = pneg %p61
        $region26: #{decoder_forward.1} parent=23 // pred_check_branch
          %604 = sbr.rel (%p602) target = $region28
        $region27: #{decoder_forward.1} parent=23 // pred_region
          %p605 = scmp.lt.s32.totalorder %s36, 1
          %s606 = scalar_select %p605, %s36, 1
          %s607 = smul.addr %s606, 8
          %s608 = scalar_lea.vmem %s0, %s607
        $region28: #{decoder_forward.1} parent=23 // pred_fallthru
          _
        // Predicated region
        $region29: #{decoder_forward.1} parent=23 // pred_check
          %p609 = pneg %p87
        $region30: #{decoder_forward.1} parent=23 // pred_check_branch
          %611 = sbr.rel (%p609) target = $region32
        $region31: #{decoder_forward.1} parent=23 // pred_region
          %p612 = scmp.lt.s32.totalorder %s36, 1
          %s613 = scalar_select %p612, %s36, 1
          %s614 = smul.addr %s613, 8
          %s615 = scalar_lea.vmem %s1, %s614
        $region32: #{decoder_forward.1} parent=23 // pred_fallthru
          _
        // Predicated region
        $region33: #{decoder_forward.1} parent=23 // pred_check
          %p616 = pneg %p113
        $region34: #{decoder_forward.1} parent=23 // pred_check_branch
          %618 = sbr.rel (%p616) target = $region36
        $region35: #{decoder_forward.1} parent=23 // pred_region
          %p619 = scmp.lt.s32.totalorder %s36, 1
          %s620 = scalar_select %p619, %s36, 1
          %s621 = scalar_lea.vmem %s2, %s620
        $region36: #{decoder_forward.1} parent=23 // pred_fallthru
          _
        // Predicated region
        $region37: #{decoder_forward.1} parent=23 // pred_check
          %p622 = pneg %p139
        $region38: #{decoder_forward.1} parent=23 // pred_check_branch
          %624 = sbr.rel (%p622) target = $region40
        $region39: #{decoder_forward.1} parent=23 // pred_region
          %p625 = scmp.lt.s32.totalorder %s36, 1
          %s626 = scalar_select %p625, %s36, 1
          %s627 = scalar_lea.vmem %s3, %s626
        $region40: #{decoder_forward.1} parent=23 // pred_fallthru
          _
        // Predicated region
        $region41: #{decoder_forward.1} parent=23 // pred_check
          %p628 = pneg %p165
        $region42: #{decoder_forward.1} parent=23 // pred_check_branch
          %630 = sbr.rel (%p628) target = $region44
        $region43: #{decoder_forward.1} parent=23 // pred_region
          %p631 = scmp.lt.s32.totalorder %s37, 1
          %s632 = scalar_select %p631, %s37, 1
          %s633 = smul.addr %s632, 48
          %s634 = smul.addr %s633, 4
          %s635 = scalar_lea.vmem %s4, %s634
        $region44: #{decoder_forward.1} parent=23 // pred_fallthru
          _
        // Predicated region
        $region45: #{decoder_forward.1} parent=23 // pred_check
          %p636 = pneg %p191
        $region46: #{decoder_forward.1} parent=23 // pred_check_branch
          %638 = sbr.rel (%p636) target = $region48
        $region47: #{decoder_forward.1} parent=23 // pred_region
          %p639 = scmp.lt.s32.totalorder %s37, 1
          %s640 = scalar_select %p639, %s37, 1
          %s641 = smul.addr %s640, 12
          %s642 = scalar_lea.vmem %s5, %s641
        $region48: #{decoder_forward.1} parent=23 // pred_fallthru
          _
        // Predicated region
        $region49: #{decoder_forward.1} parent=23 // pred_check
          %p643 = pneg %p217
        $region50: #{decoder_forward.1} parent=23 // pred_check_branch
          %645 = sbr.rel (%p643) target = $region52
        $region51: #{decoder_forward.1} parent=23 // pred_region
          %p646 = scmp.lt.s32.totalorder %s37, 1
          %s647 = scalar_select %p646, %s37, 1
          %s648 = smul.addr %s647, 4
          %s649 = smul.addr %s648, 4
          %s650 = scalar_lea.vmem %s6, %s649
        $region52: #{decoder_forward.1} parent=23 // pred_fallthru
          _
        // Predicated region
        $region53: #{decoder_forward.1} parent=23 // pred_check
          %p651 = pneg %p243
        $region54: #{decoder_forward.1} parent=23 // pred_check_branch
          %653 = sbr.rel (%p651) target = $region56
        $region55: #{decoder_forward.1} parent=23 // pred_region
          %p654 = scmp.lt.s32.totalorder %s37, 1
          %s655 = scalar_select %p654, %s37, 1
          %s656 = scalar_lea.vmem %s7, %s655
        $region56: #{decoder_forward.1} parent=23 // pred_fallthru
          _
        // Predicated region
        $region57: #{decoder_forward.1} parent=23 // pred_check
          %p657 = pneg %p269
        $region58: #{decoder_forward.1} parent=23 // pred_check_branch
          %659 = sbr.rel (%p657) target = $region60
        $region59: #{decoder_forward.1} parent=23 // pred_region
          %p660 = scmp.lt.s32.totalorder %s37, 1
          %s661 = scalar_select %p660, %s37, 1
          %s662 = smul.addr %s661, 48
          %s663 = smul.addr %s662, 4
          %s664 = scalar_lea.vmem %s8, %s663
        $region60: #{decoder_forward.1} parent=23 // pred_fallthru
          _
        // Predicated region
        $region61: #{decoder_forward.1} parent=23 // pred_check
          %p665 = pneg %p295
        $region62: #{decoder_forward.1} parent=23 // pred_check_branch
          %667 = sbr.rel (%p665) target = $region64
        $region63: #{decoder_forward.1} parent=23 // pred_region
          %p668 = scmp.lt.s32.totalorder %s37, 1
          %s669 = scalar_select %p668, %s37, 1
          %s670 = smul.addr %s669, 12
          %s671 = scalar_lea.vmem %s9, %s670
        $region64: #{decoder_forward.1} parent=23 // pred_fallthru
          _
        // Predicated region
        $region65: #{decoder_forward.1} parent=23 // pred_check
          %p672 = pneg %p321
        $region66: #{decoder_forward.1} parent=23 // pred_check_branch
          %674 = sbr.rel (%p672) target = $region68
        $region67: #{decoder_forward.1} parent=23 // pred_region
          %p675 = scmp.lt.s32.totalorder %s37, 1
          %s676 = scalar_select %p675, %s37, 1
          %s677 = smul.addr %s676, 4
          %s678 = smul.addr %s677, 4
          %s679 = scalar_lea.vmem %s10, %s678
        $region68: #{decoder_forward.1} parent=23 // pred_fallthru
          _
        // Predicated region
        $region69: #{decoder_forward.1} parent=23 // pred_check
          %p680 = pneg %p347
        $region70: #{decoder_forward.1} parent=23 // pred_check_branch
          %682 = sbr.rel (%p680) target = $region72
        $region71: #{decoder_forward.1} parent=23 // pred_region
          %p683 = scmp.lt.s32.totalorder %s37, 1
          %s684 = scalar_select %p683, %s37, 1
          %s685 = scalar_lea.vmem %s11, %s684
        $region72: #{decoder_forward.1} parent=23 // pred_fallthru
          _
        // Predicated region
        $region73: #{decoder_forward.1} parent=23 // pred_check
          %p686 = pneg %p373
        $region74: #{decoder_forward.1} parent=23 // pred_check_branch
          %688 = sbr.rel (%p686) target = $region76
        $region75: #{decoder_forward.1} parent=23 // pred_region
          %p689 = scmp.lt.s32.totalorder %s37, 1
          %s690 = scalar_select %p689, %s37, 1
          %s691 = smul.addr %s690, 4
          %s692 = smul.addr %s691, 4
          %s693 = scalar_lea.vmem %s12, %s692
        $region76: #{decoder_forward.1} parent=23 // pred_fallthru
          _
        // Predicated region
        $region77: #{decoder_forward.1} parent=23 // pred_check
          %p694 = pneg %p399
        $region78: #{decoder_forward.1} parent=23 // pred_check_branch
          %696 = sbr.rel (%p694) target = $region80
        $region79: #{decoder_forward.1} parent=23 // pred_region
          %p697 = scmp.lt.s32.totalorder %s37, 1
          %s698 = scalar_select %p697, %s37, 1
          %s699 = scalar_lea.vmem %s13, %s698
        $region80: #{decoder_forward.1} parent=23 // pred_fallthru
          _
        // Predicated region
        $region81: #{decoder_forward.1} parent=23 // pred_check
          %p700 = pneg %p425
        $region82: #{decoder_forward.1} parent=23 // pred_check_branch
          %702 = sbr.rel (%p700) target = $region84
        $region83: #{decoder_forward.1} parent=23 // pred_region
          %p703 = scmp.lt.s32.totalorder %s37, 1
          %s704 = scalar_select %p703, %s37, 1
          %s705 = smul.addr %s704, 8
          %s706 = smul.addr %s705, 4
          %s707 = scalar_lea.vmem %s14, %s706
        $region84: #{decoder_forward.1} parent=23 // pred_fallthru
          _
        // Predicated region
        $region85: #{decoder_forward.1} parent=23 // pred_check
          %p708 = pneg %p451
        $region86: #{decoder_forward.1} parent=23 // pred_check_branch
          %710 = sbr.rel (%p708) target = $region88
        $region87: #{decoder_forward.1} parent=23 // pred_region
          %p711 = scmp.lt.s32.totalorder %s37, 1
          %s712 = scalar_select %p711, %s37, 1
          %s713 = scalar_lea.vmem %s15, %s712
        $region88: #{decoder_forward.1} parent=23 // pred_fallthru
          _
        // Predicated region
        $region89: #{decoder_forward.1} parent=23 // pred_check
          %p714 = pneg %p477
        $region90: #{decoder_forward.1} parent=23 // pred_check_branch
          %716 = sbr.rel (%p714) target = $region92
        $region91: #{decoder_forward.1} parent=23 // pred_region
          %p717 = scmp.lt.s32.totalorder %s37, 1
          %s718 = scalar_select %p717, %s37, 1
          %s719 = smul.addr %s718, 3
          %s720 = scalar_lea.vmem %s16, %s719
        $region92: #{decoder_forward.1} parent=23 // pred_fallthru
          _
        // Predicated region
        $region93: #{decoder_forward.1} parent=23 // pred_check
          %p721 = pneg %p503
        $region94: #{decoder_forward.1} parent=23 // pred_check_branch
          %723 = sbr.rel (%p721) target = $region96
        $region95: #{decoder_forward.1} parent=23 // pred_region
          %p724 = scmp.lt.s32.totalorder %s37, 1
          %s725 = scalar_select %p724, %s37, 1
          %s726 = smul.addr %s725, 3
          %s727 = scalar_lea.vmem %s17, %s726
        $region96: #{decoder_forward.1} parent=23 // pred_fallthru
          _
      $region24: #{decoder_forward.1} parent=5 // pred_fallthru
        _
      %p728 = scmp.le.s32.totalorder 1, %s29
      %p729 = scmp.lt.s32.totalorder %s29, 5
      %p730 = pnand %p728, %p729
      %p731 = pneg %p730
      // Predicated region
      $region97: #{decoder_forward.1} parent=5 // pred_check
        _
      $region98: #{decoder_forward.1} parent=5 // pred_check_branch
        %733 = sbr.rel (%p730) target = $region100
      $region99: #{decoder_forward.1} parent=5 // pred_region
        %s734 = ssub.s32 %s29, 1
        %p735 = scmp.lt.s32.totalorder %s38, 1
        %s736 = scalar_select %p735, %s38, 1
        %s737 = smul.addr %s736, 8
        %s738 = scalar_lea.vmem %s0, %s737
        %p739 = pneg %p67
        %p740 = pneg %p64
        %p741 = scmp.lt.s32.totalorder %s38, 1
        %s742 = scalar_select %p741, %s38, 1
        %s743 = smul.addr %s742, 8
        %s744 = scalar_lea.vmem %s1, %s743
        %p745 = pneg %p93
        %p746 = pneg %p90
        %p747 = scmp.lt.s32.totalorder %s38, 1
        %s748 = scalar_select %p747, %s38, 1
        %s749 = scalar_lea.vmem %s2, %s748
        %p750 = pneg %p119
        %p751 = pneg %p116
        %p752 = scmp.lt.s32.totalorder %s38, 1
        %s753 = scalar_select %p752, %s38, 1
        %s754 = scalar_lea.vmem %s3, %s753
        %p755 = pneg %p145
        %p756 = pneg %p142
        %p757 = scmp.lt.s32.totalorder %s39, 1
        %s758 = scalar_select %p757, %s39, 1
        %s759 = smul.addr %s758, 48
        %s760 = smul.addr %s759, 4
        %s761 = scalar_lea.vmem %s4, %s760
        %p762 = pneg %p171
        %p763 = pneg %p168
        %p764 = scmp.lt.s32.totalorder %s39, 1
        %s765 = scalar_select %p764, %s39, 1
        %s766 = smul.addr %s765, 12
        %s767 = scalar_lea.vmem %s5, %s766
        %p768 = pneg %p197
        %p769 = pneg %p194
        %p770 = scmp.lt.s32.totalorder %s39, 1
        %s771 = scalar_select %p770, %s39, 1
        %s772 = smul.addr %s771, 4
        %s773 = smul.addr %s772, 4
        %s774 = scalar_lea.vmem %s6, %s773
        %p775 = pneg %p223
        %p776 = pneg %p220
        %p777 = scmp.lt.s32.totalorder %s39, 1
        %s778 = scalar_select %p777, %s39, 1
        %s779 = scalar_lea.vmem %s7, %s778
        %p780 = pneg %p249
        %p781 = pneg %p246
        %p782 = scmp.lt.s32.totalorder %s39, 1
        %s783 = scalar_select %p782, %s39, 1
        %s784 = smul.addr %s783, 48
        %s785 = smul.addr %s784, 4
        %s786 = scalar_lea.vmem %s8, %s785
        %p787 = pneg %p275
        %p788 = pneg %p272
        %p789 = scmp.lt.s32.totalorder %s39, 1
        %s790 = scalar_select %p789, %s39, 1
        %s791 = smul.addr %s790, 12
        %s792 = scalar_lea.vmem %s9, %s791
        %p793 = pneg %p301
        %p794 = pneg %p298
        %p795 = scmp.lt.s32.totalorder %s39, 1
        %s796 = scalar_select %p795, %s39, 1
        %s797 = smul.addr %s796, 4
        %s798 = smul.addr %s797, 4
        %s799 = scalar_lea.vmem %s10, %s798
        %p800 = pneg %p327
        %p801 = pneg %p324
        %p802 = scmp.lt.s32.totalorder %s39, 1
        %s803 = scalar_select %p802, %s39, 1
        %s804 = scalar_lea.vmem %s11, %s803
        %p805 = pneg %p353
        %p806 = pneg %p350
        %p807 = scmp.lt.s32.totalorder %s39, 1
        %s808 = scalar_select %p807, %s39, 1
        %s809 = smul.addr %s808, 4
        %s810 = smul.addr %s809, 4
        %s811 = scalar_lea.vmem %s12, %s810
        %p812 = pneg %p379
        %p813 = pneg %p376
        %p814 = scmp.lt.s32.totalorder %s39, 1
        %s815 = scalar_select %p814, %s39, 1
        %s816 = scalar_lea.vmem %s13, %s815
        %p817 = pneg %p405
        %p818 = pneg %p402
        %p819 = scmp.lt.s32.totalorder %s39, 1
        %s820 = scalar_select %p819, %s39, 1
        %s821 = smul.addr %s820, 8
        %s822 = smul.addr %s821, 4
        %s823 = scalar_lea.vmem %s14, %s822
        %p824 = pneg %p431
        %p825 = pneg %p428
        %p826 = scmp.lt.s32.totalorder %s39, 1
        %s827 = scalar_select %p826, %s39, 1
        %s828 = scalar_lea.vmem %s15, %s827
        %p829 = pneg %p457
        %p830 = pneg %p454
        %p831 = scmp.lt.s32.totalorder %s39, 1
        %s832 = scalar_select %p831, %s39, 1
        %s833 = smul.addr %s832, 3
        %s834 = scalar_lea.vmem %s16, %s833
        %p835 = pneg %p483
        %p836 = pneg %p480
        %p837 = scmp.lt.s32.totalorder %s39, 1
        %s838 = scalar_select %p837, %s39, 1
        %s839 = smul.addr %s838, 3
        %s840 = scalar_lea.vmem %s17, %s839
        %p841 = pneg %p509
        %p842 = pneg %p506
        %p843 = pneg %p530
        %p844 = pneg %p527
        %p845 = pneg %p551
        %p846 = pneg %p548
        %p847 = pneg %p577
        %p848 = pneg %p574
        %s849 = sand.u32 %s564, 1
        %s850 = scalar_lea.sflag [#allocation4], %s849
        %s851 = sand.u32 %s564, 1
        %s852 = smul.addr %s851, 8
        %s853 = scalar_lea.vmem [#allocation3], %s852
        %p854 = scmp.lt.s32.totalorder %s38, 1
        %s855 = scalar_select %p854, %s38, 1
        %s856 = smul.addr %s855, 8
        %s857 = scalar_lea.vmem %s0, %s856
        %p858 = scmp.lt.s32.totalorder %s38, 1
        %s859 = scalar_select %p858, %s38, 1
        %s860 = smul.addr %s859, 8
        %s861 = scalar_lea.vmem %s1, %s860
        %p862 = scmp.lt.s32.totalorder %s38, 1
        %s863 = scalar_select %p862, %s38, 1
        %s864 = scalar_lea.vmem %s2, %s863
        %p865 = scmp.lt.s32.totalorder %s38, 1
        %s866 = scalar_select %p865, %s38, 1
        %s867 = scalar_lea.vmem %s3, %s866
        %p868 = scmp.lt.s32.totalorder %s39, 1
        %s869 = scalar_select %p868, %s39, 1
        %s870 = smul.addr %s869, 48
        %s871 = smul.addr %s870, 4
        %s872 = scalar_lea.vmem %s4, %s871
        %p873 = scmp.lt.s32.totalorder %s39, 1
        %s874 = scalar_select %p873, %s39, 1
        %s875 = smul.addr %s874, 12
        %s876 = scalar_lea.vmem %s5, %s875
        %p877 = scmp.lt.s32.totalorder %s39, 1
        %s878 = scalar_select %p877, %s39, 1
        %s879 = smul.addr %s878, 4
        %s880 = smul.addr %s879, 4
        %s881 = scalar_lea.vmem %s6, %s880
        %p882 = scmp.lt.s32.totalorder %s39, 1
        %s883 = scalar_select %p882, %s39, 1
        %s884 = scalar_lea.vmem %s7, %s883
        %p885 = scmp.lt.s32.totalorder %s39, 1
        %s886 = scalar_select %p885, %s39, 1
        %s887 = smul.addr %s886, 48
        %s888 = smul.addr %s887, 4
        %s889 = scalar_lea.vmem %s8, %s888
        %p890 = scmp.lt.s32.totalorder %s39, 1
        %s891 = scalar_select %p890, %s39, 1
        %s892 = smul.addr %s891, 12
        %s893 = scalar_lea.vmem %s9, %s892
        %p894 = scmp.lt.s32.totalorder %s39, 1
        %s895 = scalar_select %p894, %s39, 1
        %s896 = smul.addr %s895, 4
        %s897 = smul.addr %s896, 4
        %s898 = scalar_lea.vmem %s10, %s897
        %p899 = scmp.lt.s32.totalorder %s39, 1
        %s900 = scalar_select %p899, %s39, 1
        %s901 = scalar_lea.vmem %s11, %s900
        %p902 = scmp.lt.s32.totalorder %s39, 1
        %s903 = scalar_select %p902, %s39, 1
        %s904 = smul.addr %s903, 4
        %s905 = smul.addr %s904, 4
        %s906 = scalar_lea.vmem %s12, %s905
        %p907 = scmp.lt.s32.totalorder %s39, 1
        %s908 = scalar_select %p907, %s39, 1
        %s909 = scalar_lea.vmem %s13, %s908
        %p910 = scmp.lt.s32.totalorder %s39, 1
        %s911 = scalar_select %p910, %s39, 1
        %s912 = smul.addr %s911, 8
        %s913 = smul.addr %s912, 4
        %s914 = scalar_lea.vmem %s14, %s913
        %p915 = scmp.lt.s32.totalorder %s39, 1
        %s916 = scalar_select %p915, %s39, 1
        %s917 = scalar_lea.vmem %s15, %s916
        %p918 = scmp.lt.s32.totalorder %s39, 1
        %s919 = scalar_select %p918, %s39, 1
        %s920 = smul.addr %s919, 3
        %s921 = scalar_lea.vmem %s16, %s920
        %p922 = scmp.lt.s32.totalorder %s39, 1
        %s923 = scalar_select %p922, %s39, 1
        %s924 = smul.addr %s923, 3
        %s925 = scalar_lea.vmem %s17, %s924
        %p927 = scmp.eq.s32.totalorder %s39, 0
        // Predicated region
        $region101: #{decoder_forward.1} parent=99 // pred_check
          %p928 = pneg %p927
        $region102: #{decoder_forward.1} parent=99 // pred_check_branch
          %930 = sbr.rel (%p928) target = $region104
        $region103: #{decoder_forward.1} parent=99 // pred_region
          %v931 = vld [vmem:[%s857] sm:$0xff]
          %vm932 = vcmask 261120
          %933 = vst.msk [vmem:[#allocation2] sm:$0xff] %vm932, %v931
        $region104: #{decoder_forward.1} parent=99 // pred_fallthru
          _
        %v934 = vlaneseq
        %v935 = vshrl.u32 %v934, 7
        %v936 = vlaneseq
        %v937 = vand.u32 %v936, 127
        %vm938 = vcmp.le.s32.totalorder %v937, %v935
        %v939 = vld [vmem:[%s867] sm:$0x1]
        %vm940 = vcmp.gt.f32.partialorder %v939, 0.0
        %v941 = vsel %vm940, 1, 0
        %v942 = vperm.slane %v941, 0
        %vm943 = vcmp.eq.s32.totalorder %v942, 1
        %vm944 = vmand %vm938, %vm943
        %v945 = vsel %vm944, 0.0, -1e+09
        %v946 = vld [vmem:[%s864] sm:$0x1]
        %vm947 = vcmp.gt.f32.partialorder %v946, 0.0
        %v948 = vsel %vm947, 0.0, -1e+09
        %v949 = vld [vmem:[#allocation2] sm:$0xff]
        %v950 = vld [vmem:[%s921] sm:$0x1]
        %v951 = vld [vmem:[%s925] sm:$0x1]
        %vm952 = vcmask 261120
        %v953 = vsel %vm952, %v949, 0.0
        %954 = vadd.xlane.f32.xlu0 %v953
        %v955 = vpop.xlane.xlu0 %954
        %v956 = vrcp.pop 32.0
        %v957 = vmul.f32 32.0, %v956
        %v958 = vsub.f32 1.0, %v957
        %v959 = vmul.f32 %v956, %v958
        %v960 = vadd.f32 %v956, %v959
        %vm961 = vweird.f32 %v956
        %v962 = vsel %vm961, %v956, %v960
        %v963 = vmul.f32 %v955, %v962
        %v964 = vsub.f32 %v949, %v963
        %v965 = vmul.f32 %v964, %v964
        %v966 = vsel %vm952, %v965, 0.0
        %967 = vadd.xlane.f32.xlu0 %v966
        %v968 = vpop.xlane.xlu0 %967
        %v969 = vmul.f32 %v968, %v962
        %v970 = vadd.f32 %v969, 1e-06
        %v971 = vrsqrt.pop %v970
        %v972 = vmul.f32 %v971, %v970
        %v973 = vmul.f32 %v972, %v971
        %v974 = vmul.f32 0.5, %v973
        %v975 = vsub.f32 1.5, %v974
        %v976 = vmul.f32 %v971, %v975
        %vm977 = vweird.f32 %v970
        %vm978 = vweird.f32 %v971
        %vm979 = vmor %vm977, %vm978
        %v980 = vsel %vm979, %v971, %v976
        %v981 = vmul.f32 %v964, %v980
        %v983 = vperm.slane %v950, 0
        %v985 = vmul.f32 %v981, %v983
        %v987 = vperm.slane %v951, 0
        %v989 = vadd.f32 %v985, %v987
        %v990 = vpack.c.bf16 %v989, %v989
        %v991 = vld [vmem:[%s872] sm:$0xf]
        %v992 = vld [vmem:[%s872 + $0x4] sm:$0xf]
        %v993 = vld [vmem:[%s872 + $0x8] sm:$0xf]
        %v994 = vld [vmem:[%s872 + $0xc] sm:$0xf]
        %v995 = vld [vmem:[%s876] sm:$0x1]
        %v997 = vperm.slane %v995, 0
        %v1003 = vunpack.c.l.b16 %v991
        %v1004 = vunpack.c.l.b16 %v992
        %v1005 = vunpack.c.l.b16 %v993
        %v1006 = vunpack.c.l.b16 %v994
        %v1007 = vpack.c.b16 %v1004, %v1003
        %v1008 = vpack.c.b16 %v1006, %v1005
        %v1012 = vsel %vm952, %v990, 0
        %1014 = vmatpush.bf16.msra.mxu0 0
        %1015 = vmatpush.bf16.msra.mxu0 0
        %1016 = vmatpush.bf16.msra.mxu0 0
        %1017 = vmatpush.bf16.msra.mxu0 0
        %1018 = vmatpush.bf16.msra.mxu0 0
        %1019 = vmatpush.bf16.msra.mxu0 0
        %1020 = vmatpush.bf16.msra.mxu0 %v1008
        %1021 = vmatpush.bf16.msra.mxu0 %v1007
        %1022 = vmatmul.bf16.gmra.mxu0 %v1012
        %v1023 = vpop.f32.mrf.mxu0
        %v1024 = vadd.f32 %v997, %v1023
        %v1025 = vpop.f32.mrf.mxu0
        %1026 = vdwg.mxu0
        %s1027 = scalar_lea.vmem %s872, 64
        %v1028 = vld [vmem:[%s1027] sm:$0xf]
        %v1029 = vld [vmem:[%s1027 + $0x4] sm:$0xf]
        %v1030 = vld [vmem:[%s1027 + $0x8] sm:$0xf]
        %v1031 = vld [vmem:[%s1027 + $0xc] sm:$0xf]
        %s1032 = scalar_lea.vmem %s876, 4
        %v1033 = vld [vmem:[%s1032] sm:$0x1]
        %v1035 = vperm.slane %v1033, 0
        %v1041 = vunpack.c.l.b16 %v1028
        %v1042 = vunpack.c.l.b16 %v1029
        %v1043 = vunpack.c.l.b16 %v1030
        %v1044 = vunpack.c.l.b16 %v1031
        %v1045 = vpack.c.b16 %v1042, %v1041
        %v1046 = vpack.c.b16 %v1044, %v1043
        %1049 = vmatpush.bf16.msra.mxu0 0
        %1050 = vmatpush.bf16.msra.mxu0 0
        %1051 = vmatpush.bf16.msra.mxu0 0
        %1052 = vmatpush.bf16.msra.mxu0 0
        %1053 = vmatpush.bf16.msra.mxu0 0
        %1054 = vmatpush.bf16.msra.mxu0 0
        %1055 = vmatpush.bf16.msra.mxu0 %v1046
        %1056 = vmatpush.bf16.msra.mxu0 %v1045
        %1057 = vmatmul.bf16.gmra.mxu0 %v1012
        %v1058 = vpop.f32.mrf.mxu0
        %v1059 = vadd.f32 %v1035, %v1058
        %v1060 = vpop.f32.mrf.mxu0
        %1061 = vdwg.mxu0
        %s1062 = scalar_lea.vmem %s872, 128
        %v1063 = vld [vmem:[%s1062] sm:$0xf]
        %v1064 = vld [vmem:[%s1062 + $0x4] sm:$0xf]
        %v1065 = vld [vmem:[%s1062 + $0x8] sm:$0xf]
        %v1066 = vld [vmem:[%s1062 + $0xc] sm:$0xf]
        %s1067 = scalar_lea.vmem %s876, 8
        %v1068 = vld [vmem:[%s1067] sm:$0x1]
        %v1070 = vperm.slane %v1068, 0
        %v1076 = vunpack.c.l.b16 %v1063
        %v1077 = vunpack.c.l.b16 %v1064
        %v1078 = vunpack.c.l.b16 %v1065
        %v1079 = vunpack.c.l.b16 %v1066
        %v1080 = vpack.c.b16 %v1077, %v1076
        %v1081 = vpack.c.b16 %v1079, %v1078
        %1084 = vmatpush.bf16.msra.mxu0 0
        %1085 = vmatpush.bf16.msra.mxu0 0
        %1086 = vmatpush.bf16.msra.mxu0 0
        %1087 = vmatpush.bf16.msra.mxu0 0
        %1088 = vmatpush.bf16.msra.mxu0 0
        %1089 = vmatpush.bf16.msra.mxu0 0
        %1090 = vmatpush.bf16.msra.mxu0 %v1081
        %1091 = vmatpush.bf16.msra.mxu0 %v1080
        %1092 = vmatmul.bf16.gmra.mxu0 %v1012
        %v1093 = vpop.f32.mrf.mxu0
        %v1094 = vadd.f32 %v1070, %v1093
        %v1095 = vpop.f32.mrf.mxu0
        %1096 = vdwg.mxu0
        %v1097 = vpack.c.bf16 %v1024, %v1024
        %v1098 = vpack.c.bf16 %v1059, %v1059
        %vm1099 = vcmask 64512
        %v1101 = vsel %vm1099, %v1097, 0
        %v1104 = vsel %vm1099, %v1098, 0
        %1106 = vmatpush.bf16.xpose.msra.mxu0 0
        %1107 = vmatpush.bf16.xpose.msra.mxu0 0
        %1108 = vmatpush.bf16.xpose.msra.mxu0 0
        %1109 = vmatpush.bf16.xpose.msra.mxu0 0
        %1110 = vmatpush.bf16.xpose.msra.mxu0 0
        %1111 = vmatpush.bf16.xpose.msra.mxu0 0
        %1112 = vmatpush.bf16.xpose.msra.mxu0 0
        %1113 = vmatpush.bf16.xpose.msra.mxu0 %v1104
        %1114 = vmatmul.bf16.gmra.mxu0 %v1101
        %v1115 = vpop.f32.mrf.mxu0
        %v1116 = vadd.f32 0.0, %v1115
        %v1117 = vpop.f32.mrf.mxu0
        %1118 = vdwg.mxu0
        %v1119 = vmul.f32 %v1116, 0.35355338
        %v1120 = vadd.f32 %v1119, %v945
        %v1121 = vsel %vm1099, %v1120, -inf
        %1122 = vmax.xlane.f32.xlu0 %v1121
        %v1123 = vpop.xlane.xlu0 %1122
        %v1124 = vsub.f32 %v1120, %v1123
        %v1125 = vmul.f32 %v1124, 1.442695
        %v1126 = vpow.pop %v1125
        %v1127 = vsel %vm1099, %v1126, 0.0
        %1128 = vadd.xlane.f32.xlu0 %v1127
        %v1129 = vpop.xlane.xlu0 %1128
        %v1130 = vrcp.pop %v1129
        %v1131 = vmul.f32 %v1129, %v1130
        %v1132 = vsub.f32 1.0, %v1131
        %v1133 = vmul.f32 %v1130, %v1132
        %v1134 = vadd.f32 %v1130, %v1133
        %vm1135 = vweird.f32 %v1129
        %vm1136 = vweird.f32 %v1130
        %vm1137 = vmor %vm1135, %vm1136
        %v1138 = vsel %vm1137, %v1130, %v1134
        %v1139 = vand.u32 2147483647, %v1129
        %vm1140 = vcmp.eq.f32.partialorder %v1139, 8.507059e+37
        %v1141 = vand.u32 %v1129, 2147483648
        %v1142 = vor.u32 1.1754944e-38, %v1141
        %v1143 = vsel %vm1140, %v1142, %v1138
        %v1144 = vmul.f32 %v1126, %v1143
        %v1145 = vpack.c.bf16 %v1144, %v1144
        %v1146 = vpack.c.bf16 %v1094, %v1094
        %v1148 = vsel %vm1099, %v1145, 0
        %vm1150 = vcmask 1043456
        %v1152 = vsel %vm1150, %v1146, 0
        %1154 = vmatpush.bf16.msra.mxu0 0
        %1155 = vmatpush.bf16.msra.mxu0 0
        %1156 = vmatpush.bf16.msra.mxu0 0
        %1157 = vmatpush.bf16.msra.mxu0 0
        %1158 = vmatpush.bf16.msra.mxu0 0
        %1159 = vmatpush.bf16.msra.mxu0 0
        %1160 = vmatpush.bf16.msra.mxu0 0
        %1161 = vmatpush.bf16.msra.mxu0 %v1152
        %1162 = vmatmul.bf16.gmra.mxu0 %v1148
        %v1163 = vpop.f32.mrf.mxu0
        %v1164 = vadd.f32 0.0, %v1163
        %v1165 = vpop.f32.mrf.mxu0
        %1166 = vdwg.mxu0
        %v1167 = vpack.c.bf16 %v1164, %v1164
        %v1168 = vld [vmem:[%s881] sm:$0xf]
        %s1169 = scalar_lea.vmem %s872, 16
        %v1170 = vld [vmem:[%s1169] sm:$0xf]
        %v1171 = vld [vmem:[%s1169 + $0x4] sm:$0xf]
        %v1172 = vld [vmem:[%s1169 + $0x8] sm:$0xf]
        %v1173 = vld [vmem:[%s1169 + $0xc] sm:$0xf]
        %s1174 = scalar_lea.vmem %s876, 1
        %v1175 = vld [vmem:[%s1174] sm:$0x1]
        %v1177 = vperm.slane %v1175, 0
        %v1183 = vunpack.c.l.b16 %v1170
        %v1184 = vunpack.c.l.b16 %v1171
        %v1185 = vunpack.c.l.b16 %v1172
        %v1186 = vunpack.c.l.b16 %v1173
        %v1187 = vpack.c.b16 %v1184, %v1183
        %v1188 = vpack.c.b16 %v1186, %v1185
        %1191 = vmatpush.bf16.msra.mxu0 0
        %1192 = vmatpush.bf16.msra.mxu0 0
        %1193 = vmatpush.bf16.msra.mxu0 0
        %1194 = vmatpush.bf16.msra.mxu0 0
        %1195 = vmatpush.bf16.msra.mxu0 0
        %1196 = vmatpush.bf16.msra.mxu0 0
        %1197 = vmatpush.bf16.msra.mxu0 %v1188
        %1198 = vmatpush.bf16.msra.mxu0 %v1187
        %1199 = vmatmul.bf16.gmra.mxu0 %v1012
        %v1200 = vpop.f32.mrf.mxu0
        %v1201 = vadd.f32 %v1177, %v1200
        %v1202 = vpop.f32.mrf.mxu0
        %1203 = vdwg.mxu0
        %s1204 = scalar_lea.vmem %s872, 80
        %v1205 = vld [vmem:[%s1204] sm:$0xf]
        %v1206 = vld [vmem:[%s1204 + $0x4] sm:$0xf]
        %v1207 = vld [vmem:[%s1204 + $0x8] sm:$0xf]
        %v1208 = vld [vmem:[%s1204 + $0xc] sm:$0xf]
        %s1209 = scalar_lea.vmem %s876, 5
        %v1210 = vld [vmem:[%s1209] sm:$0x1]
        %v1212 = vperm.slane %v1210, 0
        %v1218 = vunpack.c.l.b16 %v1205
        %v1219 = vunpack.c.l.b16 %v1206
        %v1220 = vunpack.c.l.b16 %v1207
        %v1221 = vunpack.c.l.b16 %v1208
        %v1222 = vpack.c.b16 %v1219, %v1218
        %v1223 = vpack.c.b16 %v1221, %v1220
        %1226 = vmatpush.bf16.msra.mxu0 0
        %1227 = vmatpush.bf16.msra.mxu0 0
        %1228 = vmatpush.bf16.msra.mxu0 0
        %1229 = vmatpush.bf16.msra.mxu0 0
        %1230 = vmatpush.bf16.msra.mxu0 0
        %1231 = vmatpush.bf16.msra.mxu0 0
        %1232 = vmatpush.bf16.msra.mxu0 %v1223
        %1233 = vmatpush.bf16.msra.mxu0 %v1222
        %1234 = vmatmul.bf16.gmra.mxu0 %v1012
        %v1235 = vpop.f32.mrf.mxu0
        %v1236 = vadd.f32 %v1212, %v1235
        %v1237 = vpop.f32.mrf.mxu0
        %1238 = vdwg.mxu0
        %s1239 = scalar_lea.vmem %s872, 144
        %v1240 = vld [vmem:[%s1239] sm:$0xf]
        %v1241 = vld [vmem:[%s1239 + $0x4] sm:$0xf]
        %v1242 = vld [vmem:[%s1239 + $0x8] sm:$0xf]
        %v1243 = vld [vmem:[%s1239 + $0xc] sm:$0xf]
        %s1244 = scalar_lea.vmem %s876, 9
        %v1245 = vld [vmem:[%s1244] sm:$0x1]
        %v1247 = vperm.slane %v1245, 0
        %v1253 = vunpack.c.l.b16 %v1240
        %v1254 = vunpack.c.l.b16 %v1241
        %v1255 = vunpack.c.l.b16 %v1242
        %v1256 = vunpack.c.l.b16 %v1243
        %v1257 = vpack.c.b16 %v1254, %v1253
        %v1258 = vpack.c.b16 %v1256, %v1255
        %1261 = vmatpush.bf16.msra.mxu0 0
        %1262 = vmatpush.bf16.msra.mxu0 0
        %1263 = vmatpush.bf16.msra.mxu0 0
        %1264 = vmatpush.bf16.msra.mxu0 0
        %1265 = vmatpush.bf16.msra.mxu0 0
        %1266 = vmatpush.bf16.msra.mxu0 0
        %1267 = vmatpush.bf16.msra.mxu0 %v1258
        %1268 = vmatpush.bf16.msra.mxu0 %v1257
        %1269 = vmatmul.bf16.gmra.mxu0 %v1012
        %v1270 = vpop.f32.mrf.mxu0
        %v1271 = vadd.f32 %v1247, %v1270
        %v1272 = vpop.f32.mrf.mxu0
        %1273 = vdwg.mxu0
        %v1274 = vpack.c.bf16 %v1201, %v1201
        %v1275 = vpack.c.bf16 %v1236, %v1236
        %v1277 = vsel %vm1099, %v1274, 0
        %v1280 = vsel %vm1099, %v1275, 0
        %1282 = vmatpush.bf16.xpose.msra.mxu0 0
        %1283 = vmatpush.bf16.xpose.msra.mxu0 0
        %1284 = vmatpush.bf16.xpose.msra.mxu0 0
        %1285 = vmatpush.bf16.xpose.msra.mxu0 0
        %1286 = vmatpush.bf16.xpose.msra.mxu0 0
        %1287 = vmatpush.bf16.xpose.msra.mxu0 0
        %1288 = vmatpush.bf16.xpose.msra.mxu0 0
        %1289 = vmatpush.bf16.xpose.msra.mxu0 %v1280
        %1290 = vmatmul.bf16.gmra.mxu0 %v1277
        %v1291 = vpop.f32.mrf.mxu0
        %v1292 = vadd.f32 0.0, %v1291
        %v1293 = vpop.f32.mrf.mxu0
        %1294 = vdwg.mxu0
        %v1295 = vmul.f32 %v1292, 0.35355338
        %v1296 = vadd.f32 %v1295, %v945
        %v1297 = vsel %vm1099, %v1296, -inf
        %1298 = vmax.xlane.f32.xlu0 %v1297
        %v1299 = vpop.xlane.xlu0 %1298
        %v1300 = vsub.f32 %v1296, %v1299
        %v1301 = vmul.f32 %v1300, 1.442695
        %v1302 = vpow.pop %v1301
        %v1303 = vsel %vm1099, %v1302, 0.0
        %1304 = vadd.xlane.f32.xlu0 %v1303
        %v1305 = vpop.xlane.xlu0 %1304
        %v1306 = vrcp.pop %v1305
        %v1307 = vmul.f32 %v1305, %v1306
        %v1308 = vsub.f32 1.0, %v1307
        %v1309 = vmul.f32 %v1306, %v1308
        %v1310 = vadd.f32 %v1306, %v1309
        %vm1311 = vweird.f32 %v1305
        %vm1312 = vweird.f32 %v1306
        %vm1313 = vmor %vm1311, %vm1312
        %v1314 = vsel %vm1313, %v1306, %v1310
        %v1315 = vand.u32 2147483647, %v1305
        %vm1316 = vcmp.eq.f32.partialorder %v1315, 8.507059e+37
        %v1317 = vand.u32 %v1305, 2147483648
        %v1318 = vor.u32 1.1754944e-38, %v1317
        %v1319 = vsel %vm1316, %v1318, %v1314
        %v1320 = vmul.f32 %v1302, %v1319
        %v1321 = vpack.c.bf16 %v1320, %v1320
        %v1322 = vpack.c.bf16 %v1271, %v1271
        %v1324 = vsel %vm1099, %v1321, 0
        %v1327 = vsel %vm1150, %v1322, 0
        %1329 = vmatpush.bf16.msra.mxu0 0
        %1330 = vmatpush.bf16.msra.mxu0 0
        %1331 = vmatpush.bf16.msra.mxu0 0
        %1332 = vmatpush.bf16.msra.mxu0 0
        %1333 = vmatpush.bf16.msra.mxu0 0
        %1334 = vmatpush.bf16.msra.mxu0 0
        %1335 = vmatpush.bf16.msra.mxu0 0
        %1336 = vmatpush.bf16.msra.mxu0 %v1327
        %1337 = vmatmul.bf16.gmra.mxu0 %v1324
        %v1338 = vpop.f32.mrf.mxu0
        %v1339 = vadd.f32 0.0, %v1338
        %v1340 = vpop.f32.mrf.mxu0
        %1341 = vdwg.mxu0
        %v1342 = vpack.c.bf16 %v1339, %v1339
        %s1343 = scalar_lea.vmem %s881, 4
        %v1344 = vld [vmem:[%s1343] sm:$0xf]
        %v1346 = vsel %vm1099, %v1342, 0
        %v1349 = vsel %vm1150, %v1344, 0
        %1351 = vmatpush.bf16.msra.mxu0 0
        %1352 = vmatpush.bf16.msra.mxu0 0
        %1353 = vmatpush.bf16.msra.mxu0 0
        %1354 = vmatpush.bf16.msra.mxu0 0
        %1355 = vmatpush.bf16.msra.mxu0 0
        %1356 = vmatpush.bf16.msra.mxu0 0
        %1357 = vmatpush.bf16.msra.mxu0 0
        %1358 = vmatpush.bf16.msra.mxu0 %v1349
        %1359 = vmatmul.bf16.gmra.mxu0 %v1346
        %v1360 = vpop.f32.mrf.mxu0
        %v1361 = vadd.f32 0.0, %v1360
        %v1362 = vpop.f32.mrf.mxu0
        %1363 = vdwg.mxu0
        %v1365 = vsel %vm1099, %v1167, 0
        %v1368 = vsel %vm1150, %v1168, 0
        %1370 = vmatpush.bf16.msra.mxu0 0
        %1371 = vmatpush.bf16.msra.mxu0 0
        %1372 = vmatpush.bf16.msra.mxu0 0
        %1373 = vmatpush.bf16.msra.mxu0 0
        %1374 = vmatpush.bf16.msra.mxu0 0
        %1375 = vmatpush.bf16.msra.mxu0 0
        %1376 = vmatpush.bf16.msra.mxu0 0
        %1377 = vmatpush.bf16.msra.mxu0 %v1368
        %1378 = vmatmul.bf16.gmra.mxu0 %v1365
        %v1379 = vpop.f32.mrf.mxu0
        %v1380 = vadd.f32 %v1361, %v1379
        %v1381 = vpop.f32.mrf.mxu0
        %1382 = vdwg.mxu0
        %s1383 = scalar_lea.vmem %s872, 32
        %v1384 = vld [vmem:[%s1383] sm:$0xf]
        %v1385 = vld [vmem:[%s1383 + $0x4] sm:$0xf]
        %v1386 = vld [vmem:[%s1383 + $0x8] sm:$0xf]
        %v1387 = vld [vmem:[%s1383 + $0xc] sm:$0xf]
        %s1388 = scalar_lea.vmem %s876, 2
        %v1389 = vld [vmem:[%s1388] sm:$0x1]
        %v1391 = vperm.slane %v1389, 0
        %v1397 = vunpack.c.l.b16 %v1384
        %v1398 = vunpack.c.l.b16 %v1385
        %v1399 = vunpack.c.l.b16 %v1386
        %v1400 = vunpack.c.l.b16 %v1387
        %v1401 = vpack.c.b16 %v1398, %v1397
        %v1402 = vpack.c.b16 %v1400, %v1399
        %1405 = vmatpush.bf16.msra.mxu0 0
        %1406 = vmatpush.bf16.msra.mxu0 0
        %1407 = vmatpush.bf16.msra.mxu0 0
        %1408 = vmatpush.bf16.msra.mxu0 0
        %1409 = vmatpush.bf16.msra.mxu0 0
        %1410 = vmatpush.bf16.msra.mxu0 0
        %1411 = vmatpush.bf16.msra.mxu0 %v1402
        %1412 = vmatpush.bf16.msra.mxu0 %v1401
        %1413 = vmatmul.bf16.gmra.mxu0 %v1012
        %v1414 = vpop.f32.mrf.mxu0
        %v1415 = vadd.f32 %v1391, %v1414
        %v1416 = vpop.f32.mrf.mxu0
        %1417 = vdwg.mxu0
        %s1418 = scalar_lea.vmem %s872, 96
        %v1419 = vld [vmem:[%s1418] sm:$0xf]
        %v1420 = vld [vmem:[%s1418 + $0x4] sm:$0xf]
        %v1421 = vld [vmem:[%s1418 + $0x8] sm:$0xf]
        %v1422 = vld [vmem:[%s1418 + $0xc] sm:$0xf]
        %s1423 = scalar_lea.vmem %s876, 6
        %v1424 = vld [vmem:[%s1423] sm:$0x1]
        %v1426 = vperm.slane %v1424, 0
        %v1432 = vunpack.c.l.b16 %v1419
        %v1433 = vunpack.c.l.b16 %v1420
        %v1434 = vunpack.c.l.b16 %v1421
        %v1435 = vunpack.c.l.b16 %v1422
        %v1436 = vpack.c.b16 %v1433, %v1432
        %v1437 = vpack.c.b16 %v1435, %v1434
        %1440 = vmatpush.bf16.msra.mxu0 0
        %1441 = vmatpush.bf16.msra.mxu0 0
        %1442 = vmatpush.bf16.msra.mxu0 0
        %1443 = vmatpush.bf16.msra.mxu0 0
        %1444 = vmatpush.bf16.msra.mxu0 0
        %1445 = vmatpush.bf16.msra.mxu0 0
        %1446 = vmatpush.bf16.msra.mxu0 %v1437
        %1447 = vmatpush.bf16.msra.mxu0 %v1436
        %1448 = vmatmul.bf16.gmra.mxu0 %v1012
        %v1449 = vpop.f32.mrf.mxu0
        %v1450 = vadd.f32 %v1426, %v1449
        %v1451 = vpop.f32.mrf.mxu0
        %1452 = vdwg.mxu0
        %s1453 = scalar_lea.vmem %s872, 160
        %v1454 = vld [vmem:[%s1453] sm:$0xf]
        %v1455 = vld [vmem:[%s1453 + $0x4] sm:$0xf]
        %v1456 = vld [vmem:[%s1453 + $0x8] sm:$0xf]
        %v1457 = vld [vmem:[%s1453 + $0xc] sm:$0xf]
        %s1458 = scalar_lea.vmem %s876, 10
        %v1459 = vld [vmem:[%s1458] sm:$0x1]
        %v1461 = vperm.slane %v1459, 0
        %v1467 = vunpack.c.l.b16 %v1454
        %v1468 = vunpack.c.l.b16 %v1455
        %v1469 = vunpack.c.l.b16 %v1456
        %v1470 = vunpack.c.l.b16 %v1457
        %v1471 = vpack.c.b16 %v1468, %v1467
        %v1472 = vpack.c.b16 %v1470, %v1469
        %1475 = vmatpush.bf16.msra.mxu0 0
        %1476 = vmatpush.bf16.msra.mxu0 0
        %1477 = vmatpush.bf16.msra.mxu0 0
        %1478 = vmatpush.bf16.msra.mxu0 0
        %1479 = vmatpush.bf16.msra.mxu0 0
        %1480 = vmatpush.bf16.msra.mxu0 0
        %1481 = vmatpush.bf16.msra.mxu0 %v1472
        %1482 = vmatpush.bf16.msra.mxu0 %v1471
        %1483 = vmatmul.bf16.gmra.mxu0 %v1012
        %v1484 = vpop.f32.mrf.mxu0
        %v1485 = vadd.f32 %v1461, %v1484
        %v1486 = vpop.f32.mrf.mxu0
        %1487 = vdwg.mxu0
        %v1488 = vpack.c.bf16 %v1415, %v1415
        %v1489 = vpack.c.bf16 %v1450, %v1450
        %v1491 = vsel %vm1099, %v1488, 0
        %v1494 = vsel %vm1099, %v1489, 0
        %1496 = vmatpush.bf16.xpose.msra.mxu0 0
        %1497 = vmatpush.bf16.xpose.msra.mxu0 0
        %1498 = vmatpush.bf16.xpose.msra.mxu0 0
        %1499 = vmatpush.bf16.xpose.msra.mxu0 0
        %1500 = vmatpush.bf16.xpose.msra.mxu0 0
        %1501 = vmatpush.bf16.xpose.msra.mxu0 0
        %1502 = vmatpush.bf16.xpose.msra.mxu0 0
        %1503 = vmatpush.bf16.xpose.msra.mxu0 %v1494
        %1504 = vmatmul.bf16.gmra.mxu0 %v1491
        %v1505 = vpop.f32.mrf.mxu0
        %v1506 = vadd.f32 0.0, %v1505
        %v1507 = vpop.f32.mrf.mxu0
        %1508 = vdwg.mxu0
        %v1509 = vmul.f32 %v1506, 0.35355338
        %v1510 = vadd.f32 %v1509, %v945
        %v1511 = vsel %vm1099, %v1510, -inf
        %1512 = vmax.xlane.f32.xlu0 %v1511
        %v1513 = vpop.xlane.xlu0 %1512
        %v1514 = vsub.f32 %v1510, %v1513
        %v1515 = vmul.f32 %v1514, 1.442695
        %v1516 = vpow.pop %v1515
        %v1517 = vsel %vm1099, %v1516, 0.0
        %1518 = vadd.xlane.f32.xlu0 %v1517
        %v1519 = vpop.xlane.xlu0 %1518
        %v1520 = vrcp.pop %v1519
        %v1521 = vmul.f32 %v1519, %v1520
        %v1522 = vsub.f32 1.0, %v1521
        %v1523 = vmul.f32 %v1520, %v1522
        %v1524 = vadd.f32 %v1520, %v1523
        %vm1525 = vweird.f32 %v1519
        %vm1526 = vweird.f32 %v1520
        %vm1527 = vmor %vm1525, %vm1526
        %v1528 = vsel %vm1527, %v1520, %v1524
        %v1529 = vand.u32 2147483647, %v1519
        %vm1530 = vcmp.eq.f32.partialorder %v1529, 8.507059e+37
        %v1531 = vand.u32 %v1519, 2147483648
        %v1532 = vor.u32 1.1754944e-38, %v1531
        %v1533 = vsel %vm1530, %v1532, %v1528
        %v1534 = vmul.f32 %v1516, %v1533
        %v1535 = vpack.c.bf16 %v1534, %v1534
        %v1536 = vpack.c.bf16 %v1485, %v1485
        %v1538 = vsel %vm1099, %v1535, 0
        %v1541 = vsel %vm1150, %v1536, 0
        %1543 = vmatpush.bf16.msra.mxu0 0
        %1544 = vmatpush.bf16.msra.mxu0 0
        %1545 = vmatpush.bf16.msra.mxu0 0
        %1546 = vmatpush.bf16.msra.mxu0 0
        %1547 = vmatpush.bf16.msra.mxu0 0
        %1548 = vmatpush.bf16.msra.mxu0 0
        %1549 = vmatpush.bf16.msra.mxu0 0
        %1550 = vmatpush.bf16.msra.mxu0 %v1541
        %1551 = vmatmul.bf16.gmra.mxu0 %v1538
        %v1552 = vpop.f32.mrf.mxu0
        %v1553 = vadd.f32 0.0, %v1552
        %v1554 = vpop.f32.mrf.mxu0
        %1555 = vdwg.mxu0
        %v1556 = vpack.c.bf16 %v1553, %v1553
        %s1557 = scalar_lea.vmem %s881, 8
        %v1558 = vld [vmem:[%s1557] sm:$0xf]
        %v1560 = vsel %vm1099, %v1556, 0
        %v1563 = vsel %vm1150, %v1558, 0
        %1565 = vmatpush.bf16.msra.mxu0 0
        %1566 = vmatpush.bf16.msra.mxu0 0
        %1567 = vmatpush.bf16.msra.mxu0 0
        %1568 = vmatpush.bf16.msra.mxu0 0
        %1569 = vmatpush.bf16.msra.mxu0 0
        %1570 = vmatpush.bf16.msra.mxu0 0
        %1571 = vmatpush.bf16.msra.mxu0 0
        %1572 = vmatpush.bf16.msra.mxu0 %v1563
        %1573 = vmatmul.bf16.gmra.mxu0 %v1560
        %v1574 = vpop.f32.mrf.mxu0
        %v1575 = vadd.f32 0.0, %v1574
        %v1576 = vpop.f32.mrf.mxu0
        %1577 = vdwg.mxu0
        %v1578 = vadd.f32 %v1380, %v1575
        %s1579 = scalar_lea.vmem %s872, 48
        %v1580 = vld [vmem:[%s1579] sm:$0xf]
        %v1581 = vld [vmem:[%s1579 + $0x4] sm:$0xf]
        %v1582 = vld [vmem:[%s1579 + $0x8] sm:$0xf]
        %v1583 = vld [vmem:[%s1579 + $0xc] sm:$0xf]
        %s1584 = scalar_lea.vmem %s876, 3
        %v1585 = vld [vmem:[%s1584] sm:$0x1]
        %v1587 = vperm.slane %v1585, 0
        %v1593 = vunpack.c.l.b16 %v1580
        %v1594 = vunpack.c.l.b16 %v1581
        %v1595 = vunpack.c.l.b16 %v1582
        %v1596 = vunpack.c.l.b16 %v1583
        %v1597 = vpack.c.b16 %v1594, %v1593
        %v1598 = vpack.c.b16 %v1596, %v1595
        %1601 = vmatpush.bf16.msra.mxu0 0
        %1602 = vmatpush.bf16.msra.mxu0 0
        %1603 = vmatpush.bf16.msra.mxu0 0
        %1604 = vmatpush.bf16.msra.mxu0 0
        %1605 = vmatpush.bf16.msra.mxu0 0
        %1606 = vmatpush.bf16.msra.mxu0 0
        %1607 = vmatpush.bf16.msra.mxu0 %v1598
        %1608 = vmatpush.bf16.msra.mxu0 %v1597
        %1609 = vmatmul.bf16.gmra.mxu0 %v1012
        %v1610 = vpop.f32.mrf.mxu0
        %v1611 = vadd.f32 %v1587, %v1610
        %v1612 = vpop.f32.mrf.mxu0
        %1613 = vdwg.mxu0
        %s1614 = scalar_lea.vmem %s872, 112
        %v1615 = vld [vmem:[%s1614] sm:$0xf]
        %v1616 = vld [vmem:[%s1614 + $0x4] sm:$0xf]
        %v1617 = vld [vmem:[%s1614 + $0x8] sm:$0xf]
        %v1618 = vld [vmem:[%s1614 + $0xc] sm:$0xf]
        %s1619 = scalar_lea.vmem %s876, 7
        %v1620 = vld [vmem:[%s1619] sm:$0x1]
        %v1622 = vperm.slane %v1620, 0
        %v1628 = vunpack.c.l.b16 %v1615
        %v1629 = vunpack.c.l.b16 %v1616
        %v1630 = vunpack.c.l.b16 %v1617
        %v1631 = vunpack.c.l.b16 %v1618
        %v1632 = vpack.c.b16 %v1629, %v1628
        %v1633 = vpack.c.b16 %v1631, %v1630
        %1636 = vmatpush.bf16.msra.mxu0 0
        %1637 = vmatpush.bf16.msra.mxu0 0
        %1638 = vmatpush.bf16.msra.mxu0 0
        %1639 = vmatpush.bf16.msra.mxu0 0
        %1640 = vmatpush.bf16.msra.mxu0 0
        %1641 = vmatpush.bf16.msra.mxu0 0
        %1642 = vmatpush.bf16.msra.mxu0 %v1633
        %1643 = vmatpush.bf16.msra.mxu0 %v1632
        %1644 = vmatmul.bf16.gmra.mxu0 %v1012
        %v1645 = vpop.f32.mrf.mxu0
        %v1646 = vadd.f32 %v1622, %v1645
        %v1647 = vpop.f32.mrf.mxu0
        %1648 = vdwg.mxu0
        %s1649 = scalar_lea.vmem %s872, 176
        %v1650 = vld [vmem:[%s1649] sm:$0xf]
        %v1651 = vld [vmem:[%s1649 + $0x4] sm:$0xf]
        %v1652 = vld [vmem:[%s1649 + $0x8] sm:$0xf]
        %v1653 = vld [vmem:[%s1649 + $0xc] sm:$0xf]
        %s1654 = scalar_lea.vmem %s876, 11
        %v1655 = vld [vmem:[%s1654] sm:$0x1]
        %v1657 = vperm.slane %v1655, 0
        %v1663 = vunpack.c.l.b16 %v1650
        %v1664 = vunpack.c.l.b16 %v1651
        %v1665 = vunpack.c.l.b16 %v1652
        %v1666 = vunpack.c.l.b16 %v1653
        %v1667 = vpack.c.b16 %v1664, %v1663
        %v1668 = vpack.c.b16 %v1666, %v1665
        %1671 = vmatpush.bf16.msra.mxu0 0
        %1672 = vmatpush.bf16.msra.mxu0 0
        %1673 = vmatpush.bf16.msra.mxu0 0
        %1674 = vmatpush.bf16.msra.mxu0 0
        %1675 = vmatpush.bf16.msra.mxu0 0
        %1676 = vmatpush.bf16.msra.mxu0 0
        %1677 = vmatpush.bf16.msra.mxu0 %v1668
        %1678 = vmatpush.bf16.msra.mxu0 %v1667
        %1679 = vmatmul.bf16.gmra.mxu0 %v1012
        %v1680 = vpop.f32.mrf.mxu0
        %v1681 = vadd.f32 %v1657, %v1680
        %v1682 = vpop.f32.mrf.mxu0
        %1683 = vdwg.mxu0
        %v1684 = vpack.c.bf16 %v1611, %v1611
        %v1685 = vpack.c.bf16 %v1646, %v1646
        %v1687 = vsel %vm1099, %v1684, 0
        %v1690 = vsel %vm1099, %v1685, 0
        %1692 = vmatpush.bf16.xpose.msra.mxu0 0
        %1693 = vmatpush.bf16.xpose.msra.mxu0 0
        %1694 = vmatpush.bf16.xpose.msra.mxu0 0
        %1695 = vmatpush.bf16.xpose.msra.mxu0 0
        %1696 = vmatpush.bf16.xpose.msra.mxu0 0
        %1697 = vmatpush.bf16.xpose.msra.mxu0 0
        %1698 = vmatpush.bf16.xpose.msra.mxu0 0
        %1699 = vmatpush.bf16.xpose.msra.mxu0 %v1690
        %1700 = vmatmul.bf16.gmra.mxu0 %v1687
        %v1701 = vpop.f32.mrf.mxu0
        %v1702 = vadd.f32 0.0, %v1701
        %v1703 = vpop.f32.mrf.mxu0
        %1704 = vdwg.mxu0
        %v1705 = vmul.f32 %v1702, 0.35355338
        %v1706 = vadd.f32 %v1705, %v945
        %v1707 = vsel %vm1099, %v1706, -inf
        %1708 = vmax.xlane.f32.xlu0 %v1707
        %v1709 = vpop.xlane.xlu0 %1708
        %v1710 = vsub.f32 %v1706, %v1709
        %v1711 = vmul.f32 %v1710, 1.442695
        %v1712 = vpow.pop %v1711
        %v1713 = vsel %vm1099, %v1712, 0.0
        %1714 = vadd.xlane.f32.xlu0 %v1713
        %v1715 = vpop.xlane.xlu0 %1714
        %v1716 = vrcp.pop %v1715
        %v1717 = vmul.f32 %v1715, %v1716
        %v1718 = vsub.f32 1.0, %v1717
        %v1719 = vmul.f32 %v1716, %v1718
        %v1720 = vadd.f32 %v1716, %v1719
        %vm1721 = vweird.f32 %v1715
        %vm1722 = vweird.f32 %v1716
        %vm1723 = vmor %vm1721, %vm1722
        %v1724 = vsel %vm1723, %v1716, %v1720
        %v1725 = vand.u32 2147483647, %v1715
        %vm1726 = vcmp.eq.f32.partialorder %v1725, 8.507059e+37
        %v1727 = vand.u32 %v1715, 2147483648
        %v1728 = vor.u32 1.1754944e-38, %v1727
        %v1729 = vsel %vm1726, %v1728, %v1724
        %v1730 = vmul.f32 %v1712, %v1729
        %v1731 = vpack.c.bf16 %v1730, %v1730
        %v1732 = vpack.c.bf16 %v1681, %v1681
        %v1734 = vsel %vm1099, %v1731, 0
        %v1737 = vsel %vm1150, %v1732, 0
        %1739 = vmatpush.bf16.msra.mxu0 0
        %1740 = vmatpush.bf16.msra.mxu0 0
        %1741 = vmatpush.bf16.msra.mxu0 0
        %1742 = vmatpush.bf16.msra.mxu0 0
        %1743 = vmatpush.bf16.msra.mxu0 0
        %1744 = vmatpush.bf16.msra.mxu0 0
        %1745 = vmatpush.bf16.msra.mxu0 0
        %1746 = vmatpush.bf16.msra.mxu0 %v1737
        %1747 = vmatmul.bf16.gmra.mxu0 %v1734
        %v1748 = vpop.f32.mrf.mxu0
        %v1749 = vadd.f32 0.0, %v1748
        %v1750 = vpop.f32.mrf.mxu0
        %1751 = vdwg.mxu0
        %v1752 = vpack.c.bf16 %v1749, %v1749
        %s1753 = scalar_lea.vmem %s881, 12
        %v1754 = vld [vmem:[%s1753] sm:$0xf]
        %v1756 = vsel %vm1099, %v1752, 0
        %v1759 = vsel %vm1150, %v1754, 0
        %1761 = vmatpush.bf16.msra.mxu0 0
        %1762 = vmatpush.bf16.msra.mxu0 0
        %1763 = vmatpush.bf16.msra.mxu0 0
        %1764 = vmatpush.bf16.msra.mxu0 0
        %1765 = vmatpush.bf16.msra.mxu0 0
        %1766 = vmatpush.bf16.msra.mxu0 0
        %1767 = vmatpush.bf16.msra.mxu0 0
        %1768 = vmatpush.bf16.msra.mxu0 %v1759
        %1769 = vmatmul.bf16.gmra.mxu0 %v1756
        %v1770 = vpop.f32.mrf.mxu0
        %v1771 = vadd.f32 0.0, %v1770
        %v1772 = vpop.f32.mrf.mxu0
        %1773 = vdwg.mxu0
        %v1774 = vadd.f32 %v1578, %v1771
        %v1775 = vadd.f32 %v949, %v1774
        %v1776 = vld [vmem:[%s884] sm:$0x1]
        %v1778 = vperm.slane %v1776, 0
        %v1780 = vadd.f32 %v1775, %v1778
        %s1781 = scalar_lea.vmem %s921, 1
        %v1782 = vld [vmem:[%s1781] sm:$0x1]
        %s1783 = scalar_lea.vmem %s925, 1
        %v1784 = vld [vmem:[%s1783] sm:$0x1]
        %v1785 = vsel %vm952, %v1780, 0.0
        %1786 = vadd.xlane.f32.xlu0 %v1785
        %v1787 = vpop.xlane.xlu0 %1786
        %v1788 = vmul.f32 %v1787, %v962
        %v1789 = vsub.f32 %v1780, %v1788
        %v1790 = vmul.f32 %v1789, %v1789
        %v1791 = vsel %vm952, %v1790, 0.0
        %1792 = vadd.xlane.f32.xlu0 %v1791
        %v1793 = vpop.xlane.xlu0 %1792
        %v1794 = vmul.f32 %v1793, %v962
        %v1795 = vadd.f32 %v1794, 1e-06
        %v1796 = vrsqrt.pop %v1795
        %v1797 = vmul.f32 %v1796, %v1795
        %v1798 = vmul.f32 %v1797, %v1796
        %v1799 = vmul.f32 0.5, %v1798
        %v1800 = vsub.f32 1.5, %v1799
        %v1801 = vmul.f32 %v1796, %v1800
        %vm1802 = vweird.f32 %v1795
        %vm1803 = vweird.f32 %v1796
        %vm1804 = vmor %vm1802, %vm1803
        %v1805 = vsel %vm1804, %v1796, %v1801
        %v1806 = vmul.f32 %v1789, %v1805
        %v1808 = vperm.slane %v1782, 0
        %v1810 = vmul.f32 %v1806, %v1808
        %v1812 = vperm.slane %v1784, 0
        %v1814 = vadd.f32 %v1810, %v1812
        %v1815 = vld [vmem:[%s861] sm:$0xff]
        %v1816 = vpack.c.bf16 %v1814, %v1814
        %v1817 = vpack.c.bf16 %v1815, %v1815
        %v1818 = vld [vmem:[%s889] sm:$0xf]
        %v1819 = vld [vmem:[%s889 + $0x4] sm:$0xf]
        %v1820 = vld [vmem:[%s889 + $0x8] sm:$0xf]
        %v1821 = vld [vmem:[%s889 + $0xc] sm:$0xf]
        %v1822 = vld [vmem:[%s893] sm:$0x1]
        %v1824 = vperm.slane %v1822, 0
        %v1830 = vunpack.c.l.b16 %v1818
        %v1831 = vunpack.c.l.b16 %v1819
        %v1832 = vunpack.c.l.b16 %v1820
        %v1833 = vunpack.c.l.b16 %v1821
        %v1834 = vpack.c.b16 %v1831, %v1830
        %v1835 = vpack.c.b16 %v1833, %v1832
        %v1839 = vsel %vm952, %v1816, 0
        %1841 = vmatpush.bf16.msra.mxu0 0
        %1842 = vmatpush.bf16.msra.mxu0 0
        %1843 = vmatpush.bf16.msra.mxu0 0
        %1844 = vmatpush.bf16.msra.mxu0 0
        %1845 = vmatpush.bf16.msra.mxu0 0
        %1846 = vmatpush.bf16.msra.mxu0 0
        %1847 = vmatpush.bf16.msra.mxu0 %v1835
        %1848 = vmatpush.bf16.msra.mxu0 %v1834
        %1849 = vmatmul.bf16.gmra.mxu0 %v1839
        %v1850 = vpop.f32.mrf.mxu0
        %v1851 = vadd.f32 %v1824, %v1850
        %v1852 = vpop.f32.mrf.mxu0
        %1853 = vdwg.mxu0
        %s1854 = scalar_lea.vmem %s889, 64
        %v1855 = vld [vmem:[%s1854] sm:$0xf]
        %v1856 = vld [vmem:[%s1854 + $0x4] sm:$0xf]
        %v1857 = vld [vmem:[%s1854 + $0x8] sm:$0xf]
        %v1858 = vld [vmem:[%s1854 + $0xc] sm:$0xf]
        %s1859 = scalar_lea.vmem %s893, 4
        %v1860 = vld [vmem:[%s1859] sm:$0x1]
        %v1862 = vperm.slane %v1860, 0
        %v1868 = vunpack.c.l.b16 %v1855
        %v1869 = vunpack.c.l.b16 %v1856
        %v1870 = vunpack.c.l.b16 %v1857
        %v1871 = vunpack.c.l.b16 %v1858
        %v1872 = vpack.c.b16 %v1869, %v1868
        %v1873 = vpack.c.b16 %v1871, %v1870
        %v1877 = vsel %vm952, %v1817, 0
        %1879 = vmatpush.bf16.msra.mxu0 0
        %1880 = vmatpush.bf16.msra.mxu0 0
        %1881 = vmatpush.bf16.msra.mxu0 0
        %1882 = vmatpush.bf16.msra.mxu0 0
        %1883 = vmatpush.bf16.msra.mxu0 0
        %1884 = vmatpush.bf16.msra.mxu0 0
        %1885 = vmatpush.bf16.msra.mxu0 %v1873
        %1886 = vmatpush.bf16.msra.mxu0 %v1872
        %1887 = vmatmul.bf16.gmra.mxu0 %v1877
        %v1888 = vpop.f32.mrf.mxu0
        %v1889 = vadd.f32 %v1862, %v1888
        %v1890 = vpop.f32.mrf.mxu0
        %1891 = vdwg.mxu0
        %s1892 = scalar_lea.vmem %s889, 128
        %v1893 = vld [vmem:[%s1892] sm:$0xf]
        %v1894 = vld [vmem:[%s1892 + $0x4] sm:$0xf]
        %v1895 = vld [vmem:[%s1892 + $0x8] sm:$0xf]
        %v1896 = vld [vmem:[%s1892 + $0xc] sm:$0xf]
        %s1897 = scalar_lea.vmem %s893, 8
        %v1898 = vld [vmem:[%s1897] sm:$0x1]
        %v1900 = vperm.slane %v1898, 0
        %v1906 = vunpack.c.l.b16 %v1893
        %v1907 = vunpack.c.l.b16 %v1894
        %v1908 = vunpack.c.l.b16 %v1895
        %v1909 = vunpack.c.l.b16 %v1896
        %v1910 = vpack.c.b16 %v1907, %v1906
        %v1911 = vpack.c.b16 %v1909, %v1908
        %1914 = vmatpush.bf16.msra.mxu0 0
        %1915 = vmatpush.bf16.msra.mxu0 0
        %1916 = vmatpush.bf16.msra.mxu0 0
        %1917 = vmatpush.bf16.msra.mxu0 0
        %1918 = vmatpush.bf16.msra.mxu0 0
        %1919 = vmatpush.bf16.msra.mxu0 0
        %1920 = vmatpush.bf16.msra.mxu0 %v1911
        %1921 = vmatpush.bf16.msra.mxu0 %v1910
        %1922 = vmatmul.bf16.gmra.mxu0 %v1877
        %v1923 = vpop.f32.mrf.mxu0
        %v1924 = vadd.f32 %v1900, %v1923
        %v1925 = vpop.f32.mrf.mxu0
        %1926 = vdwg.mxu0
        %v1927 = vpack.c.bf16 %v1851, %v1851
        %v1928 = vpack.c.bf16 %v1889, %v1889
        %v1930 = vsel %vm1099, %v1927, 0
        %v1933 = vsel %vm1099, %v1928, 0
        %1935 = vmatpush.bf16.xpose.msra.mxu0 0
        %1936 = vmatpush.bf16.xpose.msra.mxu0 0
        %1937 = vmatpush.bf16.xpose.msra.mxu0 0
        %1938 = vmatpush.bf16.xpose.msra.mxu0 0
        %1939 = vmatpush.bf16.xpose.msra.mxu0 0
        %1940 = vmatpush.bf16.xpose.msra.mxu0 0
        %1941 = vmatpush.bf16.xpose.msra.mxu0 0
        %1942 = vmatpush.bf16.xpose.msra.mxu0 %v1933
        %1943 = vmatmul.bf16.gmra.mxu0 %v1930
        %v1944 = vpop.f32.mrf.mxu0
        %v1945 = vadd.f32 0.0, %v1944
        %v1946 = vpop.f32.mrf.mxu0
        %1947 = vdwg.mxu0
        %v1948 = vmul.f32 %v1945, 0.35355338
        %v1950 = vperm.slane %v948, 0
        %v1952 = vadd.f32 %v1948, %v1950
        %v1953 = vsel %vm1099, %v1952, -inf
        %1954 = vmax.xlane.f32.xlu0 %v1953
        %v1955 = vpop.xlane.xlu0 %1954
        %v1956 = vsub.f32 %v1952, %v1955
        %v1957 = vmul.f32 %v1956, 1.442695
        %v1958 = vpow.pop %v1957
        %v1959 = vsel %vm1099, %v1958, 0.0
        %1960 = vadd.xlane.f32.xlu0 %v1959
        %v1961 = vpop.xlane.xlu0 %1960
        %v1962 = vrcp.pop %v1961
        %v1963 = vmul.f32 %v1961, %v1962
        %v1964 = vsub.f32 1.0, %v1963
        %v1965 = vmul.f32 %v1962, %v1964
        %v1966 = vadd.f32 %v1962, %v1965
        %vm1967 = vweird.f32 %v1961
        %vm1968 = vweird.f32 %v1962
        %vm1969 = vmor %vm1967, %vm1968
        %v1970 = vsel %vm1969, %v1962, %v1966
        %v1971 = vand.u32 2147483647, %v1961
        %vm1972 = vcmp.eq.f32.partialorder %v1971, 8.507059e+37
        %v1973 = vand.u32 %v1961, 2147483648
        %v1974 = vor.u32 1.1754944e-38, %v1973
        %v1975 = vsel %vm1972, %v1974, %v1970
        %v1976 = vmul.f32 %v1958, %v1975
        %v1977 = vpack.c.bf16 %v1976, %v1976
        %v1978 = vpack.c.bf16 %v1924, %v1924
        %v1980 = vsel %vm1099, %v1977, 0
        %v1983 = vsel %vm1150, %v1978, 0
        %1985 = vmatpush.bf16.msra.mxu0 0
        %1986 = vmatpush.bf16.msra.mxu0 0
        %1987 = vmatpush.bf16.msra.mxu0 0
        %1988 = vmatpush.bf16.msra.mxu0 0
        %1989 = vmatpush.bf16.msra.mxu0 0
        %1990 = vmatpush.bf16.msra.mxu0 0
        %1991 = vmatpush.bf16.msra.mxu0 0
        %1992 = vmatpush.bf16.msra.mxu0 %v1983
        %1993 = vmatmul.bf16.gmra.mxu0 %v1980
        %v1994 = vpop.f32.mrf.mxu0
        %v1995 = vadd.f32 0.0, %v1994
        %v1996 = vpop.f32.mrf.mxu0
        %1997 = vdwg.mxu0
        %v1998 = vpack.c.bf16 %v1995, %v1995
        %v1999 = vld [vmem:[%s898] sm:$0xf]
        %s2000 = scalar_lea.vmem %s889, 16
        %v2001 = vld [vmem:[%s2000] sm:$0xf]
        %v2002 = vld [vmem:[%s2000 + $0x4] sm:$0xf]
        %v2003 = vld [vmem:[%s2000 + $0x8] sm:$0xf]
        %v2004 = vld [vmem:[%s2000 + $0xc] sm:$0xf]
        %s2005 = scalar_lea.vmem %s893, 1
        %v2006 = vld [vmem:[%s2005] sm:$0x1]
        %v2008 = vperm.slane %v2006, 0
        %v2014 = vunpack.c.l.b16 %v2001
        %v2015 = vunpack.c.l.b16 %v2002
        %v2016 = vunpack.c.l.b16 %v2003
        %v2017 = vunpack.c.l.b16 %v2004
        %v2018 = vpack.c.b16 %v2015, %v2014
        %v2019 = vpack.c.b16 %v2017, %v2016
        %2022 = vmatpush.bf16.msra.mxu0 0
        %2023 = vmatpush.bf16.msra.mxu0 0
        %2024 = vmatpush.bf16.msra.mxu0 0
        %2025 = vmatpush.bf16.msra.mxu0 0
        %2026 = vmatpush.bf16.msra.mxu0 0
        %2027 = vmatpush.bf16.msra.mxu0 0
        %2028 = vmatpush.bf16.msra.mxu0 %v2019
        %2029 = vmatpush.bf16.msra.mxu0 %v2018
        %2030 = vmatmul.bf16.gmra.mxu0 %v1839
        %v2031 = vpop.f32.mrf.mxu0
        %v2032 = vadd.f32 %v2008, %v2031
        %v2033 = vpop.f32.mrf.mxu0
        %2034 = vdwg.mxu0
        %s2035 = scalar_lea.vmem %s889, 80
        %v2036 = vld [vmem:[%s2035] sm:$0xf]
        %v2037 = vld [vmem:[%s2035 + $0x4] sm:$0xf]
        %v2038 = vld [vmem:[%s2035 + $0x8] sm:$0xf]
        %v2039 = vld [vmem:[%s2035 + $0xc] sm:$0xf]
        %s2040 = scalar_lea.vmem %s893, 5
        %v2041 = vld [vmem:[%s2040] sm:$0x1]
        %v2043 = vperm.slane %v2041, 0
        %v2049 = vunpack.c.l.b16 %v2036
        %v2050 = vunpack.c.l.b16 %v2037
        %v2051 = vunpack.c.l.b16 %v2038
        %v2052 = vunpack.c.l.b16 %v2039
        %v2053 = vpack.c.b16 %v2050, %v2049
        %v2054 = vpack.c.b16 %v2052, %v2051
        %2057 = vmatpush.bf16.msra.mxu0 0
        %2058 = vmatpush.bf16.msra.mxu0 0
        %2059 = vmatpush.bf16.msra.mxu0 0
        %2060 = vmatpush.bf16.msra.mxu0 0
        %2061 = vmatpush.bf16.msra.mxu0 0
        %2062 = vmatpush.bf16.msra.mxu0 0
        %2063 = vmatpush.bf16.msra.mxu0 %v2054
        %2064 = vmatpush.bf16.msra.mxu0 %v2053
        %2065 = vmatmul.bf16.gmra.mxu0 %v1877
        %v2066 = vpop.f32.mrf.mxu0
        %v2067 = vadd.f32 %v2043, %v2066
        %v2068 = vpop.f32.mrf.mxu0
        %2069 = vdwg.mxu0
        %s2070 = scalar_lea.vmem %s889, 144
        %v2071 = vld [vmem:[%s2070] sm:$0xf]
        %v2072 = vld [vmem:[%s2070 + $0x4] sm:$0xf]
        %v2073 = vld [vmem:[%s2070 + $0x8] sm:$0xf]
        %v2074 = vld [vmem:[%s2070 + $0xc] sm:$0xf]
        %s2075 = scalar_lea.vmem %s893, 9
        %v2076 = vld [vmem:[%s2075] sm:$0x1]
        %v2078 = vperm.slane %v2076, 0
        %v2084 = vunpack.c.l.b16 %v2071
        %v2085 = vunpack.c.l.b16 %v2072
        %v2086 = vunpack.c.l.b16 %v2073
        %v2087 = vunpack.c.l.b16 %v2074
        %v2088 = vpack.c.b16 %v2085, %v2084
        %v2089 = vpack.c.b16 %v2087, %v2086
        %2092 = vmatpush.bf16.msra.mxu0 0
        %2093 = vmatpush.bf16.msra.mxu0 0
        %2094 = vmatpush.bf16.msra.mxu0 0
        %2095 = vmatpush.bf16.msra.mxu0 0
        %2096 = vmatpush.bf16.msra.mxu0 0
        %2097 = vmatpush.bf16.msra.mxu0 0
        %2098 = vmatpush.bf16.msra.mxu0 %v2089
        %2099 = vmatpush.bf16.msra.mxu0 %v2088
        %2100 = vmatmul.bf16.gmra.mxu0 %v1877
        %v2101 = vpop.f32.mrf.mxu0
        %v2102 = vadd.f32 %v2078, %v2101
        %v2103 = vpop.f32.mrf.mxu0
        %2104 = vdwg.mxu0
        %v2105 = vpack.c.bf16 %v2032, %v2032
        %v2106 = vpack.c.bf16 %v2067, %v2067
        %v2108 = vsel %vm1099, %v2105, 0
        %v2111 = vsel %vm1099, %v2106, 0
        %2113 = vmatpush.bf16.xpose.msra.mxu0 0
        %2114 = vmatpush.bf16.xpose.msra.mxu0 0
        %2115 = vmatpush.bf16.xpose.msra.mxu0 0
        %2116 = vmatpush.bf16.xpose.msra.mxu0 0
        %2117 = vmatpush.bf16.xpose.msra.mxu0 0
        %2118 = vmatpush.bf16.xpose.msra.mxu0 0
        %2119 = vmatpush.bf16.xpose.msra.mxu0 0
        %2120 = vmatpush.bf16.xpose.msra.mxu0 %v2111
        %2121 = vmatmul.bf16.gmra.mxu0 %v2108
        %v2122 = vpop.f32.mrf.mxu0
        %v2123 = vadd.f32 0.0, %v2122
        %v2124 = vpop.f32.mrf.mxu0
        %2125 = vdwg.mxu0
        %v2126 = vmul.f32 %v2123, 0.35355338
        %v2127 = vadd.f32 %v2126, %v1950
        %v2128 = vsel %vm1099, %v2127, -inf
        %2129 = vmax.xlane.f32.xlu0 %v2128
        %v2130 = vpop.xlane.xlu0 %2129
        %v2131 = vsub.f32 %v2127, %v2130
        %v2132 = vmul.f32 %v2131, 1.442695
        %v2133 = vpow.pop %v2132
        %v2134 = vsel %vm1099, %v2133, 0.0
        %2135 = vadd.xlane.f32.xlu0 %v2134
        %v2136 = vpop.xlane.xlu0 %2135
        %v2137 = vrcp.pop %v2136
        %v2138 = vmul.f32 %v2136, %v2137
        %v2139 = vsub.f32 1.0, %v2138
        %v2140 = vmul.f32 %v2137, %v2139
        %v2141 = vadd.f32 %v2137, %v2140
        %vm2142 = vweird.f32 %v2136
        %vm2143 = vweird.f32 %v2137
        %vm2144 = vmor %vm2142, %vm2143
        %v2145 = vsel %vm2144, %v2137, %v2141
        %v2146 = vand.u32 2147483647, %v2136
        %vm2147 = vcmp.eq.f32.partialorder %v2146, 8.507059e+37
        %v2148 = vand.u32 %v2136, 2147483648
        %v2149 = vor.u32 1.1754944e-38, %v2148
        %v2150 = vsel %vm2147, %v2149, %v2145
        %v2151 = vmul.f32 %v2133, %v2150
        %v2152 = vpack.c.bf16 %v2151, %v2151
        %v2153 = vpack.c.bf16 %v2102, %v2102
        %v2155 = vsel %vm1099, %v2152, 0
        %v2158 = vsel %vm1150, %v2153, 0
        %2160 = vmatpush.bf16.msra.mxu0 0
        %2161 = vmatpush.bf16.msra.mxu0 0
        %2162 = vmatpush.bf16.msra.mxu0 0
        %2163 = vmatpush.bf16.msra.mxu0 0
        %2164 = vmatpush.bf16.msra.mxu0 0
        %2165 = vmatpush.bf16.msra.mxu0 0
        %2166 = vmatpush.bf16.msra.mxu0 0
        %2167 = vmatpush.bf16.msra.mxu0 %v2158
        %2168 = vmatmul.bf16.gmra.mxu0 %v2155
        %v2169 = vpop.f32.mrf.mxu0
        %v2170 = vadd.f32 0.0, %v2169
        %v2171 = vpop.f32.mrf.mxu0
        %2172 = vdwg.mxu0
        %v2173 = vpack.c.bf16 %v2170, %v2170
        %s2174 = scalar_lea.vmem %s898, 4
        %v2175 = vld [vmem:[%s2174] sm:$0xf]
        %v2177 = vsel %vm1099, %v2173, 0
        %v2180 = vsel %vm1150, %v2175, 0
        %2182 = vmatpush.bf16.msra.mxu0 0
        %2183 = vmatpush.bf16.msra.mxu0 0
        %2184 = vmatpush.bf16.msra.mxu0 0
        %2185 = vmatpush.bf16.msra.mxu0 0
        %2186 = vmatpush.bf16.msra.mxu0 0
        %2187 = vmatpush.bf16.msra.mxu0 0
        %2188 = vmatpush.bf16.msra.mxu0 0
        %2189 = vmatpush.bf16.msra.mxu0 %v2180
        %2190 = vmatmul.bf16.gmra.mxu0 %v2177
        %v2191 = vpop.f32.mrf.mxu0
        %v2192 = vadd.f32 0.0, %v2191
        %v2193 = vpop.f32.mrf.mxu0
        %2194 = vdwg.mxu0
        %v2196 = vsel %vm1099, %v1998, 0
        %v2199 = vsel %vm1150, %v1999, 0
        %2201 = vmatpush.bf16.msra.mxu0 0
        %2202 = vmatpush.bf16.msra.mxu0 0
        %2203 = vmatpush.bf16.msra.mxu0 0
        %2204 = vmatpush.bf16.msra.mxu0 0
        %2205 = vmatpush.bf16.msra.mxu0 0
        %2206 = vmatpush.bf16.msra.mxu0 0
        %2207 = vmatpush.bf16.msra.mxu0 0
        %2208 = vmatpush.bf16.msra.mxu0 %v2199
        %2209 = vmatmul.bf16.gmra.mxu0 %v2196
        %v2210 = vpop.f32.mrf.mxu0
        %v2211 = vadd.f32 %v2192, %v2210
        %v2212 = vpop.f32.mrf.mxu0
        %2213 = vdwg.mxu0
        %s2214 = scalar_lea.vmem %s889, 32
        %v2215 = vld [vmem:[%s2214] sm:$0xf]
        %v2216 = vld [vmem:[%s2214 + $0x4] sm:$0xf]
        %v2217 = vld [vmem:[%s2214 + $0x8] sm:$0xf]
        %v2218 = vld [vmem:[%s2214 + $0xc] sm:$0xf]
        %s2219 = scalar_lea.vmem %s893, 2
        %v2220 = vld [vmem:[%s2219] sm:$0x1]
        %v2222 = vperm.slane %v2220, 0
        %v2228 = vunpack.c.l.b16 %v2215
        %v2229 = vunpack.c.l.b16 %v2216
        %v2230 = vunpack.c.l.b16 %v2217
        %v2231 = vunpack.c.l.b16 %v2218
        %v2232 = vpack.c.b16 %v2229, %v2228
        %v2233 = vpack.c.b16 %v2231, %v2230
        %2236 = vmatpush.bf16.msra.mxu0 0
        %2237 = vmatpush.bf16.msra.mxu0 0
        %2238 = vmatpush.bf16.msra.mxu0 0
        %2239 = vmatpush.bf16.msra.mxu0 0
        %2240 = vmatpush.bf16.msra.mxu0 0
        %2241 = vmatpush.bf16.msra.mxu0 0
        %2242 = vmatpush.bf16.msra.mxu0 %v2233
        %2243 = vmatpush.bf16.msra.mxu0 %v2232
        %2244 = vmatmul.bf16.gmra.mxu0 %v1839
        %v2245 = vpop.f32.mrf.mxu0
        %v2246 = vadd.f32 %v2222, %v2245
        %v2247 = vpop.f32.mrf.mxu0
        %2248 = vdwg.mxu0
        %s2249 = scalar_lea.vmem %s889, 96
        %v2250 = vld [vmem:[%s2249] sm:$0xf]
        %v2251 = vld [vmem:[%s2249 + $0x4] sm:$0xf]
        %v2252 = vld [vmem:[%s2249 + $0x8] sm:$0xf]
        %v2253 = vld [vmem:[%s2249 + $0xc] sm:$0xf]
        %s2254 = scalar_lea.vmem %s893, 6
        %v2255 = vld [vmem:[%s2254] sm:$0x1]
        %v2257 = vperm.slane %v2255, 0
        %v2263 = vunpack.c.l.b16 %v2250
        %v2264 = vunpack.c.l.b16 %v2251
        %v2265 = vunpack.c.l.b16 %v2252
        %v2266 = vunpack.c.l.b16 %v2253
        %v2267 = vpack.c.b16 %v2264, %v2263
        %v2268 = vpack.c.b16 %v2266, %v2265
        %2271 = vmatpush.bf16.msra.mxu0 0
        %2272 = vmatpush.bf16.msra.mxu0 0
        %2273 = vmatpush.bf16.msra.mxu0 0
        %2274 = vmatpush.bf16.msra.mxu0 0
        %2275 = vmatpush.bf16.msra.mxu0 0
        %2276 = vmatpush.bf16.msra.mxu0 0
        %2277 = vmatpush.bf16.msra.mxu0 %v2268
        %2278 = vmatpush.bf16.msra.mxu0 %v2267
        %2279 = vmatmul.bf16.gmra.mxu0 %v1877
        %v2280 = vpop.f32.mrf.mxu0
        %v2281 = vadd.f32 %v2257, %v2280
        %v2282 = vpop.f32.mrf.mxu0
        %2283 = vdwg.mxu0
        %s2284 = scalar_lea.vmem %s889, 160
        %v2285 = vld [vmem:[%s2284] sm:$0xf]
        %v2286 = vld [vmem:[%s2284 + $0x4] sm:$0xf]
        %v2287 = vld [vmem:[%s2284 + $0x8] sm:$0xf]
        %v2288 = vld [vmem:[%s2284 + $0xc] sm:$0xf]
        %s2289 = scalar_lea.vmem %s893, 10
        %v2290 = vld [vmem:[%s2289] sm:$0x1]
        %v2292 = vperm.slane %v2290, 0
        %v2298 = vunpack.c.l.b16 %v2285
        %v2299 = vunpack.c.l.b16 %v2286
        %v2300 = vunpack.c.l.b16 %v2287
        %v2301 = vunpack.c.l.b16 %v2288
        %v2302 = vpack.c.b16 %v2299, %v2298
        %v2303 = vpack.c.b16 %v2301, %v2300
        %2306 = vmatpush.bf16.msra.mxu0 0
        %2307 = vmatpush.bf16.msra.mxu0 0
        %2308 = vmatpush.bf16.msra.mxu0 0
        %2309 = vmatpush.bf16.msra.mxu0 0
        %2310 = vmatpush.bf16.msra.mxu0 0
        %2311 = vmatpush.bf16.msra.mxu0 0
        %2312 = vmatpush.bf16.msra.mxu0 %v2303
        %2313 = vmatpush.bf16.msra.mxu0 %v2302
        %2314 = vmatmul.bf16.gmra.mxu0 %v1877
        %v2315 = vpop.f32.mrf.mxu0
        %v2316 = vadd.f32 %v2292, %v2315
        %v2317 = vpop.f32.mrf.mxu0
        %2318 = vdwg.mxu0
        %v2319 = vpack.c.bf16 %v2246, %v2246
        %v2320 = vpack.c.bf16 %v2281, %v2281
        %v2322 = vsel %vm1099, %v2319, 0
        %v2325 = vsel %vm1099, %v2320, 0
        %2327 = vmatpush.bf16.xpose.msra.mxu0 0
        %2328 = vmatpush.bf16.xpose.msra.mxu0 0
        %2329 = vmatpush.bf16.xpose.msra.mxu0 0
        %2330 = vmatpush.bf16.xpose.msra.mxu0 0
        %2331 = vmatpush.bf16.xpose.msra.mxu0 0
        %2332 = vmatpush.bf16.xpose.msra.mxu0 0
        %2333 = vmatpush.bf16.xpose.msra.mxu0 0
        %2334 = vmatpush.bf16.xpose.msra.mxu0 %v2325
        %2335 = vmatmul.bf16.gmra.mxu0 %v2322
        %v2336 = vpop.f32.mrf.mxu0
        %v2337 = vadd.f32 0.0, %v2336
        %v2338 = vpop.f32.mrf.mxu0
        %2339 = vdwg.mxu0
        %v2340 = vmul.f32 %v2337, 0.35355338
        %v2341 = vadd.f32 %v2340, %v1950
        %v2342 = vsel %vm1099, %v2341, -inf
        %2343 = vmax.xlane.f32.xlu0 %v2342
        %v2344 = vpop.xlane.xlu0 %2343
        %v2345 = vsub.f32 %v2341, %v2344
        %v2346 = vmul.f32 %v2345, 1.442695
        %v2347 = vpow.pop %v2346
        %v2348 = vsel %vm1099, %v2347, 0.0
        %2349 = vadd.xlane.f32.xlu0 %v2348
        %v2350 = vpop.xlane.xlu0 %2349
        %v2351 = vrcp.pop %v2350
        %v2352 = vmul.f32 %v2350, %v2351
        %v2353 = vsub.f32 1.0, %v2352
        %v2354 = vmul.f32 %v2351, %v2353
        %v2355 = vadd.f32 %v2351, %v2354
        %vm2356 = vweird.f32 %v2350
        %vm2357 = vweird.f32 %v2351
        %vm2358 = vmor %vm2356, %vm2357
        %v2359 = vsel %vm2358, %v2351, %v2355
        %v2360 = vand.u32 2147483647, %v2350
        %vm2361 = vcmp.eq.f32.partialorder %v2360, 8.507059e+37
        %v2362 = vand.u32 %v2350, 2147483648
        %v2363 = vor.u32 1.1754944e-38, %v2362
        %v2364 = vsel %vm2361, %v2363, %v2359
        %v2365 = vmul.f32 %v2347, %v2364
        %v2366 = vpack.c.bf16 %v2365, %v2365
        %v2367 = vpack.c.bf16 %v2316, %v2316
        %v2369 = vsel %vm1099, %v2366, 0
        %v2372 = vsel %vm1150, %v2367, 0
        %2374 = vmatpush.bf16.msra.mxu0 0
        %2375 = vmatpush.bf16.msra.mxu0 0
        %2376 = vmatpush.bf16.msra.mxu0 0
        %2377 = vmatpush.bf16.msra.mxu0 0
        %2378 = vmatpush.bf16.msra.mxu0 0
        %2379 = vmatpush.bf16.msra.mxu0 0
        %2380 = vmatpush.bf16.msra.mxu0 0
        %2381 = vmatpush.bf16.msra.mxu0 %v2372
        %2382 = vmatmul.bf16.gmra.mxu0 %v2369
        %v2383 = vpop.f32.mrf.mxu0
        %v2384 = vadd.f32 0.0, %v2383
        %v2385 = vpop.f32.mrf.mxu0
        %2386 = vdwg.mxu0
        %v2387 = vpack.c.bf16 %v2384, %v2384
        %s2388 = scalar_lea.vmem %s898, 8
        %v2389 = vld [vmem:[%s2388] sm:$0xf]
        %v2391 = vsel %vm1099, %v2387, 0
        %v2394 = vsel %vm1150, %v2389, 0
        %2396 = vmatpush.bf16.msra.mxu0 0
        %2397 = vmatpush.bf16.msra.mxu0 0
        %2398 = vmatpush.bf16.msra.mxu0 0
        %2399 = vmatpush.bf16.msra.mxu0 0
        %2400 = vmatpush.bf16.msra.mxu0 0
        %2401 = vmatpush.bf16.msra.mxu0 0
        %2402 = vmatpush.bf16.msra.mxu0 0
        %2403 = vmatpush.bf16.msra.mxu0 %v2394
        %2404 = vmatmul.bf16.gmra.mxu0 %v2391
        %v2405 = vpop.f32.mrf.mxu0
        %v2406 = vadd.f32 0.0, %v2405
        %v2407 = vpop.f32.mrf.mxu0
        %2408 = vdwg.mxu0
        %v2409 = vadd.f32 %v2211, %v2406
        %s2410 = scalar_lea.vmem %s889, 48
        %v2411 = vld [vmem:[%s2410] sm:$0xf]
        %v2412 = vld [vmem:[%s2410 + $0x4] sm:$0xf]
        %v2413 = vld [vmem:[%s2410 + $0x8] sm:$0xf]
        %v2414 = vld [vmem:[%s2410 + $0xc] sm:$0xf]
        %s2415 = scalar_lea.vmem %s893, 3
        %v2416 = vld [vmem:[%s2415] sm:$0x1]
        %v2418 = vperm.slane %v2416, 0
        %v2424 = vunpack.c.l.b16 %v2411
        %v2425 = vunpack.c.l.b16 %v2412
        %v2426 = vunpack.c.l.b16 %v2413
        %v2427 = vunpack.c.l.b16 %v2414
        %v2428 = vpack.c.b16 %v2425, %v2424
        %v2429 = vpack.c.b16 %v2427, %v2426
        %2432 = vmatpush.bf16.msra.mxu0 0
        %2433 = vmatpush.bf16.msra.mxu0 0
        %2434 = vmatpush.bf16.msra.mxu0 0
        %2435 = vmatpush.bf16.msra.mxu0 0
        %2436 = vmatpush.bf16.msra.mxu0 0
        %2437 = vmatpush.bf16.msra.mxu0 0
        %2438 = vmatpush.bf16.msra.mxu0 %v2429
        %2439 = vmatpush.bf16.msra.mxu0 %v2428
        %2440 = vmatmul.bf16.gmra.mxu0 %v1839
        %v2441 = vpop.f32.mrf.mxu0
        %v2442 = vadd.f32 %v2418, %v2441
        %v2443 = vpop.f32.mrf.mxu0
        %2444 = vdwg.mxu0
        %s2445 = scalar_lea.vmem %s889, 112
        %v2446 = vld [vmem:[%s2445] sm:$0xf]
        %v2447 = vld [vmem:[%s2445 + $0x4] sm:$0xf]
        %v2448 = vld [vmem:[%s2445 + $0x8] sm:$0xf]
        %v2449 = vld [vmem:[%s2445 + $0xc] sm:$0xf]
        %s2450 = scalar_lea.vmem %s893, 7
        %v2451 = vld [vmem:[%s2450] sm:$0x1]
        %v2453 = vperm.slane %v2451, 0
        %v2459 = vunpack.c.l.b16 %v2446
        %v2460 = vunpack.c.l.b16 %v2447
        %v2461 = vunpack.c.l.b16 %v2448
        %v2462 = vunpack.c.l.b16 %v2449
        %v2463 = vpack.c.b16 %v2460, %v2459
        %v2464 = vpack.c.b16 %v2462, %v2461
        %2467 = vmatpush.bf16.msra.mxu0 0
        %2468 = vmatpush.bf16.msra.mxu0 0
        %2469 = vmatpush.bf16.msra.mxu0 0
        %2470 = vmatpush.bf16.msra.mxu0 0
        %2471 = vmatpush.bf16.msra.mxu0 0
        %2472 = vmatpush.bf16.msra.mxu0 0
        %2473 = vmatpush.bf16.msra.mxu0 %v2464
        %2474 = vmatpush.bf16.msra.mxu0 %v2463
        %2475 = vmatmul.bf16.gmra.mxu0 %v1877
        %v2476 = vpop.f32.mrf.mxu0
        %v2477 = vadd.f32 %v2453, %v2476
        %v2478 = vpop.f32.mrf.mxu0
        %2479 = vdwg.mxu0
        %s2480 = scalar_lea.vmem %s889, 176
        %v2481 = vld [vmem:[%s2480] sm:$0xf]
        %v2482 = vld [vmem:[%s2480 + $0x4] sm:$0xf]
        %v2483 = vld [vmem:[%s2480 + $0x8] sm:$0xf]
        %v2484 = vld [vmem:[%s2480 + $0xc] sm:$0xf]
        %s2485 = scalar_lea.vmem %s893, 11
        %v2486 = vld [vmem:[%s2485] sm:$0x1]
        %v2488 = vperm.slane %v2486, 0
        %v2494 = vunpack.c.l.b16 %v2481
        %v2495 = vunpack.c.l.b16 %v2482
        %v2496 = vunpack.c.l.b16 %v2483
        %v2497 = vunpack.c.l.b16 %v2484
        %v2498 = vpack.c.b16 %v2495, %v2494
        %v2499 = vpack.c.b16 %v2497, %v2496
        %2502 = vmatpush.bf16.msra.mxu0 0
        %2503 = vmatpush.bf16.msra.mxu0 0
        %2504 = vmatpush.bf16.msra.mxu0 0
        %2505 = vmatpush.bf16.msra.mxu0 0
        %2506 = vmatpush.bf16.msra.mxu0 0
        %2507 = vmatpush.bf16.msra.mxu0 0
        %2508 = vmatpush.bf16.msra.mxu0 %v2499
        %2509 = vmatpush.bf16.msra.mxu0 %v2498
        %2510 = vmatmul.bf16.gmra.mxu0 %v1877
        %v2511 = vpop.f32.mrf.mxu0
        %v2512 = vadd.f32 %v2488, %v2511
        %v2513 = vpop.f32.mrf.mxu0
        %2514 = vdwg.mxu0
        %v2515 = vpack.c.bf16 %v2442, %v2442
        %v2516 = vpack.c.bf16 %v2477, %v2477
        %v2518 = vsel %vm1099, %v2515, 0
        %v2521 = vsel %vm1099, %v2516, 0
        %2523 = vmatpush.bf16.xpose.msra.mxu0 0
        %2524 = vmatpush.bf16.xpose.msra.mxu0 0
        %2525 = vmatpush.bf16.xpose.msra.mxu0 0
        %2526 = vmatpush.bf16.xpose.msra.mxu0 0
        %2527 = vmatpush.bf16.xpose.msra.mxu0 0
        %2528 = vmatpush.bf16.xpose.msra.mxu0 0
        %2529 = vmatpush.bf16.xpose.msra.mxu0 0
        %2530 = vmatpush.bf16.xpose.msra.mxu0 %v2521
        %2531 = vmatmul.bf16.gmra.mxu0 %v2518
        %v2532 = vpop.f32.mrf.mxu0
        %v2533 = vadd.f32 0.0, %v2532
        %v2534 = vpop.f32.mrf.mxu0
        %2535 = vdwg.mxu0
        %v2536 = vmul.f32 %v2533, 0.35355338
        %v2537 = vadd.f32 %v2536, %v1950
        %v2538 = vsel %vm1099, %v2537, -inf
        %2539 = vmax.xlane.f32.xlu0 %v2538
        %v2540 = vpop.xlane.xlu0 %2539
        %v2541 = vsub.f32 %v2537, %v2540
        %v2542 = vmul.f32 %v2541, 1.442695
        %v2543 = vpow.pop %v2542
        %v2544 = vsel %vm1099, %v2543, 0.0
        %2545 = vadd.xlane.f32.xlu0 %v2544
        %v2546 = vpop.xlane.xlu0 %2545
        %v2547 = vrcp.pop %v2546
        %v2548 = vmul.f32 %v2546, %v2547
        %v2549 = vsub.f32 1.0, %v2548
        %v2550 = vmul.f32 %v2547, %v2549
        %v2551 = vadd.f32 %v2547, %v2550
        %vm2552 = vweird.f32 %v2546
        %vm2553 = vweird.f32 %v2547
        %vm2554 = vmor %vm2552, %vm2553
        %v2555 = vsel %vm2554, %v2547, %v2551
        %v2556 = vand.u32 2147483647, %v2546
        %vm2557 = vcmp.eq.f32.partialorder %v2556, 8.507059e+37
        %v2558 = vand.u32 %v2546, 2147483648
        %v2559 = vor.u32 1.1754944e-38, %v2558
        %v2560 = vsel %vm2557, %v2559, %v2555
        %v2561 = vmul.f32 %v2543, %v2560
        %v2562 = vpack.c.bf16 %v2561, %v2561
        %v2563 = vpack.c.bf16 %v2512, %v2512
        %v2565 = vsel %vm1099, %v2562, 0
        %v2568 = vsel %vm1150, %v2563, 0
        %2570 = vmatpush.bf16.msra.mxu0 0
        %2571 = vmatpush.bf16.msra.mxu0 0
        %2572 = vmatpush.bf16.msra.mxu0 0
        %2573 = vmatpush.bf16.msra.mxu0 0
        %2574 = vmatpush.bf16.msra.mxu0 0
        %2575 = vmatpush.bf16.msra.mxu0 0
        %2576 = vmatpush.bf16.msra.mxu0 0
        %2577 = vmatpush.bf16.msra.mxu0 %v2568
        %2578 = vmatmul.bf16.gmra.mxu0 %v2565
        %v2579 = vpop.f32.mrf.mxu0
        %v2580 = vadd.f32 0.0, %v2579
        %v2581 = vpop.f32.mrf.mxu0
        %2582 = vdwg.mxu0
        %v2583 = vpack.c.bf16 %v2580, %v2580
        %s2584 = scalar_lea.vmem %s898, 12
        %v2585 = vld [vmem:[%s2584] sm:$0xf]
        %v2587 = vsel %vm1099, %v2583, 0
        %v2590 = vsel %vm1150, %v2585, 0
        %2592 = vmatpush.bf16.msra.mxu0 0
        %2593 = vmatpush.bf16.msra.mxu0 0
        %2594 = vmatpush.bf16.msra.mxu0 0
        %2595 = vmatpush.bf16.msra.mxu0 0
        %2596 = vmatpush.bf16.msra.mxu0 0
        %2597 = vmatpush.bf16.msra.mxu0 0
        %2598 = vmatpush.bf16.msra.mxu0 0
        %2599 = vmatpush.bf16.msra.mxu0 %v2590
        %2600 = vmatmul.bf16.gmra.mxu0 %v2587
        %v2601 = vpop.f32.mrf.mxu0
        %v2602 = vadd.f32 0.0, %v2601
        %v2603 = vpop.f32.mrf.mxu0
        %2604 = vdwg.mxu0
        %v2605 = vadd.f32 %v2409, %v2602
        %v2606 = vadd.f32 %v1780, %v2605
        %v2607 = vld [vmem:[%s901] sm:$0x1]
        %v2609 = vperm.slane %v2607, 0
        %v2611 = vadd.f32 %v2606, %v2609
        %s2612 = scalar_lea.vmem %s921, 2
        %v2613 = vld [vmem:[%s2612] sm:$0x1]
        %s2614 = scalar_lea.vmem %s925, 2
        %v2615 = vld [vmem:[%s2614] sm:$0x1]
        %v2616 = vsel %vm952, %v2611, 0.0
        %2617 = vadd.xlane.f32.xlu0 %v2616
        %v2618 = vpop.xlane.xlu0 %2617
        %v2619 = vmul.f32 %v2618, %v962
        %v2620 = vsub.f32 %v2611, %v2619
        %v2621 = vmul.f32 %v2620, %v2620
        %v2622 = vsel %vm952, %v2621, 0.0
        %2623 = vadd.xlane.f32.xlu0 %v2622
        %v2624 = vpop.xlane.xlu0 %2623
        %v2625 = vmul.f32 %v2624, %v962
        %v2626 = vadd.f32 %v2625, 1e-06
        %v2627 = vrsqrt.pop %v2626
        %v2628 = vmul.f32 %v2627, %v2626
        %v2629 = vmul.f32 %v2628, %v2627
        %v2630 = vmul.f32 0.5, %v2629
        %v2631 = vsub.f32 1.5, %v2630
        %v2632 = vmul.f32 %v2627, %v2631
        %vm2633 = vweird.f32 %v2626
        %vm2634 = vweird.f32 %v2627
        %vm2635 = vmor %vm2633, %vm2634
        %v2636 = vsel %vm2635, %v2627, %v2632
        %v2637 = vmul.f32 %v2620, %v2636
        %v2639 = vperm.slane %v2613, 0
        %v2641 = vmul.f32 %v2637, %v2639
        %v2643 = vperm.slane %v2615, 0
        %v2645 = vadd.f32 %v2641, %v2643
        %v2646 = vpack.c.bf16 %v2645, %v2645
        %v2647 = vld [vmem:[%s906] sm:$0xf]
        %v2648 = vld [vmem:[%s906 + $0x4] sm:$0xf]
        %v2649 = vld [vmem:[%s906 + $0x8] sm:$0xf]
        %v2650 = vld [vmem:[%s906 + $0xc] sm:$0xf]
        %v2651 = vld [vmem:[%s909] sm:$0x1]
        %v2653 = vperm.slane %v2651, 0
        %v2659 = vunpack.c.l.b16 %v2647
        %v2660 = vunpack.c.l.b16 %v2648
        %v2661 = vunpack.c.l.b16 %v2649
        %v2662 = vunpack.c.l.b16 %v2650
        %v2663 = vpack.c.b16 %v2660, %v2659
        %v2664 = vpack.c.b16 %v2662, %v2661
        %v2668 = vsel %vm952, %v2646, 0
        %2670 = vmatpush.bf16.msra.mxu0 0
        %2671 = vmatpush.bf16.msra.mxu0 0
        %2672 = vmatpush.bf16.msra.mxu0 0
        %2673 = vmatpush.bf16.msra.mxu0 0
        %2674 = vmatpush.bf16.msra.mxu0 0
        %2675 = vmatpush.bf16.msra.mxu0 0
        %2676 = vmatpush.bf16.msra.mxu0 %v2664
        %2677 = vmatpush.bf16.msra.mxu0 %v2663
        %2678 = vmatmul.bf16.gmra.mxu0 %v2668
        %v2679 = vpop.f32.mrf.mxu0
        %v2680 = vadd.f32 %v2653, %v2679
        %v2681 = vpop.f32.mrf.mxu0
        %2682 = vdwg.mxu0
        %v2683 = vmax.f32 %v2680, 0.0
        %v2684 = vpack.c.bf16 %v2683, %v2683
        %v2685 = vld [vmem:[%s914] sm:$0xf]
        %v2686 = vld [vmem:[%s914 + $0x4] sm:$0xf]
        %v2687 = vld [vmem:[%s914 + $0x8] sm:$0xf]
        %v2688 = vld [vmem:[%s914 + $0xc] sm:$0xf]
        %v2689 = vld [vmem:[%s914 + $0x10] sm:$0xf]
        %v2690 = vld [vmem:[%s914 + $0x14] sm:$0xf]
        %v2691 = vld [vmem:[%s914 + $0x18] sm:$0xf]
        %v2692 = vld [vmem:[%s914 + $0x1c] sm:$0xf]
        %v2701 = vunpack.c.l.b16 %v2685
        %v2702 = vunpack.c.l.b16 %v2686
        %v2703 = vunpack.c.l.b16 %v2687
        %v2704 = vunpack.c.l.b16 %v2688
        %v2705 = vunpack.c.l.b16 %v2689
        %v2706 = vunpack.c.l.b16 %v2690
        %v2707 = vunpack.c.l.b16 %v2691
        %v2708 = vunpack.c.l.b16 %v2692
        %v2709 = vpack.c.b16 %v2702, %v2701
        %v2710 = vpack.c.b16 %v2704, %v2703
        %v2711 = vpack.c.b16 %v2706, %v2705
        %v2712 = vpack.c.b16 %v2708, %v2707
        %vm2717 = vcmask 523264
        %v2719 = vsel %vm2717, %v2684, 0
        %2721 = vmatpush.bf16.msra.mxu0 0
        %2722 = vmatpush.bf16.msra.mxu0 0
        %2723 = vmatpush.bf16.msra.mxu0 0
        %2724 = vmatpush.bf16.msra.mxu0 0
        %2725 = vmatpush.bf16.msra.mxu0 %v2712
        %2726 = vmatpush.bf16.msra.mxu0 %v2711
        %2727 = vmatpush.bf16.msra.mxu0 %v2710
        %2728 = vmatpush.bf16.msra.mxu0 %v2709
        %2729 = vmatmul.bf16.gmra.mxu0 %v2719
        %v2730 = vpop.f32.mrf.mxu0
        %v2731 = vadd.f32 0.0, %v2730
        %v2732 = vpop.f32.mrf.mxu0
        %2733 = vdwg.mxu0
        %v2734 = vadd.f32 %v2611, %v2731
        %v2735 = vld [vmem:[%s917] sm:$0x1]
        %v2737 = vperm.slane %v2735, 0
        %v2739 = vadd.f32 %v2734, %v2737
        %2740 = vst.msk [vmem:[#allocation2] sm:$0xff] %vm952, %v2739
        %p2741 = scmp.eq.s32.totalorder %s39, 1
        // Predicated region
        $region105: #{decoder_forward.1} parent=99 // pred_check
          %p2742 = pneg %p2741
        $region106: #{decoder_forward.1} parent=99 // pred_check_branch
          %2744 = sbr.rel (%p2742) target = $region108
        $region107: #{decoder_forward.1} parent=99 // pred_region
          %v2745 = vld [vmem:[%s18] sm:$0x1]
          %v2746 = vld [vmem:[%s19] sm:$0x1]
          %v2747 = vsel %vm952, %v2739, 0.0
          %2748 = vadd.xlane.f32.xlu0 %v2747
          %v2749 = vpop.xlane.xlu0 %2748
          %v2750 = vmul.f32 %v2749, %v962
          %v2751 = vsub.f32 %v2739, %v2750
          %v2752 = vmul.f32 %v2751, %v2751
          %v2753 = vsel %vm952, %v2752, 0.0
          %2754 = vadd.xlane.f32.xlu0 %v2753
          %v2755 = vpop.xlane.xlu0 %2754
          %v2756 = vmul.f32 %v2755, %v962
          %v2757 = vadd.f32 %v2756, 1e-06
          %v2758 = vrsqrt.pop %v2757
          %v2759 = vmul.f32 %v2758, %v2757
          %v2760 = vmul.f32 %v2759, %v2758
          %v2761 = vmul.f32 0.5, %v2760
          %v2762 = vsub.f32 1.5, %v2761
          %v2763 = vmul.f32 %v2758, %v2762
          %vm2764 = vweird.f32 %v2757
          %vm2765 = vweird.f32 %v2758
          %vm2766 = vmor %vm2764, %vm2765
          %v2767 = vsel %vm2766, %v2758, %v2763
          %v2768 = vmul.f32 %v2751, %v2767
          %v2770 = vperm.slane %v2745, 0
          %v2772 = vmul.f32 %v2768, %v2770
          %v2774 = vperm.slane %v2746, 0
          %v2776 = vadd.f32 %v2772, %v2774
          %2777 = vst.msk [vmem:[%s853] sm:$0xff] %vm952, %v2776
        $region108: #{decoder_forward.1} parent=99 // pred_fallthru
          _
        %s2778 = sand.u32 %s564, 1
        %s2779 = scalar_lea.sflag [#allocation4], %s2778
        %s2780 = sand.u32 %s564, 1
        %s2781 = smul.addr %s2780, 8
        %s2782 = scalar_lea.vmem [#allocation3], %s2781
        // Predicated region
        $region109: #{decoder_forward.1} parent=99 // pred_check
          %p2783 = pneg %p574
        $region110: #{decoder_forward.1} parent=99 // pred_check_branch
          %2785 = sbr.rel (%p2783) target = $region112
        $region111: #{decoder_forward.1} parent=99 // pred_region
          %2787 = vsyncadd %s2779, 0
          %s2788 = smul.addr %s38, 8
          %s2789 = scalar_lea.hbm %s20, %s2788
          %s2791 = sshll.u32 %s2782, 4
          %s2792 = int_to_ptr.vmem [resolvable:$true] %s2791
          %s2793 = sshll.u32 %s2789, 4
          %s2794 = int_to_ptr.hbm [resolvable:$true] %s2793
          %2796 = dma.vmem_to_hbm [thread:$0]  %s2792, 128, %s2794, %s2779
        $region112: #{decoder_forward.1} parent=99 // pred_fallthru
          _
      $region100: #{decoder_forward.1} parent=5 // pred_fallthru
        _
      %p2797 = scmp.le.s32.totalorder 2, %s29
      // Predicated region
      $region113: #{decoder_forward.1} parent=5 // pred_check
        %p2798 = pneg %p2797
      $region114: #{decoder_forward.1} parent=5 // pred_check_branch
        %2800 = sbr.rel (%p2798) target = $region116
      $region115: #{decoder_forward.1} parent=5 // pred_region
        %s2801 = ssub.s32 %s29, 2
        // Predicated region
        $region117: #{decoder_forward.1} parent=115 // pred_check
          %p2802 = pneg %p580
        $region118: #{decoder_forward.1} parent=115 // pred_check_branch
          %2804 = sbr.rel (%p2802) target = $region120
        $region119: #{decoder_forward.1} parent=115 // pred_region
          %s2805 = sand.u32 %s565, 1
          %s2806 = scalar_lea.sflag [#allocation4], %s2805
          %s2807 = sand.u32 %s565, 1
          %s2808 = smul.addr %s2807, 8
          %s2809 = scalar_lea.vmem [#allocation3], %s2808
          %2811 = dma.done %s2806, 128
        $region120: #{decoder_forward.1} parent=115 // pred_fallthru
          _
      $region116: #{decoder_forward.1} parent=5 // pred_fallthru
        _
    $region6: #{decoder_forward.1} parent=1 // loop_footer
      %s33 = sadd.s32 1, %s29
    $region7: #{decoder_forward.1} parent=1 // loop_footer_branch
      %28 = sbr.rel target = $region3
    $region8: #{decoder_forward.1} parent=1 // loop_exit
      _
    %2812 = vsyncpa [#allocation4], 1
    %s2813 = scalar_lea.sflag [#allocation4], 1
    %2814 = vsyncpa %s2813, 1

</llo_original>
